<compile_context>
chip_gen: v6e
topology: v6e:2x2x1
jax: 0.10.0
libtpu: 0.0.40
codegen_flags: <defaults>
</compile_context>

<pallas_src>
import math
import functools

import jax
import jax.numpy as jnp
from jax.experimental import pallas as pl
from jax.experimental.pallas import tpu as pltpu

LANE = 128


# ----------------------------- Fused Pallas kernel ------------------------------

def _fused_transformer_kernel(x_ref, pe_ref, mask_ref, wq_ref, wk_ref, wv_ref,
                              wo_ref, wd_ref, o_ref, *, nhead, nlayers, d_model):
    """Whole forward hot path on the folded (batch*seq, d_model) slab.

    x_ref   : (B*S, D)        token embeddings (pre-scale)
    pe_ref  : (B*S, D)        positional encodings, tiled over batch
    mask_ref: (B*S, B*S)      additive block-diagonal causal mask (0 / -1e30)
    wq/wk/wv_ref : (nlayers, nhead, D, dk)   per-head projection weights
                                             (1/sqrt(dk) already folded into wq)
    wo_ref  : (nlayers, nhead, dk, D)        per-head output-projection rows
    wd_ref  : (D, n_pad)      decoder weight zero-padded to a lane-dense width
    o_ref   : (B*S, n_pad)    sigmoid(decoder) output (lane-dense)
    """
    BS = x_ref.shape[0]

    # Fused embedding scale + positional encoding.
    x = x_ref[...] * math.sqrt(d_model) + pe_ref[...]              # (BS, D)
    mask = mask_ref[...]                                           # (BS, BS), hoisted

    for l in range(nlayers):                                       # static -> unrolled
        wq_l = wq_ref[l]                                           # (H, D, dk)
        wk_l = wk_ref[l]
        wv_l = wv_ref[l]
        wo_l = wo_ref[l]                                           # (H, dk, D)

        xb = jnp.broadcast_to(x, (nhead, BS, d_model))             # (H, BS, D)
        q = jnp.einsum('hnd,hdk->hnk', xb, wq_l,
                       preferred_element_type=jnp.float32)         # (H, BS, dk)
        k = jnp.einsum('hnd,hdk->hnk', xb, wk_l,
                       preferred_element_type=jnp.float32)
        v = jnp.einsum('hnd,hdk->hnk', xb, wv_l,
                       preferred_element_type=jnp.float32)

        # Scores (scale folded into wq) + additive block-diagonal causal mask.
        s = jnp.einsum('hqd,hkd->hqk', q, k,
                       preferred_element_type=jnp.float32) + mask  # (H, BS, BS)
        s = s - jnp.max(s, axis=-1, keepdims=True)
        p = jnp.exp(s)
        p = p * pl.reciprocal(jnp.sum(p, axis=-1, keepdims=True), approx=True)

        ctx = jnp.einsum('hqk,hkd->hqd', p, v,
                         preferred_element_type=jnp.float32)       # (H, BS, dk)

        # Output projection: per-head accumulation (no lane-axis concatenate).
        x = jnp.dot(ctx[0], wo_l[0], preferred_element_type=jnp.float32)
        for h in range(1, nhead):
            x = x + jnp.dot(ctx[h], wo_l[h], preferred_element_type=jnp.float32)

    # Decoder (bias=False) + sigmoid, written lane-dense.
    logits = jnp.dot(x, wd_ref[...], preferred_element_type=jnp.float32)
    o_ref[...] = jax.nn.sigmoid(logits)


def fused_transformer(x_emb, pe_t, mask, wq_h, wk_h, wv_h, wo_h, wd_pad,
                      *, nhead, nlayers, d_model):
    BS, D = x_emb.shape
    n_pad = wd_pad.shape[1]
    kernel = functools.partial(_fused_transformer_kernel,
                               nhead=nhead, nlayers=nlayers, d_model=d_model)
    return pl.pallas_call(
        kernel,
        out_shape=jax.ShapeDtypeStruct((BS, n_pad), jnp.float32),
        grid=(1,),
        in_specs=[
            pl.BlockSpec((BS, D), lambda i: (0, 0)),
            pl.BlockSpec((BS, D), lambda i: (0, 0)),
            pl.BlockSpec((BS, BS), lambda i: (0, 0)),
            pl.BlockSpec(wq_h.shape, lambda i: (0, 0, 0, 0)),
            pl.BlockSpec(wk_h.shape, lambda i: (0, 0, 0, 0)),
            pl.BlockSpec(wv_h.shape, lambda i: (0, 0, 0, 0)),
            pl.BlockSpec(wo_h.shape, lambda i: (0, 0, 0, 0)),
            pl.BlockSpec(wd_pad.shape, lambda i: (0, 0)),
        ],
        out_specs=pl.BlockSpec((BS, n_pad), lambda i: (0, 0)),
        compiler_params=pltpu.CompilerParams(dimension_semantics=("arbitrary",)),
    )(x_emb, pe_t, mask, wq_h, wk_h, wv_h, wo_h, wd_pad)


# --------------------------------- Glue -------------------------------------

def sinusoidal_pe(max_len, d_model, max_period=10000.0):
    position = jnp.arange(max_len, dtype=jnp.float32)[:, None]
    div_term = jnp.exp(jnp.arange(0, d_model, 2, dtype=jnp.float32)
                       * (-math.log(max_period) / d_model))
    pe = jnp.zeros((max_len, d_model), jnp.float32)
    pe = pe.at[:, 0::2].set(jnp.sin(position * div_term))
    pe = pe.at[:, 1::2].set(jnp.cos(position * div_term))
    return pe


def init_params(key, ntoken, noutputs, d_model, nlayers, max_len=512):
    keys = jax.random.split(key, 2 + 4 * nlayers)
    initrange = 0.1
    params = {
        "embedding": jax.random.uniform(keys[0], (ntoken, d_model), jnp.float32,
                                        -initrange, initrange),
        # decoder weight stored as (d_model, noutputs) == PyTorch weight.T
        "decoder_w": jax.random.uniform(keys[1], (d_model, noutputs), jnp.float32,
                                        -initrange, initrange),
        "pe": sinusoidal_pe(max_len, d_model),
        "layers": [],
    }
    bound = 1.0 / math.sqrt(d_model)
    for l in range(nlayers):
        wq, wk, wv, wo = (
            jax.random.uniform(keys[2 + 4 * l + i], (d_model, d_model), jnp.float32,
                               -bound, bound)
            for i in range(4)
        )
        params["layers"].append((wq, wk, wv, wo))
    return params


def pack_params(params, nhead):
    """Repack weights once into the kernel-ready, head-split, stacked layout."""
    d_model = params["embedding"].shape[1]
    dk = d_model // nhead
    scale = 1.0 / math.sqrt(dk)

    def split_in_out(w):                 # (D, D) -> (nhead, D, dk): head h = out cols [h*dk:(h+1)*dk]
        return jnp.transpose(w.reshape(d_model, nhead, dk), (1, 0, 2))

    def split_out_rows(w):               # (D, D) -> (nhead, dk, D): head h = rows [h*dk:(h+1)*dk]
        return w.reshape(nhead, dk, d_model)

    wq = jnp.stack([split_in_out(wq) * scale for (wq, _, _, _) in params["layers"]])
    wk = jnp.stack([split_in_out(wk) for (_, wk, _, _) in params["layers"]])
    wv = jnp.stack([split_in_out(wv) for (_, _, wv, _) in params["layers"]])
    wo = jnp.stack([split_out_rows(wo) for (_, _, _, wo) in params["layers"]])

    noutputs = params["decoder_w"].shape[1]
    n_pad = max(LANE, ((noutputs + LANE - 1) // LANE) * LANE)
    wd_pad = jnp.zeros((d_model, n_pad), jnp.float32).at[:, :noutputs].set(params["decoder_w"])

    return {"embedding": params["embedding"], "pe": params["pe"],
            "wq": wq, "wk": wk, "wv": wv, "wo": wo, "wd_pad": wd_pad}


@functools.partial(jax.jit, static_argnames=("nhead", "d_model", "noutputs"))
def simple_transformer_forward(src_tokens, packed, nhead, d_model, noutputs):
    """src_tokens: (seq, batch) int32, same convention as the PyTorch module."""
    S, B = src_tokens.shape
    BS = B * S

    # Embedding gather, fold batch into rows (row = b*S + s).  Scale + PE add happen
    # inside the fused kernel.
    x = jnp.take(packed["embedding"], src_tokens, axis=0)        # (S, B, D)
    x = jnp.transpose(x, (1, 0, 2)).reshape(BS, d_model)         # (B*S, D)
    pe_t = jnp.tile(packed["pe"][:S], (B, 1))                    # (B*S, D)

    # Block-diagonal causal additive mask over the folded rows (finite sentinel).
    ridx = jnp.arange(BS)
    same_batch = (ridx[:, None] // S) == (ridx[None, :] // S)
    causal = ridx[None, :] <= ridx[:, None]
    mask = jnp.where(same_batch & causal, 0.0, -1e30).astype(jnp.float32)

    nlayers = packed["wq"].shape[0]
    out = fused_transformer(x, pe_t, mask, packed["wq"], packed["wk"], packed["wv"],
                            packed["wo"], packed["wd_pad"],
                            nhead=nhead, nlayers=nlayers, d_model=d_model)  # (B*S, n_pad)
    out = out[:, :noutputs].reshape(B, S, noutputs)
    return jnp.transpose(out, (1, 0, 2))                         # (S, B, noutputs)


# ---------------------------- Pure-JAX reference -----------------------------

def reference_forward(src_tokens, params, nhead, d_model):
    S, B = src_tokens.shape
    hi = jax.lax.Precision.HIGHEST
    x = params["embedding"][src_tokens] * math.sqrt(d_model)
    x = x + params["pe"][:S][:, None, :]
    x = jnp.transpose(x, (1, 0, 2))                              # (B, S, D)
    dk = d_model // nhead
    mask = jnp.where(jnp.tril(jnp.ones((S, S), bool)), 0.0, -jnp.inf)
    for (wq, wk, wv, wo) in params["layers"]:
        q = jnp.dot(x, wq, precision=hi).reshape(B, S, nhead, dk).transpose(0, 2, 1, 3)
        k = jnp.dot(x, wk, precision=hi).reshape(B, S, nhead, dk).transpose(0, 2, 1, 3)
        v = jnp.dot(x, wv, precision=hi).reshape(B, S, nhead, dk).transpose(0, 2, 1, 3)
        s = jnp.einsum("bhqd,bhkd->bhqk", q, k, precision=hi) / math.sqrt(dk) + mask
        p = jax.nn.softmax(s, axis=-1)
        ctx = jnp.einsum("bhqk,bhkd->bhqd", p, v, precision=hi)
        ctx = ctx.transpose(0, 2, 1, 3).reshape(B, S, d_model)
        x = jnp.dot(ctx, wo, precision=hi)
    out = jax.nn.sigmoid(jnp.dot(x, params["decoder_w"], precision=hi))
    return jnp.transpose(out, (1, 0, 2))


# ----------------------------------- Main ------------------------------------

if __name__ == "__main__":
    ntoken, noutputs = 16, 2
    d_model, nhead, d_ffn, nlayers = 32, 4, 64, 2   # posffn=False -> d_ffn unused
    seq_len, batch = 8, 2

    key = jax.random.PRNGKey(0)
    k_params, k_src = jax.random.split(key)
    params = init_params(k_params, ntoken, noutputs, d_model, nlayers)
    packed = pack_params(params, nhead)

    src = jax.random.randint(k_src, (seq_len, batch), 0, ntoken, dtype=jnp.int32)

    out = simple_transformer_forward(src, packed, nhead=nhead, d_model=d_model,
                                     noutputs=noutputs)
    out = jax.block_until_ready(out)
    assert out.shape == (seq_len, batch, noutputs), out.shape

    ref = jax.block_until_ready(reference_forward(src, params, nhead, d_model))
    max_err = float(jnp.max(jnp.abs(out - ref)))
    # slightly relaxed tolerance: softmax uses the EUP approx reciprocal
    assert jnp.allclose(out, ref, atol=2e-3, rtol=2e-3), max_err

    # TODO(synk): dropout omitted (eval-mode identity); EncoderLayer assumed
    # attention-only (no residual/LayerNorm), matching EncoderLayer(self_attn).
    print("KERNEL_OK")
</pallas_src>

<mosaic_0001>
module attributes {stable_mosaic.version = 11 : i64} {
  func.func @_fused_transformer_kernel(%arg0: i32, %arg1: memref<16x32xf32, #tpu.memory_space<vmem>>, %arg2: memref<16x32xf32, #tpu.memory_space<vmem>>, %arg3: memref<16x16xf32, #tpu.memory_space<vmem>>, %arg4: memref<2x4x32x8xf32, #tpu.memory_space<vmem>>, %arg5: memref<2x4x32x8xf32, #tpu.memory_space<vmem>>, %arg6: memref<2x4x32x8xf32, #tpu.memory_space<vmem>>, %arg7: memref<2x4x8x32xf32, #tpu.memory_space<vmem>>, %arg8: memref<32x128xf32, #tpu.memory_space<vmem>>, %arg9: memref<16x128xf32, #tpu.memory_space<vmem>>) attributes {dimension_semantics = [#tpu.dimension_semantics<arbitrary>], iteration_bounds = array<i64: 1>, scalar_prefetch = 0 : i64, scratch_operands = 0 : i64, tpu.core_type = #tpu.core_type<tc>, window_params = [{pipeline_mode = #tpu.pipeline_mode<synchronous>, transform_indices = @transform_0, window_bounds = array<i64: 16, 32>}, {pipeline_mode = #tpu.pipeline_mode<synchronous>, transform_indices = @transform_1, window_bounds = array<i64: 16, 32>}, {pipeline_mode = #tpu.pipeline_mode<synchronous>, transform_indices = @transform_2, window_bounds = array<i64: 16, 16>}, {pipeline_mode = #tpu.pipeline_mode<synchronous>, transform_indices = @transform_3, window_bounds = array<i64: 2, 4, 32, 8>}, {pipeline_mode = #tpu.pipeline_mode<synchronous>, transform_indices = @transform_4, window_bounds = array<i64: 2, 4, 32, 8>}, {pipeline_mode = #tpu.pipeline_mode<synchronous>, transform_indices = @transform_5, window_bounds = array<i64: 2, 4, 32, 8>}, {pipeline_mode = #tpu.pipeline_mode<synchronous>, transform_indices = @transform_6, window_bounds = array<i64: 2, 4, 8, 32>}, {pipeline_mode = #tpu.pipeline_mode<synchronous>, transform_indices = @transform_7, window_bounds = array<i64: 32, 128>}, {pipeline_mode = #tpu.pipeline_mode<synchronous>, transform_indices = @transform_8, window_bounds = array<i64: 16, 128>}]} {
    %c0 = arith.constant 0 : index
    %c0_0 = arith.constant 0 : index
    %0 = vector.load %arg1[%c0, %c0_0] : memref<16x32xf32, #tpu.memory_space<vmem>>, vector<16x32xf32>
    %cst = arith.constant 5.65685415 : f32
    %1 = vector.broadcast %cst : f32 to vector<16x32xf32>
    %2 = arith.mulf %0, %1 : vector<16x32xf32>
    %c0_1 = arith.constant 0 : index
    %c0_2 = arith.constant 0 : index
    %3 = vector.load %arg2[%c0_1, %c0_2] : memref<16x32xf32, #tpu.memory_space<vmem>>, vector<16x32xf32>
    %4 = arith.addf %2, %3 : vector<16x32xf32>
    %c0_3 = arith.constant 0 : index
    %c0_4 = arith.constant 0 : index
    %5 = vector.load %arg3[%c0_3, %c0_4] : memref<16x16xf32, #tpu.memory_space<vmem>>, vector<16x16xf32>
    %c0_5 = arith.constant 0 : index
    %c0_6 = arith.constant 0 : index
    %c0_7 = arith.constant 0 : index
    %c0_8 = arith.constant 0 : index
    %6 = vector.load %arg4[%c0_5, %c0_6, %c0_7, %c0_8] : memref<2x4x32x8xf32, #tpu.memory_space<vmem>>, vector<1x4x32x8xf32>
    %7 = vector.shape_cast %6 : vector<1x4x32x8xf32> to vector<4x32x8xf32>
    %c0_9 = arith.constant 0 : index
    %c0_10 = arith.constant 0 : index
    %c0_11 = arith.constant 0 : index
    %c0_12 = arith.constant 0 : index
    %8 = vector.load %arg5[%c0_9, %c0_10, %c0_11, %c0_12] : memref<2x4x32x8xf32, #tpu.memory_space<vmem>>, vector<1x4x32x8xf32>
    %9 = vector.shape_cast %8 : vector<1x4x32x8xf32> to vector<4x32x8xf32>
    %c0_13 = arith.constant 0 : index
    %c0_14 = arith.constant 0 : index
    %c0_15 = arith.constant 0 : index
    %c0_16 = arith.constant 0 : index
    %10 = vector.load %arg6[%c0_13, %c0_14, %c0_15, %c0_16] : memref<2x4x32x8xf32, #tpu.memory_space<vmem>>, vector<1x4x32x8xf32>
    %11 = vector.shape_cast %10 : vector<1x4x32x8xf32> to vector<4x32x8xf32>
    %c0_17 = arith.constant 0 : index
    %c0_18 = arith.constant 0 : index
    %c0_19 = arith.constant 0 : index
    %c0_20 = arith.constant 0 : index
    %12 = vector.load %arg7[%c0_17, %c0_18, %c0_19, %c0_20] : memref<2x4x8x32xf32, #tpu.memory_space<vmem>>, vector<1x4x8x32xf32>
    %13 = vector.shape_cast %12 : vector<1x4x8x32xf32> to vector<4x8x32xf32>
    %14 = vector.shape_cast %4 : vector<16x32xf32> to vector<1x16x32xf32>
    %15 = vector.broadcast %14 : vector<1x16x32xf32> to vector<4x16x32xf32>
    "tpu.trace_start"() <{level = 10 : i32, message = "hnd,hdk->hnk"}> : () -> ()
    %cst_21 = arith.constant dense<0.000000e+00> : vector<4x16x8xf32>
    %16 = tpu.matmul %15, %7, %cst_21 {dimension_numbers = #tpu.dot_dimension_numbers<[2], [1], [1], [2], [0, 0, 0, 1, 1, 2], [0], [0]>} : vector<4x16x32xf32>, vector<4x32x8xf32>, vector<4x16x8xf32> -> vector<4x16x8xf32>
    %cst_22 = arith.constant dense<0.000000e+00> : vector<4x16x8xf32>
    %17 = tpu.matmul %15, %9, %cst_22 {dimension_numbers = #tpu.dot_dimension_numbers<[2], [1], [1], [2], [0, 0, 0, 1, 1, 2], [0], [0]>} : vector<4x16x32xf32>, vector<4x32x8xf32>, vector<4x16x8xf32> -> vector<4x16x8xf32>
    %cst_23 = arith.constant dense<0.000000e+00> : vector<4x16x8xf32>
    %18 = tpu.matmul %15, %11, %cst_23 {dimension_numbers = #tpu.dot_dimension_numbers<[2], [1], [1], [2], [0, 0, 0, 1, 1, 2], [0], [0]>} : vector<4x16x32xf32>, vector<4x32x8xf32>, vector<4x16x8xf32> -> vector<4x16x8xf32>
    "tpu.trace_stop"() : () -> ()
    "tpu.trace_start"() <{level = 10 : i32, message = "hqd,hkd->hqk"}> : () -> ()
    %cst_24 = arith.constant dense<0.000000e+00> : vector<4x16x16xf32>
    %19 = tpu.matmul %16, %17, %cst_24 {dimension_numbers = #tpu.dot_dimension_numbers<[2], [2], [1], [1], [0, 0, 0, 1, 1, 1], [0], [0]>} : vector<4x16x8xf32>, vector<4x16x8xf32>, vector<4x16x16xf32> -> vector<4x16x16xf32>
    "tpu.trace_stop"() : () -> ()
    %20 = vector.shape_cast %5 : vector<16x16xf32> to vector<1x16x16xf32>
    %21 = vector.broadcast %20 : vector<1x16x16xf32> to vector<4x16x16xf32>
    %22 = arith.addf %19, %21 : vector<4x16x16xf32>
    %cst_25 = arith.constant dense<0xFF800000> : vector<4x16xf32>
    %23 = vector.multi_reduction <maximumf>, %22, %cst_25 [2] : vector<4x16x16xf32> to vector<4x16xf32>
    %24 = vector.shape_cast %23 : vector<4x16xf32> to vector<4x16x1xf32>
    %25 = vector.broadcast %24 : vector<4x16x1xf32> to vector<4x16x16xf32>
    %26 = arith.subf %22, %25 : vector<4x16x16xf32>
    %27 = math.exp %26 : vector<4x16x16xf32>
    %cst_26 = arith.constant dense<0.000000e+00> : vector<4x16xf32>
    %28 = vector.multi_reduction <add>, %27, %cst_26 [2] : vector<4x16x16xf32> to vector<4x16xf32>
    %29 = vector.shape_cast %28 : vector<4x16xf32> to vector<4x16x1xf32>
    %30 = tpu.reciprocal %29 {approx = true} : vector<4x16x1xf32> -> vector<4x16x1xf32>
    %31 = vector.broadcast %30 : vector<4x16x1xf32> to vector<4x16x16xf32>
    %32 = arith.mulf %27, %31 : vector<4x16x16xf32>
    "tpu.trace_start"() <{level = 10 : i32, message = "hqk,hkd->hqd"}> : () -> ()
    %cst_27 = arith.constant dense<0.000000e+00> : vector<4x16x8xf32>
    %33 = tpu.matmul %32, %18, %cst_27 {dimension_numbers = #tpu.dot_dimension_numbers<[2], [1], [1], [2], [0, 0, 0, 1, 1, 2], [0], [0]>} : vector<4x16x16xf32>, vector<4x16x8xf32>, vector<4x16x8xf32> -> vector<4x16x8xf32>
    "tpu.trace_stop"() : () -> ()
    %34 = vector.extract_strided_slice %33 {offsets = [0, 0, 0], sizes = [1, 16, 8], strides = [1, 1, 1]} : vector<4x16x8xf32> to vector<1x16x8xf32>
    %35 = vector.shape_cast %34 : vector<1x16x8xf32> to vector<16x8xf32>
    %36 = vector.extract_strided_slice %13 {offsets = [0, 0, 0], sizes = [1, 8, 32], strides = [1, 1, 1]} : vector<4x8x32xf32> to vector<1x8x32xf32>
    %37 = vector.shape_cast %36 : vector<1x8x32xf32> to vector<8x32xf32>
    %cst_28 = arith.constant dense<0.000000e+00> : vector<16x32xf32>
    %38 = tpu.matmul %35, %37, %cst_28 {dimension_numbers = #tpu.dot_dimension_numbers<[1], [0], [0], [1], [0, 0, 1, 1], [], []>} : vector<16x8xf32>, vector<8x32xf32>, vector<16x32xf32> -> vector<16x32xf32>
    %39 = vector.extract_strided_slice %33 {offsets = [1, 0, 0], sizes = [1, 16, 8], strides = [1, 1, 1]} : vector<4x16x8xf32> to vector<1x16x8xf32>
    %40 = vector.shape_cast %39 : vector<1x16x8xf32> to vector<16x8xf32>
    %41 = vector.extract_strided_slice %13 {offsets = [1, 0, 0], sizes = [1, 8, 32], strides = [1, 1, 1]} : vector<4x8x32xf32> to vector<1x8x32xf32>
    %42 = vector.shape_cast %41 : vector<1x8x32xf32> to vector<8x32xf32>
    %cst_29 = arith.constant dense<0.000000e+00> : vector<16x32xf32>
    %43 = tpu.matmul %40, %42, %cst_29 {dimension_numbers = #tpu.dot_dimension_numbers<[1], [0], [0], [1], [0, 0, 1, 1], [], []>} : vector<16x8xf32>, vector<8x32xf32>, vector<16x32xf32> -> vector<16x32xf32>
    %44 = arith.addf %38, %43 : vector<16x32xf32>
    %45 = vector.extract_strided_slice %33 {offsets = [2, 0, 0], sizes = [1, 16, 8], strides = [1, 1, 1]} : vector<4x16x8xf32> to vector<1x16x8xf32>
    %46 = vector.shape_cast %45 : vector<1x16x8xf32> to vector<16x8xf32>
    %47 = vector.extract_strided_slice %13 {offsets = [2, 0, 0], sizes = [1, 8, 32], strides = [1, 1, 1]} : vector<4x8x32xf32> to vector<1x8x32xf32>
    %48 = vector.shape_cast %47 : vector<1x8x32xf32> to vector<8x32xf32>
    %cst_30 = arith.constant dense<0.000000e+00> : vector<16x32xf32>
    %49 = tpu.matmul %46, %48, %cst_30 {dimension_numbers = #tpu.dot_dimension_numbers<[1], [0], [0], [1], [0, 0, 1, 1], [], []>} : vector<16x8xf32>, vector<8x32xf32>, vector<16x32xf32> -> vector<16x32xf32>
    %50 = arith.addf %44, %49 : vector<16x32xf32>
    %51 = vector.extract_strided_slice %33 {offsets = [3, 0, 0], sizes = [1, 16, 8], strides = [1, 1, 1]} : vector<4x16x8xf32> to vector<1x16x8xf32>
    %52 = vector.shape_cast %51 : vector<1x16x8xf32> to vector<16x8xf32>
    %53 = vector.extract_strided_slice %13 {offsets = [3, 0, 0], sizes = [1, 8, 32], strides = [1, 1, 1]} : vector<4x8x32xf32> to vector<1x8x32xf32>
    %54 = vector.shape_cast %53 : vector<1x8x32xf32> to vector<8x32xf32>
    %cst_31 = arith.constant dense<0.000000e+00> : vector<16x32xf32>
    %55 = tpu.matmul %52, %54, %cst_31 {dimension_numbers = #tpu.dot_dimension_numbers<[1], [0], [0], [1], [0, 0, 1, 1], [], []>} : vector<16x8xf32>, vector<8x32xf32>, vector<16x32xf32> -> vector<16x32xf32>
    %56 = arith.addf %50, %55 : vector<16x32xf32>
    %c1 = arith.constant 1 : index
    %c0_32 = arith.constant 0 : index
    %c0_33 = arith.constant 0 : index
    %c0_34 = arith.constant 0 : index
    %57 = vector.load %arg4[%c1, %c0_32, %c0_33, %c0_34] : memref<2x4x32x8xf32, #tpu.memory_space<vmem>>, vector<1x4x32x8xf32>
    %58 = vector.shape_cast %57 : vector<1x4x32x8xf32> to vector<4x32x8xf32>
    %c1_35 = arith.constant 1 : index
    %c0_36 = arith.constant 0 : index
    %c0_37 = arith.constant 0 : index
    %c0_38 = arith.constant 0 : index
    %59 = vector.load %arg5[%c1_35, %c0_36, %c0_37, %c0_38] : memref<2x4x32x8xf32, #tpu.memory_space<vmem>>, vector<1x4x32x8xf32>
    %60 = vector.shape_cast %59 : vector<1x4x32x8xf32> to vector<4x32x8xf32>
    %c1_39 = arith.constant 1 : index
    %c0_40 = arith.constant 0 : index
    %c0_41 = arith.constant 0 : index
    %c0_42 = arith.constant 0 : index
    %61 = vector.load %arg6[%c1_39, %c0_40, %c0_41, %c0_42] : memref<2x4x32x8xf32, #tpu.memory_space<vmem>>, vector<1x4x32x8xf32>
    %62 = vector.shape_cast %61 : vector<1x4x32x8xf32> to vector<4x32x8xf32>
    %c1_43 = arith.constant 1 : index
    %c0_44 = arith.constant 0 : index
    %c0_45 = arith.constant 0 : index
    %c0_46 = arith.constant 0 : index
    %63 = vector.load %arg7[%c1_43, %c0_44, %c0_45, %c0_46] : memref<2x4x8x32xf32, #tpu.memory_space<vmem>>, vector<1x4x8x32xf32>
    %64 = vector.shape_cast %63 : vector<1x4x8x32xf32> to vector<4x8x32xf32>
    %65 = vector.shape_cast %56 : vector<16x32xf32> to vector<1x16x32xf32>
    %66 = vector.broadcast %65 : vector<1x16x32xf32> to vector<4x16x32xf32>
    "tpu.trace_start"() <{level = 10 : i32, message = "hnd,hdk->hnk"}> : () -> ()
    %cst_47 = arith.constant dense<0.000000e+00> : vector<4x16x8xf32>
    %67 = tpu.matmul %66, %58, %cst_47 {dimension_numbers = #tpu.dot_dimension_numbers<[2], [1], [1], [2], [0, 0, 0, 1, 1, 2], [0], [0]>} : vector<4x16x32xf32>, vector<4x32x8xf32>, vector<4x16x8xf32> -> vector<4x16x8xf32>
    %cst_48 = arith.constant dense<0.000000e+00> : vector<4x16x8xf32>
    %68 = tpu.matmul %66, %60, %cst_48 {dimension_numbers = #tpu.dot_dimension_numbers<[2], [1], [1], [2], [0, 0, 0, 1, 1, 2], [0], [0]>} : vector<4x16x32xf32>, vector<4x32x8xf32>, vector<4x16x8xf32> -> vector<4x16x8xf32>
    %cst_49 = arith.constant dense<0.000000e+00> : vector<4x16x8xf32>
    %69 = tpu.matmul %66, %62, %cst_49 {dimension_numbers = #tpu.dot_dimension_numbers<[2], [1], [1], [2], [0, 0, 0, 1, 1, 2], [0], [0]>} : vector<4x16x32xf32>, vector<4x32x8xf32>, vector<4x16x8xf32> -> vector<4x16x8xf32>
    "tpu.trace_stop"() : () -> ()
    "tpu.trace_start"() <{level = 10 : i32, message = "hqd,hkd->hqk"}> : () -> ()
    %cst_50 = arith.constant dense<0.000000e+00> : vector<4x16x16xf32>
    %70 = tpu.matmul %67, %68, %cst_50 {dimension_numbers = #tpu.dot_dimension_numbers<[2], [2], [1], [1], [0, 0, 0, 1, 1, 1], [0], [0]>} : vector<4x16x8xf32>, vector<4x16x8xf32>, vector<4x16x16xf32> -> vector<4x16x16xf32>
    "tpu.trace_stop"() : () -> ()
    %71 = vector.shape_cast %5 : vector<16x16xf32> to vector<1x16x16xf32>
    %72 = vector.broadcast %71 : vector<1x16x16xf32> to vector<4x16x16xf32>
    %73 = arith.addf %70, %72 : vector<4x16x16xf32>
    %cst_51 = arith.constant dense<0xFF800000> : vector<4x16xf32>
    %74 = vector.multi_reduction <maximumf>, %73, %cst_51 [2] : vector<4x16x16xf32> to vector<4x16xf32>
    %75 = vector.shape_cast %74 : vector<4x16xf32> to vector<4x16x1xf32>
    %76 = vector.broadcast %75 : vector<4x16x1xf32> to vector<4x16x16xf32>
    %77 = arith.subf %73, %76 : vector<4x16x16xf32>
    %78 = math.exp %77 : vector<4x16x16xf32>
    %cst_52 = arith.constant dense<0.000000e+00> : vector<4x16xf32>
    %79 = vector.multi_reduction <add>, %78, %cst_52 [2] : vector<4x16x16xf32> to vector<4x16xf32>
    %80 = vector.shape_cast %79 : vector<4x16xf32> to vector<4x16x1xf32>
    %81 = tpu.reciprocal %80 {approx = true} : vector<4x16x1xf32> -> vector<4x16x1xf32>
    %82 = vector.broadcast %81 : vector<4x16x1xf32> to vector<4x16x16xf32>
    %83 = arith.mulf %78, %82 : vector<4x16x16xf32>
    "tpu.trace_start"() <{level = 10 : i32, message = "hqk,hkd->hqd"}> : () -> ()
    %cst_53 = arith.constant dense<0.000000e+00> : vector<4x16x8xf32>
    %84 = tpu.matmul %83, %69, %cst_53 {dimension_numbers = #tpu.dot_dimension_numbers<[2], [1], [1], [2], [0, 0, 0, 1, 1, 2], [0], [0]>} : vector<4x16x16xf32>, vector<4x16x8xf32>, vector<4x16x8xf32> -> vector<4x16x8xf32>
    "tpu.trace_stop"() : () -> ()
    %85 = vector.extract_strided_slice %84 {offsets = [0, 0, 0], sizes = [1, 16, 8], strides = [1, 1, 1]} : vector<4x16x8xf32> to vector<1x16x8xf32>
    %86 = vector.shape_cast %85 : vector<1x16x8xf32> to vector<16x8xf32>
    %87 = vector.extract_strided_slice %64 {offsets = [0, 0, 0], sizes = [1, 8, 32], strides = [1, 1, 1]} : vector<4x8x32xf32> to vector<1x8x32xf32>
    %88 = vector.shape_cast %87 : vector<1x8x32xf32> to vector<8x32xf32>
    %cst_54 = arith.constant dense<0.000000e+00> : vector<16x32xf32>
    %89 = tpu.matmul %86, %88, %cst_54 {dimension_numbers = #tpu.dot_dimension_numbers<[1], [0], [0], [1], [0, 0, 1, 1], [], []>} : vector<16x8xf32>, vector<8x32xf32>, vector<16x32xf32> -> vector<16x32xf32>
    %90 = vector.extract_strided_slice %84 {offsets = [1, 0, 0], sizes = [1, 16, 8], strides = [1, 1, 1]} : vector<4x16x8xf32> to vector<1x16x8xf32>
    %91 = vector.shape_cast %90 : vector<1x16x8xf32> to vector<16x8xf32>
    %92 = vector.extract_strided_slice %64 {offsets = [1, 0, 0], sizes = [1, 8, 32], strides = [1, 1, 1]} : vector<4x8x32xf32> to vector<1x8x32xf32>
    %93 = vector.shape_cast %92 : vector<1x8x32xf32> to vector<8x32xf32>
    %cst_55 = arith.constant dense<0.000000e+00> : vector<16x32xf32>
    %94 = tpu.matmul %91, %93, %cst_55 {dimension_numbers = #tpu.dot_dimension_numbers<[1], [0], [0], [1], [0, 0, 1, 1], [], []>} : vector<16x8xf32>, vector<8x32xf32>, vector<16x32xf32> -> vector<16x32xf32>
    %95 = arith.addf %89, %94 : vector<16x32xf32>
    %96 = vector.extract_strided_slice %84 {offsets = [2, 0, 0], sizes = [1, 16, 8], strides = [1, 1, 1]} : vector<4x16x8xf32> to vector<1x16x8xf32>
    %97 = vector.shape_cast %96 : vector<1x16x8xf32> to vector<16x8xf32>
    %98 = vector.extract_strided_slice %64 {offsets = [2, 0, 0], sizes = [1, 8, 32], strides = [1, 1, 1]} : vector<4x8x32xf32> to vector<1x8x32xf32>
    %99 = vector.shape_cast %98 : vector<1x8x32xf32> to vector<8x32xf32>
    %cst_56 = arith.constant dense<0.000000e+00> : vector<16x32xf32>
    %100 = tpu.matmul %97, %99, %cst_56 {dimension_numbers = #tpu.dot_dimension_numbers<[1], [0], [0], [1], [0, 0, 1, 1], [], []>} : vector<16x8xf32>, vector<8x32xf32>, vector<16x32xf32> -> vector<16x32xf32>
    %101 = arith.addf %95, %100 : vector<16x32xf32>
    %102 = vector.extract_strided_slice %84 {offsets = [3, 0, 0], sizes = [1, 16, 8], strides = [1, 1, 1]} : vector<4x16x8xf32> to vector<1x16x8xf32>
    %103 = vector.shape_cast %102 : vector<1x16x8xf32> to vector<16x8xf32>
    %104 = vector.extract_strided_slice %64 {offsets = [3, 0, 0], sizes = [1, 8, 32], strides = [1, 1, 1]} : vector<4x8x32xf32> to vector<1x8x32xf32>
    %105 = vector.shape_cast %104 : vector<1x8x32xf32> to vector<8x32xf32>
    %cst_57 = arith.constant dense<0.000000e+00> : vector<16x32xf32>
    %106 = tpu.matmul %103, %105, %cst_57 {dimension_numbers = #tpu.dot_dimension_numbers<[1], [0], [0], [1], [0, 0, 1, 1], [], []>} : vector<16x8xf32>, vector<8x32xf32>, vector<16x32xf32> -> vector<16x32xf32>
    %107 = arith.addf %101, %106 : vector<16x32xf32>
    %c0_58 = arith.constant 0 : index
    %c0_59 = arith.constant 0 : index
    %108 = vector.load %arg8[%c0_58, %c0_59] : memref<32x128xf32, #tpu.memory_space<vmem>>, vector<32x128xf32>
    %cst_60 = arith.constant dense<0.000000e+00> : vector<16x128xf32>
    %109 = tpu.matmul %107, %108, %cst_60 {dimension_numbers = #tpu.dot_dimension_numbers<[1], [0], [0], [1], [0, 0, 1, 1], [], []>} : vector<16x32xf32>, vector<32x128xf32>, vector<16x128xf32> -> vector<16x128xf32>
    %110 = arith.negf %109 : vector<16x128xf32>
    %111 = math.exp %110 : vector<16x128xf32>
    %cst_61 = arith.constant 1.000000e+00 : f32
    %112 = vector.broadcast %cst_61 : f32 to vector<16x128xf32>
    %113 = arith.addf %112, %111 : vector<16x128xf32>
    %114 = arith.divf %112, %113 : vector<16x128xf32>
    %c0_62 = arith.constant 0 : index
    %c0_63 = arith.constant 0 : index
    %115 = vector.load %arg9[%c0_62, %c0_63] : memref<16x128xf32, #tpu.memory_space<vmem>>, vector<16x128xf32>
    tpu.vector_store %arg9[%c0_62, %c0_63], %114 {strides = array<i32>} : memref<16x128xf32, #tpu.memory_space<vmem>>, vector<16x128xf32>,
    return
  }
  func.func @transform_0(%arg0: i32) -> (i32, i32) {
    %c0_i32 = arith.constant 0 : i32
    %c0_i32_0 = arith.constant 0 : i32
    %c0_i32_1 = arith.constant 0 : i32
    return %c0_i32, %c0_i32_0 : i32, i32
  }
  func.func @transform_1(%arg0: i32) -> (i32, i32) {
    %c0_i32 = arith.constant 0 : i32
    %c0_i32_0 = arith.constant 0 : i32
    %c0_i32_1 = arith.constant 0 : i32
    return %c0_i32, %c0_i32_0 : i32, i32
  }
  func.func @transform_2(%arg0: i32) -> (i32, i32) {
    %c0_i32 = arith.constant 0 : i32
    %c0_i32_0 = arith.constant 0 : i32
    %c0_i32_1 = arith.constant 0 : i32
    return %c0_i32, %c0_i32_0 : i32, i32
  }
  func.func @transform_3(%arg0: i32) -> (i32, i32, i32, i32) {
    %c0_i32 = arith.constant 0 : i32
    %c0_i32_0 = arith.constant 0 : i32
    %c0_i32_1 = arith.constant 0 : i32
    %c0_i32_2 = arith.constant 0 : i32
    %c0_i32_3 = arith.constant 0 : i32
    return %c0_i32, %c0_i32_0, %c0_i32_1, %c0_i32_2 : i32, i32, i32, i32
  }
  func.func @transform_4(%arg0: i32) -> (i32, i32, i32, i32) {
    %c0_i32 = arith.constant 0 : i32
    %c0_i32_0 = arith.constant 0 : i32
    %c0_i32_1 = arith.constant 0 : i32
    %c0_i32_2 = arith.constant 0 : i32
    %c0_i32_3 = arith.constant 0 : i32
    return %c0_i32, %c0_i32_0, %c0_i32_1, %c0_i32_2 : i32, i32, i32, i32
  }
  func.func @transform_5(%arg0: i32) -> (i32, i32, i32, i32) {
    %c0_i32 = arith.constant 0 : i32
    %c0_i32_0 = arith.constant 0 : i32
    %c0_i32_1 = arith.constant 0 : i32
    %c0_i32_2 = arith.constant 0 : i32
    %c0_i32_3 = arith.constant 0 : i32
    return %c0_i32, %c0_i32_0, %c0_i32_1, %c0_i32_2 : i32, i32, i32, i32
  }
  func.func @transform_6(%arg0: i32) -> (i32, i32, i32, i32) {
    %c0_i32 = arith.constant 0 : i32
    %c0_i32_0 = arith.constant 0 : i32
    %c0_i32_1 = arith.constant 0 : i32
    %c0_i32_2 = arith.constant 0 : i32
    %c0_i32_3 = arith.constant 0 : i32
    return %c0_i32, %c0_i32_0, %c0_i32_1, %c0_i32_2 : i32, i32, i32, i32
  }
  func.func @transform_7(%arg0: i32) -> (i32, i32) {
    %c0_i32 = arith.constant 0 : i32
    %c0_i32_0 = arith.constant 0 : i32
    %c0_i32_1 = arith.constant 0 : i32
    return %c0_i32, %c0_i32_0 : i32, i32
  }
  func.func @transform_8(%arg0: i32) -> (i32, i32) {
    %c0_i32 = arith.constant 0 : i32
    %c0_i32_0 = arith.constant 0 : i32
    %c0_i32_1 = arith.constant 0 : i32
    return %c0_i32, %c0_i32_0 : i32, i32
  }
}

</mosaic_0001>

<llo_original>
// kernel: simple_transformer_forward.1
$region0: #{simple_transformer_forward.1}
  #allocation0 [shape = 'u32[]', space=smem, size = 0x4, offset = 0x4, fixed_abs, tag = 'smem constant byte address 0x4 - core index']
  #allocation1 [shape = 'u32[144,128]{1,0:T(1,128)}', space=vmem, size = 0x12000, scoped, tag = 'internal scratch']
  %s0 = inlined_call_operand.vmem [shape: f32[16,32], index: 0, kind: input, shape index: {}]
  %s1 = inlined_call_operand.vmem [shape: f32[16,32], index: 1, kind: input, shape index: {}]
  %s2 = inlined_call_operand.vmem [shape: f32[16,16], index: 2, kind: input, shape index: {}]
  %s3 = inlined_call_operand.vmem [shape: f32[2,4,32,8], index: 3, kind: input, shape index: {}]
  %s4 = inlined_call_operand.vmem [shape: f32[2,4,32,8], index: 4, kind: input, shape index: {}]
  %s5 = inlined_call_operand.vmem [shape: f32[2,4,32,8], index: 5, kind: input, shape index: {}]
  %s6 = inlined_call_operand.vmem [shape: f32[2,4,8,32], index: 6, kind: input, shape index: {}]
  %s7 = inlined_call_operand.vmem [shape: f32[32,128], index: 7, kind: input, shape index: {}]
  %s8 = inlined_call_operand.vmem [shape: f32[16,128], index: 8, kind: output, shape index: {}]
  %s9 = sld [smem:[#allocation0]]
  $region42: #{simple_transformer_forward.1} parent=0
    _
  %s11 = ssub.s32 1, %s9
  %s12 = scalar_select 0, %s11, %s9
  // Predicated region
  $region2: #{simple_transformer_forward.1} parent=0 // pred_check
    _
  $region3: #{simple_transformer_forward.1} parent=0 // pred_check_branch
    %14 = sbr.rel (0) target = $region5
  $region4: #{simple_transformer_forward.1} parent=0 // pred_region
    _
  $region5: #{simple_transformer_forward.1} parent=0 // pred_fallthru
    _
  // Predicated region
  $region6: #{simple_transformer_forward.1} parent=0 // pred_check
    _
  $region7: #{simple_transformer_forward.1} parent=0 // pred_check_branch
    %16 = sbr.rel (0) target = $region9
  $region8: #{simple_transformer_forward.1} parent=0 // pred_region
    _
  $region9: #{simple_transformer_forward.1} parent=0 // pred_fallthru
    _
  // Predicated region
  $region10: #{simple_transformer_forward.1} parent=0 // pred_check
    _
  $region11: #{simple_transformer_forward.1} parent=0 // pred_check_branch
    %18 = sbr.rel (0) target = $region13
  $region12: #{simple_transformer_forward.1} parent=0 // pred_region
    _
  $region13: #{simple_transformer_forward.1} parent=0 // pred_fallthru
    _
  // Predicated region
  $region14: #{simple_transformer_forward.1} parent=0 // pred_check
    _
  $region15: #{simple_transformer_forward.1} parent=0 // pred_check_branch
    %20 = sbr.rel (0) target = $region17
  $region16: #{simple_transformer_forward.1} parent=0 // pred_region
    _
  $region17: #{simple_transformer_forward.1} parent=0 // pred_fallthru
    _
  // Predicated region
  $region18: #{simple_transformer_forward.1} parent=0 // pred_check
    _
  $region19: #{simple_transformer_forward.1} parent=0 // pred_check_branch
    %22 = sbr.rel (0) target = $region21
  $region20: #{simple_transformer_forward.1} parent=0 // pred_region
    _
  $region21: #{simple_transformer_forward.1} parent=0 // pred_fallthru
    _
  // Predicated region
  $region22: #{simple_transformer_forward.1} parent=0 // pred_check
    _
  $region23: #{simple_transformer_forward.1} parent=0 // pred_check_branch
    %24 = sbr.rel (0) target = $region25
  $region24: #{simple_transformer_forward.1} parent=0 // pred_region
    _
  $region25: #{simple_transformer_forward.1} parent=0 // pred_fallthru
    _
  // Predicated region
  $region26: #{simple_transformer_forward.1} parent=0 // pred_check
    _
  $region27: #{simple_transformer_forward.1} parent=0 // pred_check_branch
    %26 = sbr.rel (0) target = $region29
  $region28: #{simple_transformer_forward.1} parent=0 // pred_region
    _
  $region29: #{simple_transformer_forward.1} parent=0 // pred_fallthru
    _
  // Predicated region
  $region30: #{simple_transformer_forward.1} parent=0 // pred_check
    _
  $region31: #{simple_transformer_forward.1} parent=0 // pred_check_branch
    %28 = sbr.rel (0) target = $region33
  $region32: #{simple_transformer_forward.1} parent=0 // pred_region
    _
  $region33: #{simple_transformer_forward.1} parent=0 // pred_fallthru
    _
  %v29 = vld [vmem:[%s0] sm:$0xff]
  %v30 = vld [vmem:[%s0 + $0x8] sm:$0xff]
  %v31 = vmul.f32 %v29, 5.656854
  %v32 = vmul.f32 %v30, 5.656854
  %v33 = vld [vmem:[%s1] sm:$0xff]
  %v34 = vld [vmem:[%s1 + $0x8] sm:$0xff]
  %v35 = vadd.f32 %v31, %v33
  %v36 = vadd.f32 %v32, %v34
  %v37 = vld [vmem:[%s2] sm:$0xff]
  %v38 = vld [vmem:[%s2 + $0x8] sm:$0xff]
  %v39 = vld [vmem:[%s3] sm:$0xff]
  %v40 = vld [vmem:[%s3 + $0x8] sm:$0xff]
  %v41 = vld [vmem:[%s3 + $0x10] sm:$0xff]
  %v42 = vld [vmem:[%s3 + $0x18] sm:$0xff]
  %v43 = vld [vmem:[%s3 + $0x20] sm:$0xff]
  %v44 = vld [vmem:[%s3 + $0x28] sm:$0xff]
  %v45 = vld [vmem:[%s3 + $0x30] sm:$0xff]
  %v46 = vld [vmem:[%s3 + $0x38] sm:$0xff]
  %v47 = vld [vmem:[%s3 + $0x40] sm:$0xff]
  %v48 = vld [vmem:[%s3 + $0x48] sm:$0xff]
  %v49 = vld [vmem:[%s3 + $0x50] sm:$0xff]
  %v50 = vld [vmem:[%s3 + $0x58] sm:$0xff]
  %v51 = vld [vmem:[%s3 + $0x60] sm:$0xff]
  %v52 = vld [vmem:[%s3 + $0x68] sm:$0xff]
  %v53 = vld [vmem:[%s3 + $0x70] sm:$0xff]
  %v54 = vld [vmem:[%s3 + $0x78] sm:$0xff]
  %v55 = vld [vmem:[%s4] sm:$0xff]
  %v56 = vld [vmem:[%s4 + $0x8] sm:$0xff]
  %v57 = vld [vmem:[%s4 + $0x10] sm:$0xff]
  %v58 = vld [vmem:[%s4 + $0x18] sm:$0xff]
  %v59 = vld [vmem:[%s4 + $0x20] sm:$0xff]
  %v60 = vld [vmem:[%s4 + $0x28] sm:$0xff]
  %v61 = vld [vmem:[%s4 + $0x30] sm:$0xff]
  %v62 = vld [vmem:[%s4 + $0x38] sm:$0xff]
  %v63 = vld [vmem:[%s4 + $0x40] sm:$0xff]
  %v64 = vld [vmem:[%s4 + $0x48] sm:$0xff]
  %v65 = vld [vmem:[%s4 + $0x50] sm:$0xff]
  %v66 = vld [vmem:[%s4 + $0x58] sm:$0xff]
  %v67 = vld [vmem:[%s4 + $0x60] sm:$0xff]
  %v68 = vld [vmem:[%s4 + $0x68] sm:$0xff]
  %v69 = vld [vmem:[%s4 + $0x70] sm:$0xff]
  %v70 = vld [vmem:[%s4 + $0x78] sm:$0xff]
  %v71 = vld [vmem:[%s5] sm:$0xff]
  %v72 = vld [vmem:[%s5 + $0x8] sm:$0xff]
  %v73 = vld [vmem:[%s5 + $0x10] sm:$0xff]
  %v74 = vld [vmem:[%s5 + $0x18] sm:$0xff]
  %v75 = vld [vmem:[%s5 + $0x20] sm:$0xff]
  %v76 = vld [vmem:[%s5 + $0x28] sm:$0xff]
  %v77 = vld [vmem:[%s5 + $0x30] sm:$0xff]
  %v78 = vld [vmem:[%s5 + $0x38] sm:$0xff]
  %v79 = vld [vmem:[%s5 + $0x40] sm:$0xff]
  %v80 = vld [vmem:[%s5 + $0x48] sm:$0xff]
  %v81 = vld [vmem:[%s5 + $0x50] sm:$0xff]
  %v82 = vld [vmem:[%s5 + $0x58] sm:$0xff]
  %v83 = vld [vmem:[%s5 + $0x60] sm:$0xff]
  %v84 = vld [vmem:[%s5 + $0x68] sm:$0xff]
  %v85 = vld [vmem:[%s5 + $0x70] sm:$0xff]
  %v86 = vld [vmem:[%s5 + $0x78] sm:$0xff]
  %v87 = vld [vmem:[%s6] sm:$0xff]
  %v88 = vld [vmem:[%s6 + $0x8] sm:$0xff]
  %v89 = vld [vmem:[%s6 + $0x10] sm:$0xff]
  %v90 = vld [vmem:[%s6 + $0x18] sm:$0xff]
  %vm91 = vcmask 261120
  %v93 = vsel %vm91, %v35, 0
  %v96 = vsel %vm91, %v36, 0
  %98 = vmatprep.subr.mxu0 0.0
  %99 = vmatpush1.msra.mxu0 0.0
  %100 = vmatprep.subr.mxu0 0.0
  %101 = vmatpush1.msra.mxu0 0.0
  %102 = vmatprep.subr.mxu0 0.0
  %103 = vmatpush1.msra.mxu0 0.0
  %104 = vmatprep.subr.mxu0 0.0
  %105 = vmatpush1.msra.mxu0 0.0
  %106 = vmatprep.subr.mxu0 0.0
  %107 = vmatpush1.msra.mxu0 0.0
  %108 = vmatprep.subr.mxu0 0.0
  %109 = vmatpush1.msra.mxu0 0.0
  %110 = vmatprep.subr.mxu0 0.0
  %111 = vmatpush1.msra.mxu0 0.0
  %112 = vmatprep.subr.mxu0 0.0
  %113 = vmatpush1.msra.mxu0 0.0
  %114 = vmatprep.subr.mxu0 0.0
  %115 = vmatpush1.msra.mxu0 0.0
  %116 = vmatprep.subr.mxu0 0.0
  %117 = vmatpush1.msra.mxu0 0.0
  %118 = vmatprep.subr.mxu0 0.0
  %119 = vmatpush1.msra.mxu0 0.0
  %120 = vmatprep.subr.mxu0 0.0
  %121 = vmatpush1.msra.mxu0 0.0
  %122 = vmatprep.subr.mxu0 0.0
  %123 = vmatpush1.msra.mxu0 %v42
  %124 = vmatprep.subr.mxu0 0.0
  %125 = vmatpush1.msra.mxu0 %v41
  %126 = vmatprep.subr.mxu0 0.0
  %127 = vmatpush1.msra.mxu0 %v40
  %128 = vmatprep.subr.mxu0 0.0
  %129 = vmatpush1.msra.mxu0 %v39
  %130 = vmatprep.subr.mxu0 0.0
  %131 = vmatpush2.msra.mxu0 0.0
  %132 = vmatprep.subr.mxu0 0.0
  %133 = vmatpush2.msra.mxu0 0.0
  %134 = vmatprep.subr.mxu0 0.0
  %135 = vmatpush2.msra.mxu0 0.0
  %136 = vmatprep.subr.mxu0 0.0
  %137 = vmatpush2.msra.mxu0 0.0
  %138 = vmatprep.subr.mxu0 0.0
  %139 = vmatpush2.msra.mxu0 0.0
  %140 = vmatprep.subr.mxu0 0.0
  %141 = vmatpush2.msra.mxu0 0.0
  %142 = vmatprep.subr.mxu0 0.0
  %143 = vmatpush2.msra.mxu0 0.0
  %144 = vmatprep.subr.mxu0 0.0
  %145 = vmatpush2.msra.mxu0 0.0
  %146 = vmatprep.subr.mxu0 0.0
  %147 = vmatpush2.msra.mxu0 0.0
  %148 = vmatprep.subr.mxu0 0.0
  %149 = vmatpush2.msra.mxu0 0.0
  %150 = vmatprep.subr.mxu0 0.0
  %151 = vmatpush2.msra.mxu0 0.0
  %152 = vmatprep.subr.mxu0 0.0
  %153 = vmatpush2.msra.mxu0 0.0
  %154 = vmatprep.subr.mxu0 0.0
  %155 = vmatpush2.msra.mxu0 0.0
  %156 = vmatprep.subr.mxu0 0.0
  %157 = vmatpush2.msra.mxu0 0.0
  %158 = vmatprep.subr.mxu0 0.0
  %159 = vmatpush2.msra.mxu0 0.0
  %160 = vmatprep.subr.mxu0 0.0
  %161 = vmatpush2.msra.mxu0 0.0
  %162 = vmatprep.mubr.f32.mxu0 0.0
  %163 = vmatmul.mubr.f32.gmra.mxu0 %v93
  %v164 = vpop.f32.mrf.mxu0
  %v165 = vadd.f32 0.0, %v164
  %v166 = vpop.f32.mrf.mxu0
  %167 = vmatprep.mubr.f32.mxu0 0.0
  %168 = vmatmul.mubr.f32.gmra.mxu0 %v96
  %v169 = vpop.f32.mrf.mxu0
  %v170 = vadd.f32 0.0, %v169
  %v171 = vpop.f32.mrf.mxu0
  %172 = vdwg.mxu0
  %173 = vmatprep.subr.mxu0 0.0
  %174 = vmatpush1.msra.mxu0 0.0
  %175 = vmatprep.subr.mxu0 0.0
  %176 = vmatpush1.msra.mxu0 0.0
  %177 = vmatprep.subr.mxu0 0.0
  %178 = vmatpush1.msra.mxu0 0.0
  %179 = vmatprep.subr.mxu0 0.0
  %180 = vmatpush1.msra.mxu0 0.0
  %181 = vmatprep.subr.mxu0 0.0
  %182 = vmatpush1.msra.mxu0 0.0
  %183 = vmatprep.subr.mxu0 0.0
  %184 = vmatpush1.msra.mxu0 0.0
  %185 = vmatprep.subr.mxu0 0.0
  %186 = vmatpush1.msra.mxu0 0.0
  %187 = vmatprep.subr.mxu0 0.0
  %188 = vmatpush1.msra.mxu0 0.0
  %189 = vmatprep.subr.mxu0 0.0
  %190 = vmatpush1.msra.mxu0 0.0
  %191 = vmatprep.subr.mxu0 0.0
  %192 = vmatpush1.msra.mxu0 0.0
  %193 = vmatprep.subr.mxu0 0.0
  %194 = vmatpush1.msra.mxu0 0.0
  %195 = vmatprep.subr.mxu0 0.0
  %196 = vmatpush1.msra.mxu0 0.0
  %197 = vmatprep.subr.mxu0 0.0
  %198 = vmatpush1.msra.mxu0 %v46
  %199 = vmatprep.subr.mxu0 0.0
  %200 = vmatpush1.msra.mxu0 %v45
  %201 = vmatprep.subr.mxu0 0.0
  %202 = vmatpush1.msra.mxu0 %v44
  %203 = vmatprep.subr.mxu0 0.0
  %204 = vmatpush1.msra.mxu0 %v43
  %205 = vmatprep.subr.mxu0 0.0
  %206 = vmatpush2.msra.mxu0 0.0
  %207 = vmatprep.subr.mxu0 0.0
  %208 = vmatpush2.msra.mxu0 0.0
  %209 = vmatprep.subr.mxu0 0.0
  %210 = vmatpush2.msra.mxu0 0.0
  %211 = vmatprep.subr.mxu0 0.0
  %212 = vmatpush2.msra.mxu0 0.0
  %213 = vmatprep.subr.mxu0 0.0
  %214 = vmatpush2.msra.mxu0 0.0
  %215 = vmatprep.subr.mxu0 0.0
  %216 = vmatpush2.msra.mxu0 0.0
  %217 = vmatprep.subr.mxu0 0.0
  %218 = vmatpush2.msra.mxu0 0.0
  %219 = vmatprep.subr.mxu0 0.0
  %220 = vmatpush2.msra.mxu0 0.0
  %221 = vmatprep.subr.mxu0 0.0
  %222 = vmatpush2.msra.mxu0 0.0
  %223 = vmatprep.subr.mxu0 0.0
  %224 = vmatpush2.msra.mxu0 0.0
  %225 = vmatprep.subr.mxu0 0.0
  %226 = vmatpush2.msra.mxu0 0.0
  %227 = vmatprep.subr.mxu0 0.0
  %228 = vmatpush2.msra.mxu0 0.0
  %229 = vmatprep.subr.mxu0 0.0
  %230 = vmatpush2.msra.mxu0 0.0
  %231 = vmatprep.subr.mxu0 0.0
  %232 = vmatpush2.msra.mxu0 0.0
  %233 = vmatprep.subr.mxu0 0.0
  %234 = vmatpush2.msra.mxu0 0.0
  %235 = vmatprep.subr.mxu0 0.0
  %236 = vmatpush2.msra.mxu0 0.0
  %237 = vmatprep.mubr.f32.mxu0 0.0
  %238 = vmatmul.mubr.f32.gmra.mxu0 %v93
  %v239 = vpop.f32.mrf.mxu0
  %v240 = vadd.f32 0.0, %v239
  %v241 = vpop.f32.mrf.mxu0
  %242 = vmatprep.mubr.f32.mxu0 0.0
  %243 = vmatmul.mubr.f32.gmra.mxu0 %v96
  %v244 = vpop.f32.mrf.mxu0
  %v245 = vadd.f32 0.0, %v244
  %v246 = vpop.f32.mrf.mxu0
  %247 = vdwg.mxu0
  %248 = vmatprep.subr.mxu0 0.0
  %249 = vmatpush1.msra.mxu0 0.0
  %250 = vmatprep.subr.mxu0 0.0
  %251 = vmatpush1.msra.mxu0 0.0
  %252 = vmatprep.subr.mxu0 0.0
  %253 = vmatpush1.msra.mxu0 0.0
  %254 = vmatprep.subr.mxu0 0.0
  %255 = vmatpush1.msra.mxu0 0.0
  %256 = vmatprep.subr.mxu0 0.0
  %257 = vmatpush1.msra.mxu0 0.0
  %258 = vmatprep.subr.mxu0 0.0
  %259 = vmatpush1.msra.mxu0 0.0
  %260 = vmatprep.subr.mxu0 0.0
  %261 = vmatpush1.msra.mxu0 0.0
  %262 = vmatprep.subr.mxu0 0.0
  %263 = vmatpush1.msra.mxu0 0.0
  %264 = vmatprep.subr.mxu0 0.0
  %265 = vmatpush1.msra.mxu0 0.0
  %266 = vmatprep.subr.mxu0 0.0
  %267 = vmatpush1.msra.mxu0 0.0
  %268 = vmatprep.subr.mxu0 0.0
  %269 = vmatpush1.msra.mxu0 0.0
  %270 = vmatprep.subr.mxu0 0.0
  %271 = vmatpush1.msra.mxu0 0.0
  %272 = vmatprep.subr.mxu0 0.0
  %273 = vmatpush1.msra.mxu0 %v50
  %274 = vmatprep.subr.mxu0 0.0
  %275 = vmatpush1.msra.mxu0 %v49
  %276 = vmatprep.subr.mxu0 0.0
  %277 = vmatpush1.msra.mxu0 %v48
  %278 = vmatprep.subr.mxu0 0.0
  %279 = vmatpush1.msra.mxu0 %v47
  %280 = vmatprep.subr.mxu0 0.0
  %281 = vmatpush2.msra.mxu0 0.0
  %282 = vmatprep.subr.mxu0 0.0
  %283 = vmatpush2.msra.mxu0 0.0
  %284 = vmatprep.subr.mxu0 0.0
  %285 = vmatpush2.msra.mxu0 0.0
  %286 = vmatprep.subr.mxu0 0.0
  %287 = vmatpush2.msra.mxu0 0.0
  %288 = vmatprep.subr.mxu0 0.0
  %289 = vmatpush2.msra.mxu0 0.0
  %290 = vmatprep.subr.mxu0 0.0
  %291 = vmatpush2.msra.mxu0 0.0
  %292 = vmatprep.subr.mxu0 0.0
  %293 = vmatpush2.msra.mxu0 0.0
  %294 = vmatprep.subr.mxu0 0.0
  %295 = vmatpush2.msra.mxu0 0.0
  %296 = vmatprep.subr.mxu0 0.0
  %297 = vmatpush2.msra.mxu0 0.0
  %298 = vmatprep.subr.mxu0 0.0
  %299 = vmatpush2.msra.mxu0 0.0
  %300 = vmatprep.subr.mxu0 0.0
  %301 = vmatpush2.msra.mxu0 0.0
  %302 = vmatprep.subr.mxu0 0.0
  %303 = vmatpush2.msra.mxu0 0.0
  %304 = vmatprep.subr.mxu0 0.0
  %305 = vmatpush2.msra.mxu0 0.0
  %306 = vmatprep.subr.mxu0 0.0
  %307 = vmatpush2.msra.mxu0 0.0
  %308 = vmatprep.subr.mxu0 0.0
  %309 = vmatpush2.msra.mxu0 0.0
  %310 = vmatprep.subr.mxu0 0.0
  %311 = vmatpush2.msra.mxu0 0.0
  %312 = vmatprep.mubr.f32.mxu0 0.0
  %313 = vmatmul.mubr.f32.gmra.mxu0 %v93
  %v314 = vpop.f32.mrf.mxu0
  %v315 = vadd.f32 0.0, %v314
  %v316 = vpop.f32.mrf.mxu0
  %317 = vmatprep.mubr.f32.mxu0 0.0
  %318 = vmatmul.mubr.f32.gmra.mxu0 %v96
  %v319 = vpop.f32.mrf.mxu0
  %v320 = vadd.f32 0.0, %v319
  %v321 = vpop.f32.mrf.mxu0
  %322 = vdwg.mxu0
  %323 = vmatprep.subr.mxu0 0.0
  %324 = vmatpush1.msra.mxu0 0.0
  %325 = vmatprep.subr.mxu0 0.0
  %326 = vmatpush1.msra.mxu0 0.0
  %327 = vmatprep.subr.mxu0 0.0
  %328 = vmatpush1.msra.mxu0 0.0
  %329 = vmatprep.subr.mxu0 0.0
  %330 = vmatpush1.msra.mxu0 0.0
  %331 = vmatprep.subr.mxu0 0.0
  %332 = vmatpush1.msra.mxu0 0.0
  %333 = vmatprep.subr.mxu0 0.0
  %334 = vmatpush1.msra.mxu0 0.0
  %335 = vmatprep.subr.mxu0 0.0
  %336 = vmatpush1.msra.mxu0 0.0
  %337 = vmatprep.subr.mxu0 0.0
  %338 = vmatpush1.msra.mxu0 0.0
  %339 = vmatprep.subr.mxu0 0.0
  %340 = vmatpush1.msra.mxu0 0.0
  %341 = vmatprep.subr.mxu0 0.0
  %342 = vmatpush1.msra.mxu0 0.0
  %343 = vmatprep.subr.mxu0 0.0
  %344 = vmatpush1.msra.mxu0 0.0
  %345 = vmatprep.subr.mxu0 0.0
  %346 = vmatpush1.msra.mxu0 0.0
  %347 = vmatprep.subr.mxu0 0.0
  %348 = vmatpush1.msra.mxu0 %v54
  %349 = vmatprep.subr.mxu0 0.0
  %350 = vmatpush1.msra.mxu0 %v53
  %351 = vmatprep.subr.mxu0 0.0
  %352 = vmatpush1.msra.mxu0 %v52
  %353 = vmatprep.subr.mxu0 0.0
  %354 = vmatpush1.msra.mxu0 %v51
  %355 = vmatprep.subr.mxu0 0.0
  %356 = vmatpush2.msra.mxu0 0.0
  %357 = vmatprep.subr.mxu0 0.0
  %358 = vmatpush2.msra.mxu0 0.0
  %359 = vmatprep.subr.mxu0 0.0
  %360 = vmatpush2.msra.mxu0 0.0
  %361 = vmatprep.subr.mxu0 0.0
  %362 = vmatpush2.msra.mxu0 0.0
  %363 = vmatprep.subr.mxu0 0.0
  %364 = vmatpush2.msra.mxu0 0.0
  %365 = vmatprep.subr.mxu0 0.0
  %366 = vmatpush2.msra.mxu0 0.0
  %367 = vmatprep.subr.mxu0 0.0
  %368 = vmatpush2.msra.mxu0 0.0
  %369 = vmatprep.subr.mxu0 0.0
  %370 = vmatpush2.msra.mxu0 0.0
  %371 = vmatprep.subr.mxu0 0.0
  %372 = vmatpush2.msra.mxu0 0.0
  %373 = vmatprep.subr.mxu0 0.0
  %374 = vmatpush2.msra.mxu0 0.0
  %375 = vmatprep.subr.mxu0 0.0
  %376 = vmatpush2.msra.mxu0 0.0
  %377 = vmatprep.subr.mxu0 0.0
  %378 = vmatpush2.msra.mxu0 0.0
  %379 = vmatprep.subr.mxu0 0.0
  %380 = vmatpush2.msra.mxu0 0.0
  %381 = vmatprep.subr.mxu0 0.0
  %382 = vmatpush2.msra.mxu0 0.0
  %383 = vmatprep.subr.mxu0 0.0
  %384 = vmatpush2.msra.mxu0 0.0
  %385 = vmatprep.subr.mxu0 0.0
  %386 = vmatpush2.msra.mxu0 0.0
  %387 = vmatprep.mubr.f32.mxu0 0.0
  %388 = vmatmul.mubr.f32.gmra.mxu0 %v93
  %v389 = vpop.f32.mrf.mxu0
  %v390 = vadd.f32 0.0, %v389
  %v391 = vpop.f32.mrf.mxu0
  %392 = vmatprep.mubr.f32.mxu0 0.0
  %393 = vmatmul.mubr.f32.gmra.mxu0 %v96
  %v394 = vpop.f32.mrf.mxu0
  %v395 = vadd.f32 0.0, %v394
  %v396 = vpop.f32.mrf.mxu0
  %397 = vdwg.mxu0
  %398 = vmatprep.subr.mxu0 0.0
  %399 = vmatpush1.msra.mxu0 0.0
  %400 = vmatprep.subr.mxu0 0.0
  %401 = vmatpush1.msra.mxu0 0.0
  %402 = vmatprep.subr.mxu0 0.0
  %403 = vmatpush1.msra.mxu0 0.0
  %404 = vmatprep.subr.mxu0 0.0
  %405 = vmatpush1.msra.mxu0 0.0
  %406 = vmatprep.subr.mxu0 0.0
  %407 = vmatpush1.msra.mxu0 0.0
  %408 = vmatprep.subr.mxu0 0.0
  %409 = vmatpush1.msra.mxu0 0.0
  %410 = vmatprep.subr.mxu0 0.0
  %411 = vmatpush1.msra.mxu0 0.0
  %412 = vmatprep.subr.mxu0 0.0
  %413 = vmatpush1.msra.mxu0 0.0
  %414 = vmatprep.subr.mxu0 0.0
  %415 = vmatpush1.msra.mxu0 0.0
  %416 = vmatprep.subr.mxu0 0.0
  %417 = vmatpush1.msra.mxu0 0.0
  %418 = vmatprep.subr.mxu0 0.0
  %419 = vmatpush1.msra.mxu0 0.0
  %420 = vmatprep.subr.mxu0 0.0
  %421 = vmatpush1.msra.mxu0 0.0
  %422 = vmatprep.subr.mxu0 0.0
  %423 = vmatpush1.msra.mxu0 %v58
  %424 = vmatprep.subr.mxu0 0.0
  %425 = vmatpush1.msra.mxu0 %v57
  %426 = vmatprep.subr.mxu0 0.0
  %427 = vmatpush1.msra.mxu0 %v56
  %428 = vmatprep.subr.mxu0 0.0
  %429 = vmatpush1.msra.mxu0 %v55
  %430 = vmatprep.subr.mxu0 0.0
  %431 = vmatpush2.msra.mxu0 0.0
  %432 = vmatprep.subr.mxu0 0.0
  %433 = vmatpush2.msra.mxu0 0.0
  %434 = vmatprep.subr.mxu0 0.0
  %435 = vmatpush2.msra.mxu0 0.0
  %436 = vmatprep.subr.mxu0 0.0
  %437 = vmatpush2.msra.mxu0 0.0
  %438 = vmatprep.subr.mxu0 0.0
  %439 = vmatpush2.msra.mxu0 0.0
  %440 = vmatprep.subr.mxu0 0.0
  %441 = vmatpush2.msra.mxu0 0.0
  %442 = vmatprep.subr.mxu0 0.0
  %443 = vmatpush2.msra.mxu0 0.0
  %444 = vmatprep.subr.mxu0 0.0
  %445 = vmatpush2.msra.mxu0 0.0
  %446 = vmatprep.subr.mxu0 0.0
  %447 = vmatpush2.msra.mxu0 0.0
  %448 = vmatprep.subr.mxu0 0.0
  %449 = vmatpush2.msra.mxu0 0.0
  %450 = vmatprep.subr.mxu0 0.0
  %451 = vmatpush2.msra.mxu0 0.0
  %452 = vmatprep.subr.mxu0 0.0
  %453 = vmatpush2.msra.mxu0 0.0
  %454 = vmatprep.subr.mxu0 0.0
  %455 = vmatpush2.msra.mxu0 0.0
  %456 = vmatprep.subr.mxu0 0.0
  %457 = vmatpush2.msra.mxu0 0.0
  %458 = vmatprep.subr.mxu0 0.0
  %459 = vmatpush2.msra.mxu0 0.0
  %460 = vmatprep.subr.mxu0 0.0
  %461 = vmatpush2.msra.mxu0 0.0
  %462 = vmatprep.mubr.f32.mxu0 0.0
  %463 = vmatmul.mubr.f32.gmra.mxu0 %v93
  %v464 = vpop.f32.mrf.mxu0
  %v465 = vadd.f32 0.0, %v464
  %v466 = vpop.f32.mrf.mxu0
  %467 = vmatprep.mubr.f32.mxu0 0.0
  %468 = vmatmul.mubr.f32.gmra.mxu0 %v96
  %v469 = vpop.f32.mrf.mxu0
  %v470 = vadd.f32 0.0, %v469
  %v471 = vpop.f32.mrf.mxu0
  %472 = vdwg.mxu0
  %473 = vmatprep.subr.mxu0 0.0
  %474 = vmatpush1.msra.mxu0 0.0
  %475 = vmatprep.subr.mxu0 0.0
  %476 = vmatpush1.msra.mxu0 0.0
  %477 = vmatprep.subr.mxu0 0.0
  %478 = vmatpush1.msra.mxu0 0.0
  %479 = vmatprep.subr.mxu0 0.0
  %480 = vmatpush1.msra.mxu0 0.0
  %481 = vmatprep.subr.mxu0 0.0
  %482 = vmatpush1.msra.mxu0 0.0
  %483 = vmatprep.subr.mxu0 0.0
  %484 = vmatpush1.msra.mxu0 0.0
  %485 = vmatprep.subr.mxu0 0.0
  %486 = vmatpush1.msra.mxu0 0.0
  %487 = vmatprep.subr.mxu0 0.0
  %488 = vmatpush1.msra.mxu0 0.0
  %489 = vmatprep.subr.mxu0 0.0
  %490 = vmatpush1.msra.mxu0 0.0
  %491 = vmatprep.subr.mxu0 0.0
  %492 = vmatpush1.msra.mxu0 0.0
  %493 = vmatprep.subr.mxu0 0.0
  %494 = vmatpush1.msra.mxu0 0.0
  %495 = vmatprep.subr.mxu0 0.0
  %496 = vmatpush1.msra.mxu0 0.0
  %497 = vmatprep.subr.mxu0 0.0
  %498 = vmatpush1.msra.mxu0 %v62
  %499 = vmatprep.subr.mxu0 0.0
  %500 = vmatpush1.msra.mxu0 %v61
  %501 = vmatprep.subr.mxu0 0.0
  %502 = vmatpush1.msra.mxu0 %v60
  %503 = vmatprep.subr.mxu0 0.0
  %504 = vmatpush1.msra.mxu0 %v59
  %505 = vmatprep.subr.mxu0 0.0
  %506 = vmatpush2.msra.mxu0 0.0
  %507 = vmatprep.subr.mxu0 0.0
  %508 = vmatpush2.msra.mxu0 0.0
  %509 = vmatprep.subr.mxu0 0.0
  %510 = vmatpush2.msra.mxu0 0.0
  %511 = vmatprep.subr.mxu0 0.0
  %512 = vmatpush2.msra.mxu0 0.0
  %513 = vmatprep.subr.mxu0 0.0
  %514 = vmatpush2.msra.mxu0 0.0
  %515 = vmatprep.subr.mxu0 0.0
  %516 = vmatpush2.msra.mxu0 0.0
  %517 = vmatprep.subr.mxu0 0.0
  %518 = vmatpush2.msra.mxu0 0.0
  %519 = vmatprep.subr.mxu0 0.0
  %520 = vmatpush2.msra.mxu0 0.0
  %521 = vmatprep.subr.mxu0 0.0
  %522 = vmatpush2.msra.mxu0 0.0
  %523 = vmatprep.subr.mxu0 0.0
  %524 = vmatpush2.msra.mxu0 0.0
  %525 = vmatprep.subr.mxu0 0.0
  %526 = vmatpush2.msra.mxu0 0.0
  %527 = vmatprep.subr.mxu0 0.0
  %528 = vmatpush2.msra.mxu0 0.0
  %529 = vmatprep.subr.mxu0 0.0
  %530 = vmatpush2.msra.mxu0 0.0
  %531 = vmatprep.subr.mxu0 0.0
  %532 = vmatpush2.msra.mxu0 0.0
  %533 = vmatprep.subr.mxu0 0.0
  %534 = vmatpush2.msra.mxu0 0.0
  %535 = vmatprep.subr.mxu0 0.0
  %536 = vmatpush2.msra.mxu0 0.0
  %537 = vmatprep.mubr.f32.mxu0 0.0
  %538 = vmatmul.mubr.f32.gmra.mxu0 %v93
  %v539 = vpop.f32.mrf.mxu0
  %v540 = vadd.f32 0.0, %v539
  %v541 = vpop.f32.mrf.mxu0
  %542 = vmatprep.mubr.f32.mxu0 0.0
  %543 = vmatmul.mubr.f32.gmra.mxu0 %v96
  %v544 = vpop.f32.mrf.mxu0
  %v545 = vadd.f32 0.0, %v544
  %v546 = vpop.f32.mrf.mxu0
  %547 = vdwg.mxu0
  %548 = vmatprep.subr.mxu0 0.0
  %549 = vmatpush1.msra.mxu0 0.0
  %550 = vmatprep.subr.mxu0 0.0
  %551 = vmatpush1.msra.mxu0 0.0
  %552 = vmatprep.subr.mxu0 0.0
  %553 = vmatpush1.msra.mxu0 0.0
  %554 = vmatprep.subr.mxu0 0.0
  %555 = vmatpush1.msra.mxu0 0.0
  %556 = vmatprep.subr.mxu0 0.0
  %557 = vmatpush1.msra.mxu0 0.0
  %558 = vmatprep.subr.mxu0 0.0
  %559 = vmatpush1.msra.mxu0 0.0
  %560 = vmatprep.subr.mxu0 0.0
  %561 = vmatpush1.msra.mxu0 0.0
  %562 = vmatprep.subr.mxu0 0.0
  %563 = vmatpush1.msra.mxu0 0.0
  %564 = vmatprep.subr.mxu0 0.0
  %565 = vmatpush1.msra.mxu0 0.0
  %566 = vmatprep.subr.mxu0 0.0
  %567 = vmatpush1.msra.mxu0 0.0
  %568 = vmatprep.subr.mxu0 0.0
  %569 = vmatpush1.msra.mxu0 0.0
  %570 = vmatprep.subr.mxu0 0.0
  %571 = vmatpush1.msra.mxu0 0.0
  %572 = vmatprep.subr.mxu0 0.0
  %573 = vmatpush1.msra.mxu0 %v66
  %574 = vmatprep.subr.mxu0 0.0
  %575 = vmatpush1.msra.mxu0 %v65
  %576 = vmatprep.subr.mxu0 0.0
  %577 = vmatpush1.msra.mxu0 %v64
  %578 = vmatprep.subr.mxu0 0.0
  %579 = vmatpush1.msra.mxu0 %v63
  %580 = vmatprep.subr.mxu0 0.0
  %581 = vmatpush2.msra.mxu0 0.0
  %582 = vmatprep.subr.mxu0 0.0
  %583 = vmatpush2.msra.mxu0 0.0
  %584 = vmatprep.subr.mxu0 0.0
  %585 = vmatpush2.msra.mxu0 0.0
  %586 = vmatprep.subr.mxu0 0.0
  %587 = vmatpush2.msra.mxu0 0.0
  %588 = vmatprep.subr.mxu0 0.0
  %589 = vmatpush2.msra.mxu0 0.0
  %590 = vmatprep.subr.mxu0 0.0
  %591 = vmatpush2.msra.mxu0 0.0
  %592 = vmatprep.subr.mxu0 0.0
  %593 = vmatpush2.msra.mxu0 0.0
  %594 = vmatprep.subr.mxu0 0.0
  %595 = vmatpush2.msra.mxu0 0.0
  %596 = vmatprep.subr.mxu0 0.0
  %597 = vmatpush2.msra.mxu0 0.0
  %598 = vmatprep.subr.mxu0 0.0
  %599 = vmatpush2.msra.mxu0 0.0
  %600 = vmatprep.subr.mxu0 0.0
  %601 = vmatpush2.msra.mxu0 0.0
  %602 = vmatprep.subr.mxu0 0.0
  %603 = vmatpush2.msra.mxu0 0.0
  %604 = vmatprep.subr.mxu0 0.0
  %605 = vmatpush2.msra.mxu0 0.0
  %606 = vmatprep.subr.mxu0 0.0
  %607 = vmatpush2.msra.mxu0 0.0
  %608 = vmatprep.subr.mxu0 0.0
  %609 = vmatpush2.msra.mxu0 0.0
  %610 = vmatprep.subr.mxu0 0.0
  %611 = vmatpush2.msra.mxu0 0.0
  %612 = vmatprep.mubr.f32.mxu0 0.0
  %613 = vmatmul.mubr.f32.gmra.mxu0 %v93
  %v614 = vpop.f32.mrf.mxu0
  %v615 = vadd.f32 0.0, %v614
  %v616 = vpop.f32.mrf.mxu0
  %617 = vmatprep.mubr.f32.mxu0 0.0
  %618 = vmatmul.mubr.f32.gmra.mxu0 %v96
  %v619 = vpop.f32.mrf.mxu0
  %v620 = vadd.f32 0.0, %v619
  %v621 = vpop.f32.mrf.mxu0
  %622 = vdwg.mxu0
  %623 = vmatprep.subr.mxu0 0.0
  %624 = vmatpush1.msra.mxu0 0.0
  %625 = vmatprep.subr.mxu0 0.0
  %626 = vmatpush1.msra.mxu0 0.0
  %627 = vmatprep.subr.mxu0 0.0
  %628 = vmatpush1.msra.mxu0 0.0
  %629 = vmatprep.subr.mxu0 0.0
  %630 = vmatpush1.msra.mxu0 0.0
  %631 = vmatprep.subr.mxu0 0.0
  %632 = vmatpush1.msra.mxu0 0.0
  %633 = vmatprep.subr.mxu0 0.0
  %634 = vmatpush1.msra.mxu0 0.0
  %635 = vmatprep.subr.mxu0 0.0
  %636 = vmatpush1.msra.mxu0 0.0
  %637 = vmatprep.subr.mxu0 0.0
  %638 = vmatpush1.msra.mxu0 0.0
  %639 = vmatprep.subr.mxu0 0.0
  %640 = vmatpush1.msra.mxu0 0.0
  %641 = vmatprep.subr.mxu0 0.0
  %642 = vmatpush1.msra.mxu0 0.0
  %643 = vmatprep.subr.mxu0 0.0
  %644 = vmatpush1.msra.mxu0 0.0
  %645 = vmatprep.subr.mxu0 0.0
  %646 = vmatpush1.msra.mxu0 0.0
  %647 = vmatprep.subr.mxu0 0.0
  %648 = vmatpush1.msra.mxu0 %v70
  %649 = vmatprep.subr.mxu0 0.0
  %650 = vmatpush1.msra.mxu0 %v69
  %651 = vmatprep.subr.mxu0 0.0
  %652 = vmatpush1.msra.mxu0 %v68
  %653 = vmatprep.subr.mxu0 0.0
  %654 = vmatpush1.msra.mxu0 %v67
  %655 = vmatprep.subr.mxu0 0.0
  %656 = vmatpush2.msra.mxu0 0.0
  %657 = vmatprep.subr.mxu0 0.0
  %658 = vmatpush2.msra.mxu0 0.0
  %659 = vmatprep.subr.mxu0 0.0
  %660 = vmatpush2.msra.mxu0 0.0
  %661 = vmatprep.subr.mxu0 0.0
  %662 = vmatpush2.msra.mxu0 0.0
  %663 = vmatprep.subr.mxu0 0.0
  %664 = vmatpush2.msra.mxu0 0.0
  %665 = vmatprep.subr.mxu0 0.0
  %666 = vmatpush2.msra.mxu0 0.0
  %667 = vmatprep.subr.mxu0 0.0
  %668 = vmatpush2.msra.mxu0 0.0
  %669 = vmatprep.subr.mxu0 0.0
  %670 = vmatpush2.msra.mxu0 0.0
  %671 = vmatprep.subr.mxu0 0.0
  %672 = vmatpush2.msra.mxu0 0.0
  %673 = vmatprep.subr.mxu0 0.0
  %674 = vmatpush2.msra.mxu0 0.0
  %675 = vmatprep.subr.mxu0 0.0
  %676 = vmatpush2.msra.mxu0 0.0
  %677 = vmatprep.subr.mxu0 0.0
  %678 = vmatpush2.msra.mxu0 0.0
  %679 = vmatprep.subr.mxu0 0.0
  %680 = vmatpush2.msra.mxu0 0.0
  %681 = vmatprep.subr.mxu0 0.0
  %682 = vmatpush2.msra.mxu0 0.0
  %683 = vmatprep.subr.mxu0 0.0
  %684 = vmatpush2.msra.mxu0 0.0
  %685 = vmatprep.subr.mxu0 0.0
  %686 = vmatpush2.msra.mxu0 0.0
  %687 = vmatprep.mubr.f32.mxu0 0.0
  %688 = vmatmul.mubr.f32.gmra.mxu0 %v93
  %v689 = vpop.f32.mrf.mxu0
  %v690 = vadd.f32 0.0, %v689
  %v691 = vpop.f32.mrf.mxu0
  %692 = vmatprep.mubr.f32.mxu0 0.0
  %693 = vmatmul.mubr.f32.gmra.mxu0 %v96
  %v694 = vpop.f32.mrf.mxu0
  %v695 = vadd.f32 0.0, %v694
  %v696 = vpop.f32.mrf.mxu0
  %697 = vdwg.mxu0
  %698 = vmatprep.subr.mxu0 0.0
  %699 = vmatpush1.msra.mxu0 0.0
  %700 = vmatprep.subr.mxu0 0.0
  %701 = vmatpush1.msra.mxu0 0.0
  %702 = vmatprep.subr.mxu0 0.0
  %703 = vmatpush1.msra.mxu0 0.0
  %704 = vmatprep.subr.mxu0 0.0
  %705 = vmatpush1.msra.mxu0 0.0
  %706 = vmatprep.subr.mxu0 0.0
  %707 = vmatpush1.msra.mxu0 0.0
  %708 = vmatprep.subr.mxu0 0.0
  %709 = vmatpush1.msra.mxu0 0.0
  %710 = vmatprep.subr.mxu0 0.0
  %711 = vmatpush1.msra.mxu0 0.0
  %712 = vmatprep.subr.mxu0 0.0
  %713 = vmatpush1.msra.mxu0 0.0
  %714 = vmatprep.subr.mxu0 0.0
  %715 = vmatpush1.msra.mxu0 0.0
  %716 = vmatprep.subr.mxu0 0.0
  %717 = vmatpush1.msra.mxu0 0.0
  %718 = vmatprep.subr.mxu0 0.0
  %719 = vmatpush1.msra.mxu0 0.0
  %720 = vmatprep.subr.mxu0 0.0
  %721 = vmatpush1.msra.mxu0 0.0
  %722 = vmatprep.subr.mxu0 0.0
  %723 = vmatpush1.msra.mxu0 %v74
  %724 = vmatprep.subr.mxu0 0.0
  %725 = vmatpush1.msra.mxu0 %v73
  %726 = vmatprep.subr.mxu0 0.0
  %727 = vmatpush1.msra.mxu0 %v72
  %728 = vmatprep.subr.mxu0 0.0
  %729 = vmatpush1.msra.mxu0 %v71
  %730 = vmatprep.subr.mxu0 0.0
  %731 = vmatpush2.msra.mxu0 0.0
  %732 = vmatprep.subr.mxu0 0.0
  %733 = vmatpush2.msra.mxu0 0.0
  %734 = vmatprep.subr.mxu0 0.0
  %735 = vmatpush2.msra.mxu0 0.0
  %736 = vmatprep.subr.mxu0 0.0
  %737 = vmatpush2.msra.mxu0 0.0
  %738 = vmatprep.subr.mxu0 0.0
  %739 = vmatpush2.msra.mxu0 0.0
  %740 = vmatprep.subr.mxu0 0.0
  %741 = vmatpush2.msra.mxu0 0.0
  %742 = vmatprep.subr.mxu0 0.0
  %743 = vmatpush2.msra.mxu0 0.0
  %744 = vmatprep.subr.mxu0 0.0
  %745 = vmatpush2.msra.mxu0 0.0
  %746 = vmatprep.subr.mxu0 0.0
  %747 = vmatpush2.msra.mxu0 0.0
  %748 = vmatprep.subr.mxu0 0.0
  %749 = vmatpush2.msra.mxu0 0.0
  %750 = vmatprep.subr.mxu0 0.0
  %751 = vmatpush2.msra.mxu0 0.0
  %752 = vmatprep.subr.mxu0 0.0
  %753 = vmatpush2.msra.mxu0 0.0
  %754 = vmatprep.subr.mxu0 0.0
  %755 = vmatpush2.msra.mxu0 0.0
  %756 = vmatprep.subr.mxu0 0.0
  %757 = vmatpush2.msra.mxu0 0.0
  %758 = vmatprep.subr.mxu0 0.0
  %759 = vmatpush2.msra.mxu0 0.0
  %760 = vmatprep.subr.mxu0 0.0
  %761 = vmatpush2.msra.mxu0 0.0
  %762 = vmatprep.mubr.f32.mxu0 0.0
  %763 = vmatmul.mubr.f32.gmra.mxu0 %v93
  %v764 = vpop.f32.mrf.mxu0
  %v765 = vadd.f32 0.0, %v764
  %v766 = vpop.f32.mrf.mxu0
  %767 = vmatprep.mubr.f32.mxu0 0.0
  %768 = vmatmul.mubr.f32.gmra.mxu0 %v96
  %v769 = vpop.f32.mrf.mxu0
  %v770 = vadd.f32 0.0, %v769
  %v771 = vpop.f32.mrf.mxu0
  %772 = vdwg.mxu0
  %773 = vmatprep.subr.mxu0 0.0
  %774 = vmatpush1.msra.mxu0 0.0
  %775 = vmatprep.subr.mxu0 0.0
  %776 = vmatpush1.msra.mxu0 0.0
  %777 = vmatprep.subr.mxu0 0.0
  %778 = vmatpush1.msra.mxu0 0.0
  %779 = vmatprep.subr.mxu0 0.0
  %780 = vmatpush1.msra.mxu0 0.0
  %781 = vmatprep.subr.mxu0 0.0
  %782 = vmatpush1.msra.mxu0 0.0
  %783 = vmatprep.subr.mxu0 0.0
  %784 = vmatpush1.msra.mxu0 0.0
  %785 = vmatprep.subr.mxu0 0.0
  %786 = vmatpush1.msra.mxu0 0.0
  %787 = vmatprep.subr.mxu0 0.0
  %788 = vmatpush1.msra.mxu0 0.0
  %789 = vmatprep.subr.mxu0 0.0
  %790 = vmatpush1.msra.mxu0 0.0
  %791 = vmatprep.subr.mxu0 0.0
  %792 = vmatpush1.msra.mxu0 0.0
  %793 = vmatprep.subr.mxu0 0.0
  %794 = vmatpush1.msra.mxu0 0.0
  %795 = vmatprep.subr.mxu0 0.0
  %796 = vmatpush1.msra.mxu0 0.0
  %797 = vmatprep.subr.mxu0 0.0
  %798 = vmatpush1.msra.mxu0 %v78
  %799 = vmatprep.subr.mxu0 0.0
  %800 = vmatpush1.msra.mxu0 %v77
  %801 = vmatprep.subr.mxu0 0.0
  %802 = vmatpush1.msra.mxu0 %v76
  %803 = vmatprep.subr.mxu0 0.0
  %804 = vmatpush1.msra.mxu0 %v75
  %805 = vmatprep.subr.mxu0 0.0
  %806 = vmatpush2.msra.mxu0 0.0
  %807 = vmatprep.subr.mxu0 0.0
  %808 = vmatpush2.msra.mxu0 0.0
  %809 = vmatprep.subr.mxu0 0.0
  %810 = vmatpush2.msra.mxu0 0.0
  %811 = vmatprep.subr.mxu0 0.0
  %812 = vmatpush2.msra.mxu0 0.0
  %813 = vmatprep.subr.mxu0 0.0
  %814 = vmatpush2.msra.mxu0 0.0
  %815 = vmatprep.subr.mxu0 0.0
  %816 = vmatpush2.msra.mxu0 0.0
  %817 = vmatprep.subr.mxu0 0.0
  %818 = vmatpush2.msra.mxu0 0.0
  %819 = vmatprep.subr.mxu0 0.0
  %820 = vmatpush2.msra.mxu0 0.0
  %821 = vmatprep.subr.mxu0 0.0
  %822 = vmatpush2.msra.mxu0 0.0
  %823 = vmatprep.subr.mxu0 0.0
  %824 = vmatpush2.msra.mxu0 0.0
  %825 = vmatprep.subr.mxu0 0.0
  %826 = vmatpush2.msra.mxu0 0.0
  %827 = vmatprep.subr.mxu0 0.0
  %828 = vmatpush2.msra.mxu0 0.0
  %829 = vmatprep.subr.mxu0 0.0
  %830 = vmatpush2.msra.mxu0 0.0
  %831 = vmatprep.subr.mxu0 0.0
  %832 = vmatpush2.msra.mxu0 0.0
  %833 = vmatprep.subr.mxu0 0.0
  %834 = vmatpush2.msra.mxu0 0.0
  %835 = vmatprep.subr.mxu0 0.0
  %836 = vmatpush2.msra.mxu0 0.0
  %837 = vmatprep.mubr.f32.mxu0 0.0
  %838 = vmatmul.mubr.f32.gmra.mxu0 %v93
  %v839 = vpop.f32.mrf.mxu0
  %v840 = vadd.f32 0.0, %v839
  %v841 = vpop.f32.mrf.mxu0
  %842 = vmatprep.mubr.f32.mxu0 0.0
  %843 = vmatmul.mubr.f32.gmra.mxu0 %v96
  %v844 = vpop.f32.mrf.mxu0
  %v845 = vadd.f32 0.0, %v844
  %v846 = vpop.f32.mrf.mxu0
  %847 = vdwg.mxu0
  %848 = vmatprep.subr.mxu0 0.0
  %849 = vmatpush1.msra.mxu0 0.0
  %850 = vmatprep.subr.mxu0 0.0
  %851 = vmatpush1.msra.mxu0 0.0
  %852 = vmatprep.subr.mxu0 0.0
  %853 = vmatpush1.msra.mxu0 0.0
  %854 = vmatprep.subr.mxu0 0.0
  %855 = vmatpush1.msra.mxu0 0.0
  %856 = vmatprep.subr.mxu0 0.0
  %857 = vmatpush1.msra.mxu0 0.0
  %858 = vmatprep.subr.mxu0 0.0
  %859 = vmatpush1.msra.mxu0 0.0
  %860 = vmatprep.subr.mxu0 0.0
  %861 = vmatpush1.msra.mxu0 0.0
  %862 = vmatprep.subr.mxu0 0.0
  %863 = vmatpush1.msra.mxu0 0.0
  %864 = vmatprep.subr.mxu0 0.0
  %865 = vmatpush1.msra.mxu0 0.0
  %866 = vmatprep.subr.mxu0 0.0
  %867 = vmatpush1.msra.mxu0 0.0
  %868 = vmatprep.subr.mxu0 0.0
  %869 = vmatpush1.msra.mxu0 0.0
  %870 = vmatprep.subr.mxu0 0.0
  %871 = vmatpush1.msra.mxu0 0.0
  %872 = vmatprep.subr.mxu0 0.0
  %873 = vmatpush1.msra.mxu0 %v82
  %874 = vmatprep.subr.mxu0 0.0
  %875 = vmatpush1.msra.mxu0 %v81
  %876 = vmatprep.subr.mxu0 0.0
  %877 = vmatpush1.msra.mxu0 %v80
  %878 = vmatprep.subr.mxu0 0.0
  %879 = vmatpush1.msra.mxu0 %v79
  %880 = vmatprep.subr.mxu0 0.0
  %881 = vmatpush2.msra.mxu0 0.0
  %882 = vmatprep.subr.mxu0 0.0
  %883 = vmatpush2.msra.mxu0 0.0
  %884 = vmatprep.subr.mxu0 0.0
  %885 = vmatpush2.msra.mxu0 0.0
  %886 = vmatprep.subr.mxu0 0.0
  %887 = vmatpush2.msra.mxu0 0.0
  %888 = vmatprep.subr.mxu0 0.0
  %889 = vmatpush2.msra.mxu0 0.0
  %890 = vmatprep.subr.mxu0 0.0
  %891 = vmatpush2.msra.mxu0 0.0
  %892 = vmatprep.subr.mxu0 0.0
  %893 = vmatpush2.msra.mxu0 0.0
  %894 = vmatprep.subr.mxu0 0.0
  %895 = vmatpush2.msra.mxu0 0.0
  %896 = vmatprep.subr.mxu0 0.0
  %897 = vmatpush2.msra.mxu0 0.0
  %898 = vmatprep.subr.mxu0 0.0
  %899 = vmatpush2.msra.mxu0 0.0
  %900 = vmatprep.subr.mxu0 0.0
  %901 = vmatpush2.msra.mxu0 0.0
  %902 = vmatprep.subr.mxu0 0.0
  %903 = vmatpush2.msra.mxu0 0.0
  %904 = vmatprep.subr.mxu0 0.0
  %905 = vmatpush2.msra.mxu0 0.0
  %906 = vmatprep.subr.mxu0 0.0
  %907 = vmatpush2.msra.mxu0 0.0
  %908 = vmatprep.subr.mxu0 0.0
  %909 = vmatpush2.msra.mxu0 0.0
  %910 = vmatprep.subr.mxu0 0.0
  %911 = vmatpush2.msra.mxu0 0.0
  %912 = vmatprep.mubr.f32.mxu0 0.0
  %913 = vmatmul.mubr.f32.gmra.mxu0 %v93
  %v914 = vpop.f32.mrf.mxu0
  %v915 = vadd.f32 0.0, %v914
  %v916 = vpop.f32.mrf.mxu0
  %917 = vmatprep.mubr.f32.mxu0 0.0
  %918 = vmatmul.mubr.f32.gmra.mxu0 %v96
  %v919 = vpop.f32.mrf.mxu0
  %v920 = vadd.f32 0.0, %v919
  %v921 = vpop.f32.mrf.mxu0
  %922 = vdwg.mxu0
  %923 = vmatprep.subr.mxu0 0.0
  %924 = vmatpush1.msra.mxu0 0.0
  %925 = vmatprep.subr.mxu0 0.0
  %926 = vmatpush1.msra.mxu0 0.0
  %927 = vmatprep.subr.mxu0 0.0
  %928 = vmatpush1.msra.mxu0 0.0
  %929 = vmatprep.subr.mxu0 0.0
  %930 = vmatpush1.msra.mxu0 0.0
  %931 = vmatprep.subr.mxu0 0.0
  %932 = vmatpush1.msra.mxu0 0.0
  %933 = vmatprep.subr.mxu0 0.0
  %934 = vmatpush1.msra.mxu0 0.0
  %935 = vmatprep.subr.mxu0 0.0
  %936 = vmatpush1.msra.mxu0 0.0
  %937 = vmatprep.subr.mxu0 0.0
  %938 = vmatpush1.msra.mxu0 0.0
  %939 = vmatprep.subr.mxu0 0.0
  %940 = vmatpush1.msra.mxu0 0.0
  %941 = vmatprep.subr.mxu0 0.0
  %942 = vmatpush1.msra.mxu0 0.0
  %943 = vmatprep.subr.mxu0 0.0
  %944 = vmatpush1.msra.mxu0 0.0
  %945 = vmatprep.subr.mxu0 0.0
  %946 = vmatpush1.msra.mxu0 0.0
  %947 = vmatprep.subr.mxu0 0.0
  %948 = vmatpush1.msra.mxu0 %v86
  %949 = vmatprep.subr.mxu0 0.0
  %950 = vmatpush1.msra.mxu0 %v85
  %951 = vmatprep.subr.mxu0 0.0
  %952 = vmatpush1.msra.mxu0 %v84
  %953 = vmatprep.subr.mxu0 0.0
  %954 = vmatpush1.msra.mxu0 %v83
  %955 = vmatprep.subr.mxu0 0.0
  %956 = vmatpush2.msra.mxu0 0.0
  %957 = vmatprep.subr.mxu0 0.0
  %958 = vmatpush2.msra.mxu0 0.0
  %959 = vmatprep.subr.mxu0 0.0
  %960 = vmatpush2.msra.mxu0 0.0
  %961 = vmatprep.subr.mxu0 0.0
  %962 = vmatpush2.msra.mxu0 0.0
  %963 = vmatprep.subr.mxu0 0.0
  %964 = vmatpush2.msra.mxu0 0.0
  %965 = vmatprep.subr.mxu0 0.0
  %966 = vmatpush2.msra.mxu0 0.0
  %967 = vmatprep.subr.mxu0 0.0
  %968 = vmatpush2.msra.mxu0 0.0
  %969 = vmatprep.subr.mxu0 0.0
  %970 = vmatpush2.msra.mxu0 0.0
  %971 = vmatprep.subr.mxu0 0.0
  %972 = vmatpush2.msra.mxu0 0.0
  %973 = vmatprep.subr.mxu0 0.0
  %974 = vmatpush2.msra.mxu0 0.0
  %975 = vmatprep.subr.mxu0 0.0
  %976 = vmatpush2.msra.mxu0 0.0
  %977 = vmatprep.subr.mxu0 0.0
  %978 = vmatpush2.msra.mxu0 0.0
  %979 = vmatprep.subr.mxu0 0.0
  %980 = vmatpush2.msra.mxu0 0.0
  %981 = vmatprep.subr.mxu0 0.0
  %982 = vmatpush2.msra.mxu0 0.0
  %983 = vmatprep.subr.mxu0 0.0
  %984 = vmatpush2.msra.mxu0 0.0
  %985 = vmatprep.subr.mxu0 0.0
  %986 = vmatpush2.msra.mxu0 0.0
  %987 = vmatprep.mubr.f32.mxu0 0.0
  %988 = vmatmul.mubr.f32.gmra.mxu0 %v93
  %v989 = vpop.f32.mrf.mxu0
  %v990 = vadd.f32 0.0, %v989
  %v991 = vpop.f32.mrf.mxu0
  %992 = vmatprep.mubr.f32.mxu0 0.0
  %993 = vmatmul.mubr.f32.gmra.mxu0 %v96
  %v994 = vpop.f32.mrf.mxu0
  %v995 = vadd.f32 0.0, %v994
  %v996 = vpop.f32.mrf.mxu0
  %997 = vdwg.mxu0
  %vm998 = vcmask 64512
  %v1000 = vsel %vm998, %v165, 0
  %v1003 = vsel %vm998, %v170, 0
  %v1006 = vsel %vm998, %v465, 0
  %v1009 = vsel %vm998, %v470, 0
  %1011 = vmatprep.subr.mxu0 0.0
  %1012 = vmatpush1.xpose.msra.mxu0 0.0
  %1013 = vmatprep.subr.mxu0 0.0
  %1014 = vmatpush1.xpose.msra.mxu0 0.0
  %1015 = vmatprep.subr.mxu0 0.0
  %1016 = vmatpush1.xpose.msra.mxu0 0.0
  %1017 = vmatprep.subr.mxu0 0.0
  %1018 = vmatpush1.xpose.msra.mxu0 0.0
  %1019 = vmatprep.subr.mxu0 0.0
  %1020 = vmatpush1.xpose.msra.mxu0 0.0
  %1021 = vmatprep.subr.mxu0 0.0
  %1022 = vmatpush1.xpose.msra.mxu0 0.0
  %1023 = vmatprep.subr.mxu0 0.0
  %1024 = vmatpush1.xpose.msra.mxu0 0.0
  %1025 = vmatprep.subr.mxu0 0.0
  %1026 = vmatpush1.xpose.msra.mxu0 0.0
  %1027 = vmatprep.subr.mxu0 0.0
  %1028 = vmatpush1.xpose.msra.mxu0 0.0
  %1029 = vmatprep.subr.mxu0 0.0
  %1030 = vmatpush1.xpose.msra.mxu0 0.0
  %1031 = vmatprep.subr.mxu0 0.0
  %1032 = vmatpush1.xpose.msra.mxu0 0.0
  %1033 = vmatprep.subr.mxu0 0.0
  %1034 = vmatpush1.xpose.msra.mxu0 0.0
  %1035 = vmatprep.subr.mxu0 0.0
  %1036 = vmatpush1.xpose.msra.mxu0 0.0
  %1037 = vmatprep.subr.mxu0 0.0
  %1038 = vmatpush1.xpose.msra.mxu0 0.0
  %1039 = vmatprep.subr.mxu0 0.0
  %1040 = vmatpush1.xpose.msra.mxu0 %v1009
  %1041 = vmatprep.subr.mxu0 0.0
  %1042 = vmatpush1.xpose.msra.mxu0 %v1006
  %1043 = vmatprep.subr.mxu0 0.0
  %1044 = vmatpush2.xpose.msra.mxu0 0.0
  %1045 = vmatprep.subr.mxu0 0.0
  %1046 = vmatpush2.xpose.msra.mxu0 0.0
  %1047 = vmatprep.subr.mxu0 0.0
  %1048 = vmatpush2.xpose.msra.mxu0 0.0
  %1049 = vmatprep.subr.mxu0 0.0
  %1050 = vmatpush2.xpose.msra.mxu0 0.0
  %1051 = vmatprep.subr.mxu0 0.0
  %1052 = vmatpush2.xpose.msra.mxu0 0.0
  %1053 = vmatprep.subr.mxu0 0.0
  %1054 = vmatpush2.xpose.msra.mxu0 0.0
  %1055 = vmatprep.subr.mxu0 0.0
  %1056 = vmatpush2.xpose.msra.mxu0 0.0
  %1057 = vmatprep.subr.mxu0 0.0
  %1058 = vmatpush2.xpose.msra.mxu0 0.0
  %1059 = vmatprep.subr.mxu0 0.0
  %1060 = vmatpush2.xpose.msra.mxu0 0.0
  %1061 = vmatprep.subr.mxu0 0.0
  %1062 = vmatpush2.xpose.msra.mxu0 0.0
  %1063 = vmatprep.subr.mxu0 0.0
  %1064 = vmatpush2.xpose.msra.mxu0 0.0
  %1065 = vmatprep.subr.mxu0 0.0
  %1066 = vmatpush2.xpose.msra.mxu0 0.0
  %1067 = vmatprep.subr.mxu0 0.0
  %1068 = vmatpush2.xpose.msra.mxu0 0.0
  %1069 = vmatprep.subr.mxu0 0.0
  %1070 = vmatpush2.xpose.msra.mxu0 0.0
  %1071 = vmatprep.subr.mxu0 0.0
  %1072 = vmatpush2.xpose.msra.mxu0 0.0
  %1073 = vmatprep.subr.mxu0 0.0
  %1074 = vmatpush2.xpose.msra.mxu0 0.0
  %1075 = vmatprep.mubr.f32.mxu0 0.0
  %1076 = vmatmul.mubr.f32.gmra.mxu0 %v1000
  %v1077 = vpop.f32.mrf.mxu0
  %v1078 = vadd.f32 %v37, %v1077
  %v1079 = vpop.f32.mrf.mxu0
  %1080 = vmatprep.mubr.f32.mxu0 0.0
  %1081 = vmatmul.mubr.f32.gmra.mxu0 %v1003
  %v1082 = vpop.f32.mrf.mxu0
  %v1083 = vadd.f32 %v38, %v1082
  %v1084 = vpop.f32.mrf.mxu0
  %1085 = vdwg.mxu0
  %v1087 = vsel %vm998, %v240, 0
  %v1090 = vsel %vm998, %v245, 0
  %v1093 = vsel %vm998, %v540, 0
  %v1096 = vsel %vm998, %v545, 0
  %1098 = vmatprep.subr.mxu0 0.0
  %1099 = vmatpush1.xpose.msra.mxu0 0.0
  %1100 = vmatprep.subr.mxu0 0.0
  %1101 = vmatpush1.xpose.msra.mxu0 0.0
  %1102 = vmatprep.subr.mxu0 0.0
  %1103 = vmatpush1.xpose.msra.mxu0 0.0
  %1104 = vmatprep.subr.mxu0 0.0
  %1105 = vmatpush1.xpose.msra.mxu0 0.0
  %1106 = vmatprep.subr.mxu0 0.0
  %1107 = vmatpush1.xpose.msra.mxu0 0.0
  %1108 = vmatprep.subr.mxu0 0.0
  %1109 = vmatpush1.xpose.msra.mxu0 0.0
  %1110 = vmatprep.subr.mxu0 0.0
  %1111 = vmatpush1.xpose.msra.mxu0 0.0
  %1112 = vmatprep.subr.mxu0 0.0
  %1113 = vmatpush1.xpose.msra.mxu0 0.0
  %1114 = vmatprep.subr.mxu0 0.0
  %1115 = vmatpush1.xpose.msra.mxu0 0.0
  %1116 = vmatprep.subr.mxu0 0.0
  %1117 = vmatpush1.xpose.msra.mxu0 0.0
  %1118 = vmatprep.subr.mxu0 0.0
  %1119 = vmatpush1.xpose.msra.mxu0 0.0
  %1120 = vmatprep.subr.mxu0 0.0
  %1121 = vmatpush1.xpose.msra.mxu0 0.0
  %1122 = vmatprep.subr.mxu0 0.0
  %1123 = vmatpush1.xpose.msra.mxu0 0.0
  %1124 = vmatprep.subr.mxu0 0.0
  %1125 = vmatpush1.xpose.msra.mxu0 0.0
  %1126 = vmatprep.subr.mxu0 0.0
  %1127 = vmatpush1.xpose.msra.mxu0 %v1096
  %1128 = vmatprep.subr.mxu0 0.0
  %1129 = vmatpush1.xpose.msra.mxu0 %v1093
  %1130 = vmatprep.subr.mxu0 0.0
  %1131 = vmatpush2.xpose.msra.mxu0 0.0
  %1132 = vmatprep.subr.mxu0 0.0
  %1133 = vmatpush2.xpose.msra.mxu0 0.0
  %1134 = vmatprep.subr.mxu0 0.0
  %1135 = vmatpush2.xpose.msra.mxu0 0.0
  %1136 = vmatprep.subr.mxu0 0.0
  %1137 = vmatpush2.xpose.msra.mxu0 0.0
  %1138 = vmatprep.subr.mxu0 0.0
  %1139 = vmatpush2.xpose.msra.mxu0 0.0
  %1140 = vmatprep.subr.mxu0 0.0
  %1141 = vmatpush2.xpose.msra.mxu0 0.0
  %1142 = vmatprep.subr.mxu0 0.0
  %1143 = vmatpush2.xpose.msra.mxu0 0.0
  %1144 = vmatprep.subr.mxu0 0.0
  %1145 = vmatpush2.xpose.msra.mxu0 0.0
  %1146 = vmatprep.subr.mxu0 0.0
  %1147 = vmatpush2.xpose.msra.mxu0 0.0
  %1148 = vmatprep.subr.mxu0 0.0
  %1149 = vmatpush2.xpose.msra.mxu0 0.0
  %1150 = vmatprep.subr.mxu0 0.0
  %1151 = vmatpush2.xpose.msra.mxu0 0.0
  %1152 = vmatprep.subr.mxu0 0.0
  %1153 = vmatpush2.xpose.msra.mxu0 0.0
  %1154 = vmatprep.subr.mxu0 0.0
  %1155 = vmatpush2.xpose.msra.mxu0 0.0
  %1156 = vmatprep.subr.mxu0 0.0
  %1157 = vmatpush2.xpose.msra.mxu0 0.0
  %1158 = vmatprep.subr.mxu0 0.0
  %1159 = vmatpush2.xpose.msra.mxu0 0.0
  %1160 = vmatprep.subr.mxu0 0.0
  %1161 = vmatpush2.xpose.msra.mxu0 0.0
  %1162 = vmatprep.mubr.f32.mxu0 0.0
  %1163 = vmatmul.mubr.f32.gmra.mxu0 %v1087
  %v1164 = vpop.f32.mrf.mxu0
  %v1165 = vadd.f32 %v37, %v1164
  %v1166 = vpop.f32.mrf.mxu0
  %1167 = vmatprep.mubr.f32.mxu0 0.0
  %1168 = vmatmul.mubr.f32.gmra.mxu0 %v1090
  %v1169 = vpop.f32.mrf.mxu0
  %v1170 = vadd.f32 %v38, %v1169
  %v1171 = vpop.f32.mrf.mxu0
  %1172 = vdwg.mxu0
  %v1174 = vsel %vm998, %v315, 0
  %v1177 = vsel %vm998, %v320, 0
  %v1180 = vsel %vm998, %v615, 0
  %v1183 = vsel %vm998, %v620, 0
  %1185 = vmatprep.subr.mxu0 0.0
  %1186 = vmatpush1.xpose.msra.mxu0 0.0
  %1187 = vmatprep.subr.mxu0 0.0
  %1188 = vmatpush1.xpose.msra.mxu0 0.0
  %1189 = vmatprep.subr.mxu0 0.0
  %1190 = vmatpush1.xpose.msra.mxu0 0.0
  %1191 = vmatprep.subr.mxu0 0.0
  %1192 = vmatpush1.xpose.msra.mxu0 0.0
  %1193 = vmatprep.subr.mxu0 0.0
  %1194 = vmatpush1.xpose.msra.mxu0 0.0
  %1195 = vmatprep.subr.mxu0 0.0
  %1196 = vmatpush1.xpose.msra.mxu0 0.0
  %1197 = vmatprep.subr.mxu0 0.0
  %1198 = vmatpush1.xpose.msra.mxu0 0.0
  %1199 = vmatprep.subr.mxu0 0.0
  %1200 = vmatpush1.xpose.msra.mxu0 0.0
  %1201 = vmatprep.subr.mxu0 0.0
  %1202 = vmatpush1.xpose.msra.mxu0 0.0
  %1203 = vmatprep.subr.mxu0 0.0
  %1204 = vmatpush1.xpose.msra.mxu0 0.0
  %1205 = vmatprep.subr.mxu0 0.0
  %1206 = vmatpush1.xpose.msra.mxu0 0.0
  %1207 = vmatprep.subr.mxu0 0.0
  %1208 = vmatpush1.xpose.msra.mxu0 0.0
  %1209 = vmatprep.subr.mxu0 0.0
  %1210 = vmatpush1.xpose.msra.mxu0 0.0
  %1211 = vmatprep.subr.mxu0 0.0
  %1212 = vmatpush1.xpose.msra.mxu0 0.0
  %1213 = vmatprep.subr.mxu0 0.0
  %1214 = vmatpush1.xpose.msra.mxu0 %v1183
  %1215 = vmatprep.subr.mxu0 0.0
  %1216 = vmatpush1.xpose.msra.mxu0 %v1180
  %1217 = vmatprep.subr.mxu0 0.0
  %1218 = vmatpush2.xpose.msra.mxu0 0.0
  %1219 = vmatprep.subr.mxu0 0.0
  %1220 = vmatpush2.xpose.msra.mxu0 0.0
  %1221 = vmatprep.subr.mxu0 0.0
  %1222 = vmatpush2.xpose.msra.mxu0 0.0
  %1223 = vmatprep.subr.mxu0 0.0
  %1224 = vmatpush2.xpose.msra.mxu0 0.0
  %1225 = vmatprep.subr.mxu0 0.0
  %1226 = vmatpush2.xpose.msra.mxu0 0.0
  %1227 = vmatprep.subr.mxu0 0.0
  %1228 = vmatpush2.xpose.msra.mxu0 0.0
  %1229 = vmatprep.subr.mxu0 0.0
  %1230 = vmatpush2.xpose.msra.mxu0 0.0
  %1231 = vmatprep.subr.mxu0 0.0
  %1232 = vmatpush2.xpose.msra.mxu0 0.0
  %1233 = vmatprep.subr.mxu0 0.0
  %1234 = vmatpush2.xpose.msra.mxu0 0.0
  %1235 = vmatprep.subr.mxu0 0.0
  %1236 = vmatpush2.xpose.msra.mxu0 0.0
  %1237 = vmatprep.subr.mxu0 0.0
  %1238 = vmatpush2.xpose.msra.mxu0 0.0
  %1239 = vmatprep.subr.mxu0 0.0
  %1240 = vmatpush2.xpose.msra.mxu0 0.0
  %1241 = vmatprep.subr.mxu0 0.0
  %1242 = vmatpush2.xpose.msra.mxu0 0.0
  %1243 = vmatprep.subr.mxu0 0.0
  %1244 = vmatpush2.xpose.msra.mxu0 0.0
  %1245 = vmatprep.subr.mxu0 0.0
  %1246 = vmatpush2.xpose.msra.mxu0 0.0
  %1247 = vmatprep.subr.mxu0 0.0
  %1248 = vmatpush2.xpose.msra.mxu0 0.0
  %1249 = vmatprep.mubr.f32.mxu0 0.0
  %1250 = vmatmul.mubr.f32.gmra.mxu0 %v1174
  %v1251 = vpop.f32.mrf.mxu0
  %v1252 = vadd.f32 %v37, %v1251
  %v1253 = vpop.f32.mrf.mxu0
  %1254 = vmatprep.mubr.f32.mxu0 0.0
  %1255 = vmatmul.mubr.f32.gmra.mxu0 %v1177
  %v1256 = vpop.f32.mrf.mxu0
  %v1257 = vadd.f32 %v38, %v1256
  %v1258 = vpop.f32.mrf.mxu0
  %1259 = vdwg.mxu0
  %v1261 = vsel %vm998, %v390, 0
  %v1264 = vsel %vm998, %v395, 0
  %v1267 = vsel %vm998, %v690, 0
  %v1270 = vsel %vm998, %v695, 0
  %1272 = vmatprep.subr.mxu0 0.0
  %1273 = vmatpush1.xpose.msra.mxu0 0.0
  %1274 = vmatprep.subr.mxu0 0.0
  %1275 = vmatpush1.xpose.msra.mxu0 0.0
  %1276 = vmatprep.subr.mxu0 0.0
  %1277 = vmatpush1.xpose.msra.mxu0 0.0
  %1278 = vmatprep.subr.mxu0 0.0
  %1279 = vmatpush1.xpose.msra.mxu0 0.0
  %1280 = vmatprep.subr.mxu0 0.0
  %1281 = vmatpush1.xpose.msra.mxu0 0.0
  %1282 = vmatprep.subr.mxu0 0.0
  %1283 = vmatpush1.xpose.msra.mxu0 0.0
  %1284 = vmatprep.subr.mxu0 0.0
  %1285 = vmatpush1.xpose.msra.mxu0 0.0
  %1286 = vmatprep.subr.mxu0 0.0
  %1287 = vmatpush1.xpose.msra.mxu0 0.0
  %1288 = vmatprep.subr.mxu0 0.0
  %1289 = vmatpush1.xpose.msra.mxu0 0.0
  %1290 = vmatprep.subr.mxu0 0.0
  %1291 = vmatpush1.xpose.msra.mxu0 0.0
  %1292 = vmatprep.subr.mxu0 0.0
  %1293 = vmatpush1.xpose.msra.mxu0 0.0
  %1294 = vmatprep.subr.mxu0 0.0
  %1295 = vmatpush1.xpose.msra.mxu0 0.0
  %1296 = vmatprep.subr.mxu0 0.0
  %1297 = vmatpush1.xpose.msra.mxu0 0.0
  %1298 = vmatprep.subr.mxu0 0.0
  %1299 = vmatpush1.xpose.msra.mxu0 0.0
  %1300 = vmatprep.subr.mxu0 0.0
  %1301 = vmatpush1.xpose.msra.mxu0 %v1270
  %1302 = vmatprep.subr.mxu0 0.0
  %1303 = vmatpush1.xpose.msra.mxu0 %v1267
  %1304 = vmatprep.subr.mxu0 0.0
  %1305 = vmatpush2.xpose.msra.mxu0 0.0
  %1306 = vmatprep.subr.mxu0 0.0
  %1307 = vmatpush2.xpose.msra.mxu0 0.0
  %1308 = vmatprep.subr.mxu0 0.0
  %1309 = vmatpush2.xpose.msra.mxu0 0.0
  %1310 = vmatprep.subr.mxu0 0.0
  %1311 = vmatpush2.xpose.msra.mxu0 0.0
  %1312 = vmatprep.subr.mxu0 0.0
  %1313 = vmatpush2.xpose.msra.mxu0 0.0
  %1314 = vmatprep.subr.mxu0 0.0
  %1315 = vmatpush2.xpose.msra.mxu0 0.0
  %1316 = vmatprep.subr.mxu0 0.0
  %1317 = vmatpush2.xpose.msra.mxu0 0.0
  %1318 = vmatprep.subr.mxu0 0.0
  %1319 = vmatpush2.xpose.msra.mxu0 0.0
  %1320 = vmatprep.subr.mxu0 0.0
  %1321 = vmatpush2.xpose.msra.mxu0 0.0
  %1322 = vmatprep.subr.mxu0 0.0
  %1323 = vmatpush2.xpose.msra.mxu0 0.0
  %1324 = vmatprep.subr.mxu0 0.0
  %1325 = vmatpush2.xpose.msra.mxu0 0.0
  %1326 = vmatprep.subr.mxu0 0.0
  %1327 = vmatpush2.xpose.msra.mxu0 0.0
  %1328 = vmatprep.subr.mxu0 0.0
  %1329 = vmatpush2.xpose.msra.mxu0 0.0
  %1330 = vmatprep.subr.mxu0 0.0
  %1331 = vmatpush2.xpose.msra.mxu0 0.0
  %1332 = vmatprep.subr.mxu0 0.0
  %1333 = vmatpush2.xpose.msra.mxu0 0.0
  %1334 = vmatprep.subr.mxu0 0.0
  %1335 = vmatpush2.xpose.msra.mxu0 0.0
  %1336 = vmatprep.mubr.f32.mxu0 0.0
  %1337 = vmatmul.mubr.f32.gmra.mxu0 %v1261
  %v1338 = vpop.f32.mrf.mxu0
  %v1339 = vadd.f32 %v37, %v1338
  %v1340 = vpop.f32.mrf.mxu0
  %1341 = vmatprep.mubr.f32.mxu0 0.0
  %1342 = vmatmul.mubr.f32.gmra.mxu0 %v1264
  %v1343 = vpop.f32.mrf.mxu0
  %v1344 = vadd.f32 %v38, %v1343
  %v1345 = vpop.f32.mrf.mxu0
  %1346 = vdwg.mxu0
  %vm1347 = vcmask 130048
  %v1348 = vsel %vm1347, %v1078, -inf
  %1349 = vmax.xlane.f32.xlu0 %v1348
  %v1350 = vpop.xlane.xlu0 %1349
  %v1351 = vsel %vm1347, %v1083, -inf
  %1352 = vmax.xlane.f32.xlu0 %v1351
  %v1353 = vpop.xlane.xlu0 %1352
  %v1354 = vsel %vm1347, %v1165, -inf
  %1355 = vmax.xlane.f32.xlu0 %v1354
  %v1356 = vpop.xlane.xlu0 %1355
  %v1357 = vsel %vm1347, %v1170, -inf
  %1358 = vmax.xlane.f32.xlu0 %v1357
  %v1359 = vpop.xlane.xlu0 %1358
  %v1360 = vsel %vm1347, %v1252, -inf
  %1361 = vmax.xlane.f32.xlu0 %v1360
  %v1362 = vpop.xlane.xlu0 %1361
  %v1363 = vsel %vm1347, %v1257, -inf
  %1364 = vmax.xlane.f32.xlu0 %v1363
  %v1365 = vpop.xlane.xlu0 %1364
  %v1366 = vsel %vm1347, %v1339, -inf
  %1367 = vmax.xlane.f32.xlu0 %v1366
  %v1368 = vpop.xlane.xlu0 %1367
  %v1369 = vsel %vm1347, %v1344, -inf
  %1370 = vmax.xlane.f32.xlu0 %v1369
  %v1371 = vpop.xlane.xlu0 %1370
  %v1372 = vsub.f32 %v1078, %v1350
  %v1373 = vsub.f32 %v1083, %v1353
  %v1374 = vsub.f32 %v1165, %v1356
  %v1375 = vsub.f32 %v1170, %v1359
  %v1376 = vsub.f32 %v1252, %v1362
  %v1377 = vsub.f32 %v1257, %v1365
  %v1378 = vsub.f32 %v1339, %v1368
  %v1379 = vsub.f32 %v1344, %v1371
  %v1380 = vmul.f32 %v1372, 1.442695
  %v1381 = vpow.pop %v1380
  %v1382 = vmul.f32 %v1373, 1.442695
  %v1383 = vpow.pop %v1382
  %v1384 = vmul.f32 %v1374, 1.442695
  %v1385 = vpow.pop %v1384
  %v1386 = vmul.f32 %v1375, 1.442695
  %v1387 = vpow.pop %v1386
  %v1388 = vmul.f32 %v1376, 1.442695
  %v1389 = vpow.pop %v1388
  %v1390 = vmul.f32 %v1377, 1.442695
  %v1391 = vpow.pop %v1390
  %v1392 = vmul.f32 %v1378, 1.442695
  %v1393 = vpow.pop %v1392
  %v1394 = vmul.f32 %v1379, 1.442695
  %v1395 = vpow.pop %v1394
  %v1396 = vsel %vm1347, %v1381, 0.0
  %1397 = vadd.xlane.f32.xlu0 %v1396
  %v1398 = vpop.xlane.xlu0 %1397
  %v1399 = vsel %vm1347, %v1383, 0.0
  %1400 = vadd.xlane.f32.xlu0 %v1399
  %v1401 = vpop.xlane.xlu0 %1400
  %v1402 = vsel %vm1347, %v1385, 0.0
  %1403 = vadd.xlane.f32.xlu0 %v1402
  %v1404 = vpop.xlane.xlu0 %1403
  %v1405 = vsel %vm1347, %v1387, 0.0
  %1406 = vadd.xlane.f32.xlu0 %v1405
  %v1407 = vpop.xlane.xlu0 %1406
  %v1408 = vsel %vm1347, %v1389, 0.0
  %1409 = vadd.xlane.f32.xlu0 %v1408
  %v1410 = vpop.xlane.xlu0 %1409
  %v1411 = vsel %vm1347, %v1391, 0.0
  %1412 = vadd.xlane.f32.xlu0 %v1411
  %v1413 = vpop.xlane.xlu0 %1412
  %v1414 = vsel %vm1347, %v1393, 0.0
  %1415 = vadd.xlane.f32.xlu0 %v1414
  %v1416 = vpop.xlane.xlu0 %1415
  %v1417 = vsel %vm1347, %v1395, 0.0
  %1418 = vadd.xlane.f32.xlu0 %v1417
  %v1419 = vpop.xlane.xlu0 %1418
  %v1420 = vrcp.pop %v1398
  %v1421 = vrcp.pop %v1401
  %v1422 = vrcp.pop %v1404
  %v1423 = vrcp.pop %v1407
  %v1424 = vrcp.pop %v1410
  %v1425 = vrcp.pop %v1413
  %v1426 = vrcp.pop %v1416
  %v1427 = vrcp.pop %v1419
  %v1428 = vmul.f32 %v1381, %v1420
  %v1429 = vmul.f32 %v1383, %v1421
  %v1430 = vmul.f32 %v1385, %v1422
  %v1431 = vmul.f32 %v1387, %v1423
  %v1432 = vmul.f32 %v1389, %v1424
  %v1433 = vmul.f32 %v1391, %v1425
  %v1434 = vmul.f32 %v1393, %v1426
  %v1435 = vmul.f32 %v1395, %v1427
  %v1437 = vsel %vm1347, %v1428, 0
  %v1440 = vsel %vm1347, %v1429, 0
  %1442 = vmatprep.subr.mxu0 0.0
  %1443 = vmatpush1.msra.mxu0 0.0
  %1444 = vmatprep.subr.mxu0 0.0
  %1445 = vmatpush1.msra.mxu0 0.0
  %1446 = vmatprep.subr.mxu0 0.0
  %1447 = vmatpush1.msra.mxu0 0.0
  %1448 = vmatprep.subr.mxu0 0.0
  %1449 = vmatpush1.msra.mxu0 0.0
  %1450 = vmatprep.subr.mxu0 0.0
  %1451 = vmatpush1.msra.mxu0 0.0
  %1452 = vmatprep.subr.mxu0 0.0
  %1453 = vmatpush1.msra.mxu0 0.0
  %1454 = vmatprep.subr.mxu0 0.0
  %1455 = vmatpush1.msra.mxu0 0.0
  %1456 = vmatprep.subr.mxu0 0.0
  %1457 = vmatpush1.msra.mxu0 0.0
  %1458 = vmatprep.subr.mxu0 0.0
  %1459 = vmatpush1.msra.mxu0 0.0
  %1460 = vmatprep.subr.mxu0 0.0
  %1461 = vmatpush1.msra.mxu0 0.0
  %1462 = vmatprep.subr.mxu0 0.0
  %1463 = vmatpush1.msra.mxu0 0.0
  %1464 = vmatprep.subr.mxu0 0.0
  %1465 = vmatpush1.msra.mxu0 0.0
  %1466 = vmatprep.subr.mxu0 0.0
  %1467 = vmatpush1.msra.mxu0 0.0
  %1468 = vmatprep.subr.mxu0 0.0
  %1469 = vmatpush1.msra.mxu0 0.0
  %1470 = vmatprep.subr.mxu0 0.0
  %1471 = vmatpush1.msra.mxu0 %v770
  %1472 = vmatprep.subr.mxu0 0.0
  %1473 = vmatpush1.msra.mxu0 %v765
  %1474 = vmatprep.subr.mxu0 0.0
  %1475 = vmatpush2.msra.mxu0 0.0
  %1476 = vmatprep.subr.mxu0 0.0
  %1477 = vmatpush2.msra.mxu0 0.0
  %1478 = vmatprep.subr.mxu0 0.0
  %1479 = vmatpush2.msra.mxu0 0.0
  %1480 = vmatprep.subr.mxu0 0.0
  %1481 = vmatpush2.msra.mxu0 0.0
  %1482 = vmatprep.subr.mxu0 0.0
  %1483 = vmatpush2.msra.mxu0 0.0
  %1484 = vmatprep.subr.mxu0 0.0
  %1485 = vmatpush2.msra.mxu0 0.0
  %1486 = vmatprep.subr.mxu0 0.0
  %1487 = vmatpush2.msra.mxu0 0.0
  %1488 = vmatprep.subr.mxu0 0.0
  %1489 = vmatpush2.msra.mxu0 0.0
  %1490 = vmatprep.subr.mxu0 0.0
  %1491 = vmatpush2.msra.mxu0 0.0
  %1492 = vmatprep.subr.mxu0 0.0
  %1493 = vmatpush2.msra.mxu0 0.0
  %1494 = vmatprep.subr.mxu0 0.0
  %1495 = vmatpush2.msra.mxu0 0.0
  %1496 = vmatprep.subr.mxu0 0.0
  %1497 = vmatpush2.msra.mxu0 0.0
  %1498 = vmatprep.subr.mxu0 0.0
  %1499 = vmatpush2.msra.mxu0 0.0
  %1500 = vmatprep.subr.mxu0 0.0
  %1501 = vmatpush2.msra.mxu0 0.0
  %1502 = vmatprep.subr.mxu0 0.0
  %1503 = vmatpush2.msra.mxu0 0.0
  %1504 = vmatprep.subr.mxu0 0.0
  %1505 = vmatpush2.msra.mxu0 0.0
  %1506 = vmatprep.mubr.f32.mxu0 0.0
  %1507 = vmatmul.mubr.f32.gmra.mxu0 %v1437
  %v1508 = vpop.f32.mrf.mxu0
  %v1509 = vadd.f32 0.0, %v1508
  %v1510 = vpop.f32.mrf.mxu0
  %1511 = vmatprep.mubr.f32.mxu0 0.0
  %1512 = vmatmul.mubr.f32.gmra.mxu0 %v1440
  %v1513 = vpop.f32.mrf.mxu0
  %v1514 = vadd.f32 0.0, %v1513
  %v1515 = vpop.f32.mrf.mxu0
  %1516 = vdwg.mxu0
  %v1518 = vsel %vm1347, %v1430, 0
  %v1521 = vsel %vm1347, %v1431, 0
  %1523 = vmatprep.subr.mxu0 0.0
  %1524 = vmatpush1.msra.mxu0 0.0
  %1525 = vmatprep.subr.mxu0 0.0
  %1526 = vmatpush1.msra.mxu0 0.0
  %1527 = vmatprep.subr.mxu0 0.0
  %1528 = vmatpush1.msra.mxu0 0.0
  %1529 = vmatprep.subr.mxu0 0.0
  %1530 = vmatpush1.msra.mxu0 0.0
  %1531 = vmatprep.subr.mxu0 0.0
  %1532 = vmatpush1.msra.mxu0 0.0
  %1533 = vmatprep.subr.mxu0 0.0
  %1534 = vmatpush1.msra.mxu0 0.0
  %1535 = vmatprep.subr.mxu0 0.0
  %1536 = vmatpush1.msra.mxu0 0.0
  %1537 = vmatprep.subr.mxu0 0.0
  %1538 = vmatpush1.msra.mxu0 0.0
  %1539 = vmatprep.subr.mxu0 0.0
  %1540 = vmatpush1.msra.mxu0 0.0
  %1541 = vmatprep.subr.mxu0 0.0
  %1542 = vmatpush1.msra.mxu0 0.0
  %1543 = vmatprep.subr.mxu0 0.0
  %1544 = vmatpush1.msra.mxu0 0.0
  %1545 = vmatprep.subr.mxu0 0.0
  %1546 = vmatpush1.msra.mxu0 0.0
  %1547 = vmatprep.subr.mxu0 0.0
  %1548 = vmatpush1.msra.mxu0 0.0
  %1549 = vmatprep.subr.mxu0 0.0
  %1550 = vmatpush1.msra.mxu0 0.0
  %1551 = vmatprep.subr.mxu0 0.0
  %1552 = vmatpush1.msra.mxu0 %v845
  %1553 = vmatprep.subr.mxu0 0.0
  %1554 = vmatpush1.msra.mxu0 %v840
  %1555 = vmatprep.subr.mxu0 0.0
  %1556 = vmatpush2.msra.mxu0 0.0
  %1557 = vmatprep.subr.mxu0 0.0
  %1558 = vmatpush2.msra.mxu0 0.0
  %1559 = vmatprep.subr.mxu0 0.0
  %1560 = vmatpush2.msra.mxu0 0.0
  %1561 = vmatprep.subr.mxu0 0.0
  %1562 = vmatpush2.msra.mxu0 0.0
  %1563 = vmatprep.subr.mxu0 0.0
  %1564 = vmatpush2.msra.mxu0 0.0
  %1565 = vmatprep.subr.mxu0 0.0
  %1566 = vmatpush2.msra.mxu0 0.0
  %1567 = vmatprep.subr.mxu0 0.0
  %1568 = vmatpush2.msra.mxu0 0.0
  %1569 = vmatprep.subr.mxu0 0.0
  %1570 = vmatpush2.msra.mxu0 0.0
  %1571 = vmatprep.subr.mxu0 0.0
  %1572 = vmatpush2.msra.mxu0 0.0
  %1573 = vmatprep.subr.mxu0 0.0
  %1574 = vmatpush2.msra.mxu0 0.0
  %1575 = vmatprep.subr.mxu0 0.0
  %1576 = vmatpush2.msra.mxu0 0.0
  %1577 = vmatprep.subr.mxu0 0.0
  %1578 = vmatpush2.msra.mxu0 0.0
  %1579 = vmatprep.subr.mxu0 0.0
  %1580 = vmatpush2.msra.mxu0 0.0
  %1581 = vmatprep.subr.mxu0 0.0
  %1582 = vmatpush2.msra.mxu0 0.0
  %1583 = vmatprep.subr.mxu0 0.0
  %1584 = vmatpush2.msra.mxu0 0.0
  %1585 = vmatprep.subr.mxu0 0.0
  %1586 = vmatpush2.msra.mxu0 0.0
  %1587 = vmatprep.mubr.f32.mxu0 0.0
  %1588 = vmatmul.mubr.f32.gmra.mxu0 %v1518
  %v1589 = vpop.f32.mrf.mxu0
  %v1590 = vadd.f32 0.0, %v1589
  %v1591 = vpop.f32.mrf.mxu0
  %1592 = vmatprep.mubr.f32.mxu0 0.0
  %1593 = vmatmul.mubr.f32.gmra.mxu0 %v1521
  %v1594 = vpop.f32.mrf.mxu0
  %v1595 = vadd.f32 0.0, %v1594
  %v1596 = vpop.f32.mrf.mxu0
  %1597 = vdwg.mxu0
  %v1599 = vsel %vm1347, %v1432, 0
  %v1602 = vsel %vm1347, %v1433, 0
  %1604 = vmatprep.subr.mxu0 0.0
  %1605 = vmatpush1.msra.mxu0 0.0
  %1606 = vmatprep.subr.mxu0 0.0
  %1607 = vmatpush1.msra.mxu0 0.0
  %1608 = vmatprep.subr.mxu0 0.0
  %1609 = vmatpush1.msra.mxu0 0.0
  %1610 = vmatprep.subr.mxu0 0.0
  %1611 = vmatpush1.msra.mxu0 0.0
  %1612 = vmatprep.subr.mxu0 0.0
  %1613 = vmatpush1.msra.mxu0 0.0
  %1614 = vmatprep.subr.mxu0 0.0
  %1615 = vmatpush1.msra.mxu0 0.0
  %1616 = vmatprep.subr.mxu0 0.0
  %1617 = vmatpush1.msra.mxu0 0.0
  %1618 = vmatprep.subr.mxu0 0.0
  %1619 = vmatpush1.msra.mxu0 0.0
  %1620 = vmatprep.subr.mxu0 0.0
  %1621 = vmatpush1.msra.mxu0 0.0
  %1622 = vmatprep.subr.mxu0 0.0
  %1623 = vmatpush1.msra.mxu0 0.0
  %1624 = vmatprep.subr.mxu0 0.0
  %1625 = vmatpush1.msra.mxu0 0.0
  %1626 = vmatprep.subr.mxu0 0.0
  %1627 = vmatpush1.msra.mxu0 0.0
  %1628 = vmatprep.subr.mxu0 0.0
  %1629 = vmatpush1.msra.mxu0 0.0
  %1630 = vmatprep.subr.mxu0 0.0
  %1631 = vmatpush1.msra.mxu0 0.0
  %1632 = vmatprep.subr.mxu0 0.0
  %1633 = vmatpush1.msra.mxu0 %v920
  %1634 = vmatprep.subr.mxu0 0.0
  %1635 = vmatpush1.msra.mxu0 %v915
  %1636 = vmatprep.subr.mxu0 0.0
  %1637 = vmatpush2.msra.mxu0 0.0
  %1638 = vmatprep.subr.mxu0 0.0
  %1639 = vmatpush2.msra.mxu0 0.0
  %1640 = vmatprep.subr.mxu0 0.0
  %1641 = vmatpush2.msra.mxu0 0.0
  %1642 = vmatprep.subr.mxu0 0.0
  %1643 = vmatpush2.msra.mxu0 0.0
  %1644 = vmatprep.subr.mxu0 0.0
  %1645 = vmatpush2.msra.mxu0 0.0
  %1646 = vmatprep.subr.mxu0 0.0
  %1647 = vmatpush2.msra.mxu0 0.0
  %1648 = vmatprep.subr.mxu0 0.0
  %1649 = vmatpush2.msra.mxu0 0.0
  %1650 = vmatprep.subr.mxu0 0.0
  %1651 = vmatpush2.msra.mxu0 0.0
  %1652 = vmatprep.subr.mxu0 0.0
  %1653 = vmatpush2.msra.mxu0 0.0
  %1654 = vmatprep.subr.mxu0 0.0
  %1655 = vmatpush2.msra.mxu0 0.0
  %1656 = vmatprep.subr.mxu0 0.0
  %1657 = vmatpush2.msra.mxu0 0.0
  %1658 = vmatprep.subr.mxu0 0.0
  %1659 = vmatpush2.msra.mxu0 0.0
  %1660 = vmatprep.subr.mxu0 0.0
  %1661 = vmatpush2.msra.mxu0 0.0
  %1662 = vmatprep.subr.mxu0 0.0
  %1663 = vmatpush2.msra.mxu0 0.0
  %1664 = vmatprep.subr.mxu0 0.0
  %1665 = vmatpush2.msra.mxu0 0.0
  %1666 = vmatprep.subr.mxu0 0.0
  %1667 = vmatpush2.msra.mxu0 0.0
  %1668 = vmatprep.mubr.f32.mxu0 0.0
  %1669 = vmatmul.mubr.f32.gmra.mxu0 %v1599
  %v1670 = vpop.f32.mrf.mxu0
  %v1671 = vadd.f32 0.0, %v1670
  %v1672 = vpop.f32.mrf.mxu0
  %1673 = vmatprep.mubr.f32.mxu0 0.0
  %1674 = vmatmul.mubr.f32.gmra.mxu0 %v1602
  %v1675 = vpop.f32.mrf.mxu0
  %v1676 = vadd.f32 0.0, %v1675
  %v1677 = vpop.f32.mrf.mxu0
  %1678 = vdwg.mxu0
  %v1680 = vsel %vm1347, %v1434, 0
  %v1683 = vsel %vm1347, %v1435, 0
  %1685 = vmatprep.subr.mxu0 0.0
  %1686 = vmatpush1.msra.mxu0 0.0
  %1687 = vmatprep.subr.mxu0 0.0
  %1688 = vmatpush1.msra.mxu0 0.0
  %1689 = vmatprep.subr.mxu0 0.0
  %1690 = vmatpush1.msra.mxu0 0.0
  %1691 = vmatprep.subr.mxu0 0.0
  %1692 = vmatpush1.msra.mxu0 0.0
  %1693 = vmatprep.subr.mxu0 0.0
  %1694 = vmatpush1.msra.mxu0 0.0
  %1695 = vmatprep.subr.mxu0 0.0
  %1696 = vmatpush1.msra.mxu0 0.0
  %1697 = vmatprep.subr.mxu0 0.0
  %1698 = vmatpush1.msra.mxu0 0.0
  %1699 = vmatprep.subr.mxu0 0.0
  %1700 = vmatpush1.msra.mxu0 0.0
  %1701 = vmatprep.subr.mxu0 0.0
  %1702 = vmatpush1.msra.mxu0 0.0
  %1703 = vmatprep.subr.mxu0 0.0
  %1704 = vmatpush1.msra.mxu0 0.0
  %1705 = vmatprep.subr.mxu0 0.0
  %1706 = vmatpush1.msra.mxu0 0.0
  %1707 = vmatprep.subr.mxu0 0.0
  %1708 = vmatpush1.msra.mxu0 0.0
  %1709 = vmatprep.subr.mxu0 0.0
  %1710 = vmatpush1.msra.mxu0 0.0
  %1711 = vmatprep.subr.mxu0 0.0
  %1712 = vmatpush1.msra.mxu0 0.0
  %1713 = vmatprep.subr.mxu0 0.0
  %1714 = vmatpush1.msra.mxu0 %v995
  %1715 = vmatprep.subr.mxu0 0.0
  %1716 = vmatpush1.msra.mxu0 %v990
  %1717 = vmatprep.subr.mxu0 0.0
  %1718 = vmatpush2.msra.mxu0 0.0
  %1719 = vmatprep.subr.mxu0 0.0
  %1720 = vmatpush2.msra.mxu0 0.0
  %1721 = vmatprep.subr.mxu0 0.0
  %1722 = vmatpush2.msra.mxu0 0.0
  %1723 = vmatprep.subr.mxu0 0.0
  %1724 = vmatpush2.msra.mxu0 0.0
  %1725 = vmatprep.subr.mxu0 0.0
  %1726 = vmatpush2.msra.mxu0 0.0
  %1727 = vmatprep.subr.mxu0 0.0
  %1728 = vmatpush2.msra.mxu0 0.0
  %1729 = vmatprep.subr.mxu0 0.0
  %1730 = vmatpush2.msra.mxu0 0.0
  %1731 = vmatprep.subr.mxu0 0.0
  %1732 = vmatpush2.msra.mxu0 0.0
  %1733 = vmatprep.subr.mxu0 0.0
  %1734 = vmatpush2.msra.mxu0 0.0
  %1735 = vmatprep.subr.mxu0 0.0
  %1736 = vmatpush2.msra.mxu0 0.0
  %1737 = vmatprep.subr.mxu0 0.0
  %1738 = vmatpush2.msra.mxu0 0.0
  %1739 = vmatprep.subr.mxu0 0.0
  %1740 = vmatpush2.msra.mxu0 0.0
  %1741 = vmatprep.subr.mxu0 0.0
  %1742 = vmatpush2.msra.mxu0 0.0
  %1743 = vmatprep.subr.mxu0 0.0
  %1744 = vmatpush2.msra.mxu0 0.0
  %1745 = vmatprep.subr.mxu0 0.0
  %1746 = vmatpush2.msra.mxu0 0.0
  %1747 = vmatprep.subr.mxu0 0.0
  %1748 = vmatpush2.msra.mxu0 0.0
  %1749 = vmatprep.mubr.f32.mxu0 0.0
  %1750 = vmatmul.mubr.f32.gmra.mxu0 %v1680
  %v1751 = vpop.f32.mrf.mxu0
  %v1752 = vadd.f32 0.0, %v1751
  %v1753 = vpop.f32.mrf.mxu0
  %1754 = vmatprep.mubr.f32.mxu0 0.0
  %1755 = vmatmul.mubr.f32.gmra.mxu0 %v1683
  %v1756 = vpop.f32.mrf.mxu0
  %v1757 = vadd.f32 0.0, %v1756
  %v1758 = vpop.f32.mrf.mxu0
  %1759 = vdwg.mxu0
  %v1761 = vsel %vm998, %v1590, 0
  %v1764 = vsel %vm998, %v1595, 0
  %1766 = vmatprep.subr.mxu0 0.0
  %1767 = vmatpush1.msra.mxu0 0.0
  %1768 = vmatprep.subr.mxu0 0.0
  %1769 = vmatpush1.msra.mxu0 0.0
  %1770 = vmatprep.subr.mxu0 0.0
  %1771 = vmatpush1.msra.mxu0 0.0
  %1772 = vmatprep.subr.mxu0 0.0
  %1773 = vmatpush1.msra.mxu0 0.0
  %1774 = vmatprep.subr.mxu0 0.0
  %1775 = vmatpush1.msra.mxu0 0.0
  %1776 = vmatprep.subr.mxu0 0.0
  %1777 = vmatpush1.msra.mxu0 0.0
  %1778 = vmatprep.subr.mxu0 0.0
  %1779 = vmatpush1.msra.mxu0 0.0
  %1780 = vmatprep.subr.mxu0 0.0
  %1781 = vmatpush1.msra.mxu0 0.0
  %1782 = vmatprep.subr.mxu0 0.0
  %1783 = vmatpush1.msra.mxu0 0.0
  %1784 = vmatprep.subr.mxu0 0.0
  %1785 = vmatpush1.msra.mxu0 0.0
  %1786 = vmatprep.subr.mxu0 0.0
  %1787 = vmatpush1.msra.mxu0 0.0
  %1788 = vmatprep.subr.mxu0 0.0
  %1789 = vmatpush1.msra.mxu0 0.0
  %1790 = vmatprep.subr.mxu0 0.0
  %1791 = vmatpush1.msra.mxu0 0.0
  %1792 = vmatprep.subr.mxu0 0.0
  %1793 = vmatpush1.msra.mxu0 0.0
  %1794 = vmatprep.subr.mxu0 0.0
  %1795 = vmatpush1.msra.mxu0 0.0
  %1796 = vmatprep.subr.mxu0 0.0
  %1797 = vmatpush1.msra.mxu0 %v88
  %1798 = vmatprep.subr.mxu0 0.0
  %1799 = vmatpush2.msra.mxu0 0.0
  %1800 = vmatprep.subr.mxu0 0.0
  %1801 = vmatpush2.msra.mxu0 0.0
  %1802 = vmatprep.subr.mxu0 0.0
  %1803 = vmatpush2.msra.mxu0 0.0
  %1804 = vmatprep.subr.mxu0 0.0
  %1805 = vmatpush2.msra.mxu0 0.0
  %1806 = vmatprep.subr.mxu0 0.0
  %1807 = vmatpush2.msra.mxu0 0.0
  %1808 = vmatprep.subr.mxu0 0.0
  %1809 = vmatpush2.msra.mxu0 0.0
  %1810 = vmatprep.subr.mxu0 0.0
  %1811 = vmatpush2.msra.mxu0 0.0
  %1812 = vmatprep.subr.mxu0 0.0
  %1813 = vmatpush2.msra.mxu0 0.0
  %1814 = vmatprep.subr.mxu0 0.0
  %1815 = vmatpush2.msra.mxu0 0.0
  %1816 = vmatprep.subr.mxu0 0.0
  %1817 = vmatpush2.msra.mxu0 0.0
  %1818 = vmatprep.subr.mxu0 0.0
  %1819 = vmatpush2.msra.mxu0 0.0
  %1820 = vmatprep.subr.mxu0 0.0
  %1821 = vmatpush2.msra.mxu0 0.0
  %1822 = vmatprep.subr.mxu0 0.0
  %1823 = vmatpush2.msra.mxu0 0.0
  %1824 = vmatprep.subr.mxu0 0.0
  %1825 = vmatpush2.msra.mxu0 0.0
  %1826 = vmatprep.subr.mxu0 0.0
  %1827 = vmatpush2.msra.mxu0 0.0
  %1828 = vmatprep.subr.mxu0 0.0
  %1829 = vmatpush2.msra.mxu0 0.0
  %1830 = vmatprep.mubr.f32.mxu0 0.0
  %1831 = vmatmul.mubr.f32.gmra.mxu0 %v1761
  %v1832 = vpop.f32.mrf.mxu0
  %v1833 = vadd.f32 0.0, %v1832
  %v1834 = vpop.f32.mrf.mxu0
  %1835 = vmatprep.mubr.f32.mxu0 0.0
  %1836 = vmatmul.mubr.f32.gmra.mxu0 %v1764
  %v1837 = vpop.f32.mrf.mxu0
  %v1838 = vadd.f32 0.0, %v1837
  %v1839 = vpop.f32.mrf.mxu0
  %1840 = vdwg.mxu0
  %v1842 = vsel %vm998, %v1509, 0
  %v1845 = vsel %vm998, %v1514, 0
  %1847 = vmatprep.subr.mxu0 0.0
  %1848 = vmatpush1.msra.mxu0 0.0
  %1849 = vmatprep.subr.mxu0 0.0
  %1850 = vmatpush1.msra.mxu0 0.0
  %1851 = vmatprep.subr.mxu0 0.0
  %1852 = vmatpush1.msra.mxu0 0.0
  %1853 = vmatprep.subr.mxu0 0.0
  %1854 = vmatpush1.msra.mxu0 0.0
  %1855 = vmatprep.subr.mxu0 0.0
  %1856 = vmatpush1.msra.mxu0 0.0
  %1857 = vmatprep.subr.mxu0 0.0
  %1858 = vmatpush1.msra.mxu0 0.0
  %1859 = vmatprep.subr.mxu0 0.0
  %1860 = vmatpush1.msra.mxu0 0.0
  %1861 = vmatprep.subr.mxu0 0.0
  %1862 = vmatpush1.msra.mxu0 0.0
  %1863 = vmatprep.subr.mxu0 0.0
  %1864 = vmatpush1.msra.mxu0 0.0
  %1865 = vmatprep.subr.mxu0 0.0
  %1866 = vmatpush1.msra.mxu0 0.0
  %1867 = vmatprep.subr.mxu0 0.0
  %1868 = vmatpush1.msra.mxu0 0.0
  %1869 = vmatprep.subr.mxu0 0.0
  %1870 = vmatpush1.msra.mxu0 0.0
  %1871 = vmatprep.subr.mxu0 0.0
  %1872 = vmatpush1.msra.mxu0 0.0
  %1873 = vmatprep.subr.mxu0 0.0
  %1874 = vmatpush1.msra.mxu0 0.0
  %1875 = vmatprep.subr.mxu0 0.0
  %1876 = vmatpush1.msra.mxu0 0.0
  %1877 = vmatprep.subr.mxu0 0.0
  %1878 = vmatpush1.msra.mxu0 %v87
  %1879 = vmatprep.subr.mxu0 0.0
  %1880 = vmatpush2.msra.mxu0 0.0
  %1881 = vmatprep.subr.mxu0 0.0
  %1882 = vmatpush2.msra.mxu0 0.0
  %1883 = vmatprep.subr.mxu0 0.0
  %1884 = vmatpush2.msra.mxu0 0.0
  %1885 = vmatprep.subr.mxu0 0.0
  %1886 = vmatpush2.msra.mxu0 0.0
  %1887 = vmatprep.subr.mxu0 0.0
  %1888 = vmatpush2.msra.mxu0 0.0
  %1889 = vmatprep.subr.mxu0 0.0
  %1890 = vmatpush2.msra.mxu0 0.0
  %1891 = vmatprep.subr.mxu0 0.0
  %1892 = vmatpush2.msra.mxu0 0.0
  %1893 = vmatprep.subr.mxu0 0.0
  %1894 = vmatpush2.msra.mxu0 0.0
  %1895 = vmatprep.subr.mxu0 0.0
  %1896 = vmatpush2.msra.mxu0 0.0
  %1897 = vmatprep.subr.mxu0 0.0
  %1898 = vmatpush2.msra.mxu0 0.0
  %1899 = vmatprep.subr.mxu0 0.0
  %1900 = vmatpush2.msra.mxu0 0.0
  %1901 = vmatprep.subr.mxu0 0.0
  %1902 = vmatpush2.msra.mxu0 0.0
  %1903 = vmatprep.subr.mxu0 0.0
  %1904 = vmatpush2.msra.mxu0 0.0
  %1905 = vmatprep.subr.mxu0 0.0
  %1906 = vmatpush2.msra.mxu0 0.0
  %1907 = vmatprep.subr.mxu0 0.0
  %1908 = vmatpush2.msra.mxu0 0.0
  %1909 = vmatprep.subr.mxu0 0.0
  %1910 = vmatpush2.msra.mxu0 0.0
  %1911 = vmatprep.mubr.f32.mxu0 0.0
  %1912 = vmatmul.mubr.f32.gmra.mxu0 %v1842
  %v1913 = vpop.f32.mrf.mxu0
  %v1914 = vadd.f32 %v1833, %v1913
  %v1915 = vpop.f32.mrf.mxu0
  %1916 = vmatprep.mubr.f32.mxu0 0.0
  %1917 = vmatmul.mubr.f32.gmra.mxu0 %v1845
  %v1918 = vpop.f32.mrf.mxu0
  %v1919 = vadd.f32 %v1838, %v1918
  %v1920 = vpop.f32.mrf.mxu0
  %1921 = vdwg.mxu0
  %v1923 = vsel %vm998, %v1671, 0
  %v1926 = vsel %vm998, %v1676, 0
  %1928 = vmatprep.subr.mxu0 0.0
  %1929 = vmatpush1.msra.mxu0 0.0
  %1930 = vmatprep.subr.mxu0 0.0
  %1931 = vmatpush1.msra.mxu0 0.0
  %1932 = vmatprep.subr.mxu0 0.0
  %1933 = vmatpush1.msra.mxu0 0.0
  %1934 = vmatprep.subr.mxu0 0.0
  %1935 = vmatpush1.msra.mxu0 0.0
  %1936 = vmatprep.subr.mxu0 0.0
  %1937 = vmatpush1.msra.mxu0 0.0
  %1938 = vmatprep.subr.mxu0 0.0
  %1939 = vmatpush1.msra.mxu0 0.0
  %1940 = vmatprep.subr.mxu0 0.0
  %1941 = vmatpush1.msra.mxu0 0.0
  %1942 = vmatprep.subr.mxu0 0.0
  %1943 = vmatpush1.msra.mxu0 0.0
  %1944 = vmatprep.subr.mxu0 0.0
  %1945 = vmatpush1.msra.mxu0 0.0
  %1946 = vmatprep.subr.mxu0 0.0
  %1947 = vmatpush1.msra.mxu0 0.0
  %1948 = vmatprep.subr.mxu0 0.0
  %1949 = vmatpush1.msra.mxu0 0.0
  %1950 = vmatprep.subr.mxu0 0.0
  %1951 = vmatpush1.msra.mxu0 0.0
  %1952 = vmatprep.subr.mxu0 0.0
  %1953 = vmatpush1.msra.mxu0 0.0
  %1954 = vmatprep.subr.mxu0 0.0
  %1955 = vmatpush1.msra.mxu0 0.0
  %1956 = vmatprep.subr.mxu0 0.0
  %1957 = vmatpush1.msra.mxu0 0.0
  %1958 = vmatprep.subr.mxu0 0.0
  %1959 = vmatpush1.msra.mxu0 %v89
  %1960 = vmatprep.subr.mxu0 0.0
  %1961 = vmatpush2.msra.mxu0 0.0
  %1962 = vmatprep.subr.mxu0 0.0
  %1963 = vmatpush2.msra.mxu0 0.0
  %1964 = vmatprep.subr.mxu0 0.0
  %1965 = vmatpush2.msra.mxu0 0.0
  %1966 = vmatprep.subr.mxu0 0.0
  %1967 = vmatpush2.msra.mxu0 0.0
  %1968 = vmatprep.subr.mxu0 0.0
  %1969 = vmatpush2.msra.mxu0 0.0
  %1970 = vmatprep.subr.mxu0 0.0
  %1971 = vmatpush2.msra.mxu0 0.0
  %1972 = vmatprep.subr.mxu0 0.0
  %1973 = vmatpush2.msra.mxu0 0.0
  %1974 = vmatprep.subr.mxu0 0.0
  %1975 = vmatpush2.msra.mxu0 0.0
  %1976 = vmatprep.subr.mxu0 0.0
  %1977 = vmatpush2.msra.mxu0 0.0
  %1978 = vmatprep.subr.mxu0 0.0
  %1979 = vmatpush2.msra.mxu0 0.0
  %1980 = vmatprep.subr.mxu0 0.0
  %1981 = vmatpush2.msra.mxu0 0.0
  %1982 = vmatprep.subr.mxu0 0.0
  %1983 = vmatpush2.msra.mxu0 0.0
  %1984 = vmatprep.subr.mxu0 0.0
  %1985 = vmatpush2.msra.mxu0 0.0
  %1986 = vmatprep.subr.mxu0 0.0
  %1987 = vmatpush2.msra.mxu0 0.0
  %1988 = vmatprep.subr.mxu0 0.0
  %1989 = vmatpush2.msra.mxu0 0.0
  %1990 = vmatprep.subr.mxu0 0.0
  %1991 = vmatpush2.msra.mxu0 0.0
  %1992 = vmatprep.mubr.f32.mxu0 0.0
  %1993 = vmatmul.mubr.f32.gmra.mxu0 %v1923
  %v1994 = vpop.f32.mrf.mxu0
  %v1995 = vadd.f32 0.0, %v1994
  %v1996 = vpop.f32.mrf.mxu0
  %1997 = vmatprep.mubr.f32.mxu0 0.0
  %1998 = vmatmul.mubr.f32.gmra.mxu0 %v1926
  %v1999 = vpop.f32.mrf.mxu0
  %v2000 = vadd.f32 0.0, %v1999
  %v2001 = vpop.f32.mrf.mxu0
  %2002 = vdwg.mxu0
  %v2003 = vadd.f32 %v1914, %v1995
  %v2004 = vadd.f32 %v1919, %v2000
  %v2006 = vsel %vm998, %v1752, 0
  %v2009 = vsel %vm998, %v1757, 0
  %2011 = vmatprep.subr.mxu0 0.0
  %2012 = vmatpush1.msra.mxu0 0.0
  %2013 = vmatprep.subr.mxu0 0.0
  %2014 = vmatpush1.msra.mxu0 0.0
  %2015 = vmatprep.subr.mxu0 0.0
  %2016 = vmatpush1.msra.mxu0 0.0
  %2017 = vmatprep.subr.mxu0 0.0
  %2018 = vmatpush1.msra.mxu0 0.0
  %2019 = vmatprep.subr.mxu0 0.0
  %2020 = vmatpush1.msra.mxu0 0.0
  %2021 = vmatprep.subr.mxu0 0.0
  %2022 = vmatpush1.msra.mxu0 0.0
  %2023 = vmatprep.subr.mxu0 0.0
  %2024 = vmatpush1.msra.mxu0 0.0
  %2025 = vmatprep.subr.mxu0 0.0
  %2026 = vmatpush1.msra.mxu0 0.0
  %2027 = vmatprep.subr.mxu0 0.0
  %2028 = vmatpush1.msra.mxu0 0.0
  %2029 = vmatprep.subr.mxu0 0.0
  %2030 = vmatpush1.msra.mxu0 0.0
  %2031 = vmatprep.subr.mxu0 0.0
  %2032 = vmatpush1.msra.mxu0 0.0
  %2033 = vmatprep.subr.mxu0 0.0
  %2034 = vmatpush1.msra.mxu0 0.0
  %2035 = vmatprep.subr.mxu0 0.0
  %2036 = vmatpush1.msra.mxu0 0.0
  %2037 = vmatprep.subr.mxu0 0.0
  %2038 = vmatpush1.msra.mxu0 0.0
  %2039 = vmatprep.subr.mxu0 0.0
  %2040 = vmatpush1.msra.mxu0 0.0
  %2041 = vmatprep.subr.mxu0 0.0
  %2042 = vmatpush1.msra.mxu0 %v90
  %2043 = vmatprep.subr.mxu0 0.0
  %2044 = vmatpush2.msra.mxu0 0.0
  %2045 = vmatprep.subr.mxu0 0.0
  %2046 = vmatpush2.msra.mxu0 0.0
  %2047 = vmatprep.subr.mxu0 0.0
  %2048 = vmatpush2.msra.mxu0 0.0
  %2049 = vmatprep.subr.mxu0 0.0
  %2050 = vmatpush2.msra.mxu0 0.0
  %2051 = vmatprep.subr.mxu0 0.0
  %2052 = vmatpush2.msra.mxu0 0.0
  %2053 = vmatprep.subr.mxu0 0.0
  %2054 = vmatpush2.msra.mxu0 0.0
  %2055 = vmatprep.subr.mxu0 0.0
  %2056 = vmatpush2.msra.mxu0 0.0
  %2057 = vmatprep.subr.mxu0 0.0
  %2058 = vmatpush2.msra.mxu0 0.0
  %2059 = vmatprep.subr.mxu0 0.0
  %2060 = vmatpush2.msra.mxu0 0.0
  %2061 = vmatprep.subr.mxu0 0.0
  %2062 = vmatpush2.msra.mxu0 0.0
  %2063 = vmatprep.subr.mxu0 0.0
  %2064 = vmatpush2.msra.mxu0 0.0
  %2065 = vmatprep.subr.mxu0 0.0
  %2066 = vmatpush2.msra.mxu0 0.0
  %2067 = vmatprep.subr.mxu0 0.0
  %2068 = vmatpush2.msra.mxu0 0.0
  %2069 = vmatprep.subr.mxu0 0.0
  %2070 = vmatpush2.msra.mxu0 0.0
  %2071 = vmatprep.subr.mxu0 0.0
  %2072 = vmatpush2.msra.mxu0 0.0
  %2073 = vmatprep.subr.mxu0 0.0
  %2074 = vmatpush2.msra.mxu0 0.0
  %2075 = vmatprep.mubr.f32.mxu0 0.0
  %2076 = vmatmul.mubr.f32.gmra.mxu0 %v2006
  %v2077 = vpop.f32.mrf.mxu0
  %v2078 = vadd.f32 0.0, %v2077
  %v2079 = vpop.f32.mrf.mxu0
  %2080 = vmatprep.mubr.f32.mxu0 0.0
  %2081 = vmatmul.mubr.f32.gmra.mxu0 %v2009
  %v2082 = vpop.f32.mrf.mxu0
  %v2083 = vadd.f32 0.0, %v2082
  %v2084 = vpop.f32.mrf.mxu0
  %2085 = vdwg.mxu0
  %v2086 = vadd.f32 %v2003, %v2078
  %v2087 = vadd.f32 %v2004, %v2083
  %s2088 = scalar_lea.vmem %s3, 128
  %v2089 = vld [vmem:[%s2088] sm:$0xff]
  %v2090 = vld [vmem:[%s2088 + $0x8] sm:$0xff]
  %v2091 = vld [vmem:[%s2088 + $0x10] sm:$0xff]
  %v2092 = vld [vmem:[%s2088 + $0x18] sm:$0xff]
  %v2093 = vld [vmem:[%s2088 + $0x20] sm:$0xff]
  %v2094 = vld [vmem:[%s2088 + $0x28] sm:$0xff]
  %v2095 = vld [vmem:[%s2088 + $0x30] sm:$0xff]
  %v2096 = vld [vmem:[%s2088 + $0x38] sm:$0xff]
  %v2097 = vld [vmem:[%s2088 + $0x40] sm:$0xff]
  %v2098 = vld [vmem:[%s2088 + $0x48] sm:$0xff]
  %v2099 = vld [vmem:[%s2088 + $0x50] sm:$0xff]
  %v2100 = vld [vmem:[%s2088 + $0x58] sm:$0xff]
  %v2101 = vld [vmem:[%s2088 + $0x60] sm:$0xff]
  %v2102 = vld [vmem:[%s2088 + $0x68] sm:$0xff]
  %v2103 = vld [vmem:[%s2088 + $0x70] sm:$0xff]
  %v2104 = vld [vmem:[%s2088 + $0x78] sm:$0xff]
  %s2105 = scalar_lea.vmem %s4, 128
  %v2106 = vld [vmem:[%s2105] sm:$0xff]
  %v2107 = vld [vmem:[%s2105 + $0x8] sm:$0xff]
  %v2108 = vld [vmem:[%s2105 + $0x10] sm:$0xff]
  %v2109 = vld [vmem:[%s2105 + $0x18] sm:$0xff]
  %v2110 = vld [vmem:[%s2105 + $0x20] sm:$0xff]
  %v2111 = vld [vmem:[%s2105 + $0x28] sm:$0xff]
  %v2112 = vld [vmem:[%s2105 + $0x30] sm:$0xff]
  %v2113 = vld [vmem:[%s2105 + $0x38] sm:$0xff]
  %v2114 = vld [vmem:[%s2105 + $0x40] sm:$0xff]
  %v2115 = vld [vmem:[%s2105 + $0x48] sm:$0xff]
  %v2116 = vld [vmem:[%s2105 + $0x50] sm:$0xff]
  %v2117 = vld [vmem:[%s2105 + $0x58] sm:$0xff]
  %v2118 = vld [vmem:[%s2105 + $0x60] sm:$0xff]
  %v2119 = vld [vmem:[%s2105 + $0x68] sm:$0xff]
  %v2120 = vld [vmem:[%s2105 + $0x70] sm:$0xff]
  %v2121 = vld [vmem:[%s2105 + $0x78] sm:$0xff]
  %s2122 = scalar_lea.vmem %s5, 128
  %v2123 = vld [vmem:[%s2122] sm:$0xff]
  %v2124 = vld [vmem:[%s2122 + $0x8] sm:$0xff]
  %v2125 = vld [vmem:[%s2122 + $0x10] sm:$0xff]
  %v2126 = vld [vmem:[%s2122 + $0x18] sm:$0xff]
  %v2127 = vld [vmem:[%s2122 + $0x20] sm:$0xff]
  %v2128 = vld [vmem:[%s2122 + $0x28] sm:$0xff]
  %v2129 = vld [vmem:[%s2122 + $0x30] sm:$0xff]
  %v2130 = vld [vmem:[%s2122 + $0x38] sm:$0xff]
  %v2131 = vld [vmem:[%s2122 + $0x40] sm:$0xff]
  %v2132 = vld [vmem:[%s2122 + $0x48] sm:$0xff]
  %v2133 = vld [vmem:[%s2122 + $0x50] sm:$0xff]
  %v2134 = vld [vmem:[%s2122 + $0x58] sm:$0xff]
  %v2135 = vld [vmem:[%s2122 + $0x60] sm:$0xff]
  %v2136 = vld [vmem:[%s2122 + $0x68] sm:$0xff]
  %v2137 = vld [vmem:[%s2122 + $0x70] sm:$0xff]
  %v2138 = vld [vmem:[%s2122 + $0x78] sm:$0xff]
  %s2139 = scalar_lea.vmem %s6, 32
  %v2140 = vld [vmem:[%s2139] sm:$0xff]
  %v2141 = vld [vmem:[%s2139 + $0x8] sm:$0xff]
  %v2142 = vld [vmem:[%s2139 + $0x10] sm:$0xff]
  %v2143 = vld [vmem:[%s2139 + $0x18] sm:$0xff]
  %v2145 = vsel %vm91, %v2086, 0
  %v2148 = vsel %vm91, %v2087, 0
  %2150 = vmatprep.subr.mxu0 0.0
  %2151 = vmatpush1.msra.mxu0 0.0
  %2152 = vmatprep.subr.mxu0 0.0
  %2153 = vmatpush1.msra.mxu0 0.0
  %2154 = vmatprep.subr.mxu0 0.0
  %2155 = vmatpush1.msra.mxu0 0.0
  %2156 = vmatprep.subr.mxu0 0.0
  %2157 = vmatpush1.msra.mxu0 0.0
  %2158 = vmatprep.subr.mxu0 0.0
  %2159 = vmatpush1.msra.mxu0 0.0
  %2160 = vmatprep.subr.mxu0 0.0
  %2161 = vmatpush1.msra.mxu0 0.0
  %2162 = vmatprep.subr.mxu0 0.0
  %2163 = vmatpush1.msra.mxu0 0.0
  %2164 = vmatprep.subr.mxu0 0.0
  %2165 = vmatpush1.msra.mxu0 0.0
  %2166 = vmatprep.subr.mxu0 0.0
  %2167 = vmatpush1.msra.mxu0 0.0
  %2168 = vmatprep.subr.mxu0 0.0
  %2169 = vmatpush1.msra.mxu0 0.0
  %2170 = vmatprep.subr.mxu0 0.0
  %2171 = vmatpush1.msra.mxu0 0.0
  %2172 = vmatprep.subr.mxu0 0.0
  %2173 = vmatpush1.msra.mxu0 0.0
  %2174 = vmatprep.subr.mxu0 0.0
  %2175 = vmatpush1.msra.mxu0 %v2092
  %2176 = vmatprep.subr.mxu0 0.0
  %2177 = vmatpush1.msra.mxu0 %v2091
  %2178 = vmatprep.subr.mxu0 0.0
  %2179 = vmatpush1.msra.mxu0 %v2090
  %2180 = vmatprep.subr.mxu0 0.0
  %2181 = vmatpush1.msra.mxu0 %v2089
  %2182 = vmatprep.subr.mxu0 0.0
  %2183 = vmatpush2.msra.mxu0 0.0
  %2184 = vmatprep.subr.mxu0 0.0
  %2185 = vmatpush2.msra.mxu0 0.0
  %2186 = vmatprep.subr.mxu0 0.0
  %2187 = vmatpush2.msra.mxu0 0.0
  %2188 = vmatprep.subr.mxu0 0.0
  %2189 = vmatpush2.msra.mxu0 0.0
  %2190 = vmatprep.subr.mxu0 0.0
  %2191 = vmatpush2.msra.mxu0 0.0
  %2192 = vmatprep.subr.mxu0 0.0
  %2193 = vmatpush2.msra.mxu0 0.0
  %2194 = vmatprep.subr.mxu0 0.0
  %2195 = vmatpush2.msra.mxu0 0.0
  %2196 = vmatprep.subr.mxu0 0.0
  %2197 = vmatpush2.msra.mxu0 0.0
  %2198 = vmatprep.subr.mxu0 0.0
  %2199 = vmatpush2.msra.mxu0 0.0
  %2200 = vmatprep.subr.mxu0 0.0
  %2201 = vmatpush2.msra.mxu0 0.0
  %2202 = vmatprep.subr.mxu0 0.0
  %2203 = vmatpush2.msra.mxu0 0.0
  %2204 = vmatprep.subr.mxu0 0.0
  %2205 = vmatpush2.msra.mxu0 0.0
  %2206 = vmatprep.subr.mxu0 0.0
  %2207 = vmatpush2.msra.mxu0 0.0
  %2208 = vmatprep.subr.mxu0 0.0
  %2209 = vmatpush2.msra.mxu0 0.0
  %2210 = vmatprep.subr.mxu0 0.0
  %2211 = vmatpush2.msra.mxu0 0.0
  %2212 = vmatprep.subr.mxu0 0.0
  %2213 = vmatpush2.msra.mxu0 0.0
  %2214 = vmatprep.mubr.f32.mxu0 0.0
  %2215 = vmatmul.mubr.f32.gmra.mxu0 %v2145
  %v2216 = vpop.f32.mrf.mxu0
  %v2217 = vadd.f32 0.0, %v2216
  %v2218 = vpop.f32.mrf.mxu0
  %2219 = vmatprep.mubr.f32.mxu0 0.0
  %2220 = vmatmul.mubr.f32.gmra.mxu0 %v2148
  %v2221 = vpop.f32.mrf.mxu0
  %v2222 = vadd.f32 0.0, %v2221
  %v2223 = vpop.f32.mrf.mxu0
  %2224 = vdwg.mxu0
  %2225 = vmatprep.subr.mxu0 0.0
  %2226 = vmatpush1.msra.mxu0 0.0
  %2227 = vmatprep.subr.mxu0 0.0
  %2228 = vmatpush1.msra.mxu0 0.0
  %2229 = vmatprep.subr.mxu0 0.0
  %2230 = vmatpush1.msra.mxu0 0.0
  %2231 = vmatprep.subr.mxu0 0.0
  %2232 = vmatpush1.msra.mxu0 0.0
  %2233 = vmatprep.subr.mxu0 0.0
  %2234 = vmatpush1.msra.mxu0 0.0
  %2235 = vmatprep.subr.mxu0 0.0
  %2236 = vmatpush1.msra.mxu0 0.0
  %2237 = vmatprep.subr.mxu0 0.0
  %2238 = vmatpush1.msra.mxu0 0.0
  %2239 = vmatprep.subr.mxu0 0.0
  %2240 = vmatpush1.msra.mxu0 0.0
  %2241 = vmatprep.subr.mxu0 0.0
  %2242 = vmatpush1.msra.mxu0 0.0
  %2243 = vmatprep.subr.mxu0 0.0
  %2244 = vmatpush1.msra.mxu0 0.0
  %2245 = vmatprep.subr.mxu0 0.0
  %2246 = vmatpush1.msra.mxu0 0.0
  %2247 = vmatprep.subr.mxu0 0.0
  %2248 = vmatpush1.msra.mxu0 0.0
  %2249 = vmatprep.subr.mxu0 0.0
  %2250 = vmatpush1.msra.mxu0 %v2096
  %2251 = vmatprep.subr.mxu0 0.0
  %2252 = vmatpush1.msra.mxu0 %v2095
  %2253 = vmatprep.subr.mxu0 0.0
  %2254 = vmatpush1.msra.mxu0 %v2094
  %2255 = vmatprep.subr.mxu0 0.0
  %2256 = vmatpush1.msra.mxu0 %v2093
  %2257 = vmatprep.subr.mxu0 0.0
  %2258 = vmatpush2.msra.mxu0 0.0
  %2259 = vmatprep.subr.mxu0 0.0
  %2260 = vmatpush2.msra.mxu0 0.0
  %2261 = vmatprep.subr.mxu0 0.0
  %2262 = vmatpush2.msra.mxu0 0.0
  %2263 = vmatprep.subr.mxu0 0.0
  %2264 = vmatpush2.msra.mxu0 0.0
  %2265 = vmatprep.subr.mxu0 0.0
  %2266 = vmatpush2.msra.mxu0 0.0
  %2267 = vmatprep.subr.mxu0 0.0
  %2268 = vmatpush2.msra.mxu0 0.0
  %2269 = vmatprep.subr.mxu0 0.0
  %2270 = vmatpush2.msra.mxu0 0.0
  %2271 = vmatprep.subr.mxu0 0.0
  %2272 = vmatpush2.msra.mxu0 0.0
  %2273 = vmatprep.subr.mxu0 0.0
  %2274 = vmatpush2.msra.mxu0 0.0
  %2275 = vmatprep.subr.mxu0 0.0
  %2276 = vmatpush2.msra.mxu0 0.0
  %2277 = vmatprep.subr.mxu0 0.0
  %2278 = vmatpush2.msra.mxu0 0.0
  %2279 = vmatprep.subr.mxu0 0.0
  %2280 = vmatpush2.msra.mxu0 0.0
  %2281 = vmatprep.subr.mxu0 0.0
  %2282 = vmatpush2.msra.mxu0 0.0
  %2283 = vmatprep.subr.mxu0 0.0
  %2284 = vmatpush2.msra.mxu0 0.0
  %2285 = vmatprep.subr.mxu0 0.0
  %2286 = vmatpush2.msra.mxu0 0.0
  %2287 = vmatprep.subr.mxu0 0.0
  %2288 = vmatpush2.msra.mxu0 0.0
  %2289 = vmatprep.mubr.f32.mxu0 0.0
  %2290 = vmatmul.mubr.f32.gmra.mxu0 %v2145
  %v2291 = vpop.f32.mrf.mxu0
  %v2292 = vadd.f32 0.0, %v2291
  %v2293 = vpop.f32.mrf.mxu0
  %2294 = vmatprep.mubr.f32.mxu0 0.0
  %2295 = vmatmul.mubr.f32.gmra.mxu0 %v2148
  %v2296 = vpop.f32.mrf.mxu0
  %v2297 = vadd.f32 0.0, %v2296
  %v2298 = vpop.f32.mrf.mxu0
  %2299 = vdwg.mxu0
  %2300 = vmatprep.subr.mxu0 0.0
  %2301 = vmatpush1.msra.mxu0 0.0
  %2302 = vmatprep.subr.mxu0 0.0
  %2303 = vmatpush1.msra.mxu0 0.0
  %2304 = vmatprep.subr.mxu0 0.0
  %2305 = vmatpush1.msra.mxu0 0.0
  %2306 = vmatprep.subr.mxu0 0.0
  %2307 = vmatpush1.msra.mxu0 0.0
  %2308 = vmatprep.subr.mxu0 0.0
  %2309 = vmatpush1.msra.mxu0 0.0
  %2310 = vmatprep.subr.mxu0 0.0
  %2311 = vmatpush1.msra.mxu0 0.0
  %2312 = vmatprep.subr.mxu0 0.0
  %2313 = vmatpush1.msra.mxu0 0.0
  %2314 = vmatprep.subr.mxu0 0.0
  %2315 = vmatpush1.msra.mxu0 0.0
  %2316 = vmatprep.subr.mxu0 0.0
  %2317 = vmatpush1.msra.mxu0 0.0
  %2318 = vmatprep.subr.mxu0 0.0
  %2319 = vmatpush1.msra.mxu0 0.0
  %2320 = vmatprep.subr.mxu0 0.0
  %2321 = vmatpush1.msra.mxu0 0.0
  %2322 = vmatprep.subr.mxu0 0.0
  %2323 = vmatpush1.msra.mxu0 0.0
  %2324 = vmatprep.subr.mxu0 0.0
  %2325 = vmatpush1.msra.mxu0 %v2100
  %2326 = vmatprep.subr.mxu0 0.0
  %2327 = vmatpush1.msra.mxu0 %v2099
  %2328 = vmatprep.subr.mxu0 0.0
  %2329 = vmatpush1.msra.mxu0 %v2098
  %2330 = vmatprep.subr.mxu0 0.0
  %2331 = vmatpush1.msra.mxu0 %v2097
  %2332 = vmatprep.subr.mxu0 0.0
  %2333 = vmatpush2.msra.mxu0 0.0
  %2334 = vmatprep.subr.mxu0 0.0
  %2335 = vmatpush2.msra.mxu0 0.0
  %2336 = vmatprep.subr.mxu0 0.0
  %2337 = vmatpush2.msra.mxu0 0.0
  %2338 = vmatprep.subr.mxu0 0.0
  %2339 = vmatpush2.msra.mxu0 0.0
  %2340 = vmatprep.subr.mxu0 0.0
  %2341 = vmatpush2.msra.mxu0 0.0
  %2342 = vmatprep.subr.mxu0 0.0
  %2343 = vmatpush2.msra.mxu0 0.0
  %2344 = vmatprep.subr.mxu0 0.0
  %2345 = vmatpush2.msra.mxu0 0.0
  %2346 = vmatprep.subr.mxu0 0.0
  %2347 = vmatpush2.msra.mxu0 0.0
  %2348 = vmatprep.subr.mxu0 0.0
  %2349 = vmatpush2.msra.mxu0 0.0
  %2350 = vmatprep.subr.mxu0 0.0
  %2351 = vmatpush2.msra.mxu0 0.0
  %2352 = vmatprep.subr.mxu0 0.0
  %2353 = vmatpush2.msra.mxu0 0.0
  %2354 = vmatprep.subr.mxu0 0.0
  %2355 = vmatpush2.msra.mxu0 0.0
  %2356 = vmatprep.subr.mxu0 0.0
  %2357 = vmatpush2.msra.mxu0 0.0
  %2358 = vmatprep.subr.mxu0 0.0
  %2359 = vmatpush2.msra.mxu0 0.0
  %2360 = vmatprep.subr.mxu0 0.0
  %2361 = vmatpush2.msra.mxu0 0.0
  %2362 = vmatprep.subr.mxu0 0.0
  %2363 = vmatpush2.msra.mxu0 0.0
  %2364 = vmatprep.mubr.f32.mxu0 0.0
  %2365 = vmatmul.mubr.f32.gmra.mxu0 %v2145
  %v2366 = vpop.f32.mrf.mxu0
  %v2367 = vadd.f32 0.0, %v2366
  %v2368 = vpop.f32.mrf.mxu0
  %2369 = vmatprep.mubr.f32.mxu0 0.0
  %2370 = vmatmul.mubr.f32.gmra.mxu0 %v2148
  %v2371 = vpop.f32.mrf.mxu0
  %v2372 = vadd.f32 0.0, %v2371
  %v2373 = vpop.f32.mrf.mxu0
  %2374 = vdwg.mxu0
  %2375 = vmatprep.subr.mxu0 0.0
  %2376 = vmatpush1.msra.mxu0 0.0
  %2377 = vmatprep.subr.mxu0 0.0
  %2378 = vmatpush1.msra.mxu0 0.0
  %2379 = vmatprep.subr.mxu0 0.0
  %2380 = vmatpush1.msra.mxu0 0.0
  %2381 = vmatprep.subr.mxu0 0.0
  %2382 = vmatpush1.msra.mxu0 0.0
  %2383 = vmatprep.subr.mxu0 0.0
  %2384 = vmatpush1.msra.mxu0 0.0
  %2385 = vmatprep.subr.mxu0 0.0
  %2386 = vmatpush1.msra.mxu0 0.0
  %2387 = vmatprep.subr.mxu0 0.0
  %2388 = vmatpush1.msra.mxu0 0.0
  %2389 = vmatprep.subr.mxu0 0.0
  %2390 = vmatpush1.msra.mxu0 0.0
  %2391 = vmatprep.subr.mxu0 0.0
  %2392 = vmatpush1.msra.mxu0 0.0
  %2393 = vmatprep.subr.mxu0 0.0
  %2394 = vmatpush1.msra.mxu0 0.0
  %2395 = vmatprep.subr.mxu0 0.0
  %2396 = vmatpush1.msra.mxu0 0.0
  %2397 = vmatprep.subr.mxu0 0.0
  %2398 = vmatpush1.msra.mxu0 0.0
  %2399 = vmatprep.subr.mxu0 0.0
  %2400 = vmatpush1.msra.mxu0 %v2104
  %2401 = vmatprep.subr.mxu0 0.0
  %2402 = vmatpush1.msra.mxu0 %v2103
  %2403 = vmatprep.subr.mxu0 0.0
  %2404 = vmatpush1.msra.mxu0 %v2102
  %2405 = vmatprep.subr.mxu0 0.0
  %2406 = vmatpush1.msra.mxu0 %v2101
  %2407 = vmatprep.subr.mxu0 0.0
  %2408 = vmatpush2.msra.mxu0 0.0
  %2409 = vmatprep.subr.mxu0 0.0
  %2410 = vmatpush2.msra.mxu0 0.0
  %2411 = vmatprep.subr.mxu0 0.0
  %2412 = vmatpush2.msra.mxu0 0.0
  %2413 = vmatprep.subr.mxu0 0.0
  %2414 = vmatpush2.msra.mxu0 0.0
  %2415 = vmatprep.subr.mxu0 0.0
  %2416 = vmatpush2.msra.mxu0 0.0
  %2417 = vmatprep.subr.mxu0 0.0
  %2418 = vmatpush2.msra.mxu0 0.0
  %2419 = vmatprep.subr.mxu0 0.0
  %2420 = vmatpush2.msra.mxu0 0.0
  %2421 = vmatprep.subr.mxu0 0.0
  %2422 = vmatpush2.msra.mxu0 0.0
  %2423 = vmatprep.subr.mxu0 0.0
  %2424 = vmatpush2.msra.mxu0 0.0
  %2425 = vmatprep.subr.mxu0 0.0
  %2426 = vmatpush2.msra.mxu0 0.0
  %2427 = vmatprep.subr.mxu0 0.0
  %2428 = vmatpush2.msra.mxu0 0.0
  %2429 = vmatprep.subr.mxu0 0.0
  %2430 = vmatpush2.msra.mxu0 0.0
  %2431 = vmatprep.subr.mxu0 0.0
  %2432 = vmatpush2.msra.mxu0 0.0
  %2433 = vmatprep.subr.mxu0 0.0
  %2434 = vmatpush2.msra.mxu0 0.0
  %2435 = vmatprep.subr.mxu0 0.0
  %2436 = vmatpush2.msra.mxu0 0.0
  %2437 = vmatprep.subr.mxu0 0.0
  %2438 = vmatpush2.msra.mxu0 0.0
  %2439 = vmatprep.mubr.f32.mxu0 0.0
  %2440 = vmatmul.mubr.f32.gmra.mxu0 %v2145
  %v2441 = vpop.f32.mrf.mxu0
  %v2442 = vadd.f32 0.0, %v2441
  %v2443 = vpop.f32.mrf.mxu0
  %2444 = vmatprep.mubr.f32.mxu0 0.0
  %2445 = vmatmul.mubr.f32.gmra.mxu0 %v2148
  %v2446 = vpop.f32.mrf.mxu0
  %v2447 = vadd.f32 0.0, %v2446
  %v2448 = vpop.f32.mrf.mxu0
  %2449 = vdwg.mxu0
  %2450 = vmatprep.subr.mxu0 0.0
  %2451 = vmatpush1.msra.mxu0 0.0
  %2452 = vmatprep.subr.mxu0 0.0
  %2453 = vmatpush1.msra.mxu0 0.0
  %2454 = vmatprep.subr.mxu0 0.0
  %2455 = vmatpush1.msra.mxu0 0.0
  %2456 = vmatprep.subr.mxu0 0.0
  %2457 = vmatpush1.msra.mxu0 0.0
  %2458 = vmatprep.subr.mxu0 0.0
  %2459 = vmatpush1.msra.mxu0 0.0
  %2460 = vmatprep.subr.mxu0 0.0
  %2461 = vmatpush1.msra.mxu0 0.0
  %2462 = vmatprep.subr.mxu0 0.0
  %2463 = vmatpush1.msra.mxu0 0.0
  %2464 = vmatprep.subr.mxu0 0.0
  %2465 = vmatpush1.msra.mxu0 0.0
  %2466 = vmatprep.subr.mxu0 0.0
  %2467 = vmatpush1.msra.mxu0 0.0
  %2468 = vmatprep.subr.mxu0 0.0
  %2469 = vmatpush1.msra.mxu0 0.0
  %2470 = vmatprep.subr.mxu0 0.0
  %2471 = vmatpush1.msra.mxu0 0.0
  %2472 = vmatprep.subr.mxu0 0.0
  %2473 = vmatpush1.msra.mxu0 0.0
  %2474 = vmatprep.subr.mxu0 0.0
  %2475 = vmatpush1.msra.mxu0 %v2109
  %2476 = vmatprep.subr.mxu0 0.0
  %2477 = vmatpush1.msra.mxu0 %v2108
  %2478 = vmatprep.subr.mxu0 0.0
  %2479 = vmatpush1.msra.mxu0 %v2107
  %2480 = vmatprep.subr.mxu0 0.0
  %2481 = vmatpush1.msra.mxu0 %v2106
  %2482 = vmatprep.subr.mxu0 0.0
  %2483 = vmatpush2.msra.mxu0 0.0
  %2484 = vmatprep.subr.mxu0 0.0
  %2485 = vmatpush2.msra.mxu0 0.0
  %2486 = vmatprep.subr.mxu0 0.0
  %2487 = vmatpush2.msra.mxu0 0.0
  %2488 = vmatprep.subr.mxu0 0.0
  %2489 = vmatpush2.msra.mxu0 0.0
  %2490 = vmatprep.subr.mxu0 0.0
  %2491 = vmatpush2.msra.mxu0 0.0
  %2492 = vmatprep.subr.mxu0 0.0
  %2493 = vmatpush2.msra.mxu0 0.0
  %2494 = vmatprep.subr.mxu0 0.0
  %2495 = vmatpush2.msra.mxu0 0.0
  %2496 = vmatprep.subr.mxu0 0.0
  %2497 = vmatpush2.msra.mxu0 0.0
  %2498 = vmatprep.subr.mxu0 0.0
  %2499 = vmatpush2.msra.mxu0 0.0
  %2500 = vmatprep.subr.mxu0 0.0
  %2501 = vmatpush2.msra.mxu0 0.0
  %2502 = vmatprep.subr.mxu0 0.0
  %2503 = vmatpush2.msra.mxu0 0.0
  %2504 = vmatprep.subr.mxu0 0.0
  %2505 = vmatpush2.msra.mxu0 0.0
  %2506 = vmatprep.subr.mxu0 0.0
  %2507 = vmatpush2.msra.mxu0 0.0
  %2508 = vmatprep.subr.mxu0 0.0
  %2509 = vmatpush2.msra.mxu0 0.0
  %2510 = vmatprep.subr.mxu0 0.0
  %2511 = vmatpush2.msra.mxu0 0.0
  %2512 = vmatprep.subr.mxu0 0.0
  %2513 = vmatpush2.msra.mxu0 0.0
  %2514 = vmatprep.mubr.f32.mxu0 0.0
  %2515 = vmatmul.mubr.f32.gmra.mxu0 %v2145
  %v2516 = vpop.f32.mrf.mxu0
  %v2517 = vadd.f32 0.0, %v2516
  %v2518 = vpop.f32.mrf.mxu0
  %2519 = vmatprep.mubr.f32.mxu0 0.0
  %2520 = vmatmul.mubr.f32.gmra.mxu0 %v2148
  %v2521 = vpop.f32.mrf.mxu0
  %v2522 = vadd.f32 0.0, %v2521
  %v2523 = vpop.f32.mrf.mxu0
  %2524 = vdwg.mxu0
  %2525 = vmatprep.subr.mxu0 0.0
  %2526 = vmatpush1.msra.mxu0 0.0
  %2527 = vmatprep.subr.mxu0 0.0
  %2528 = vmatpush1.msra.mxu0 0.0
  %2529 = vmatprep.subr.mxu0 0.0
  %2530 = vmatpush1.msra.mxu0 0.0
  %2531 = vmatprep.subr.mxu0 0.0
  %2532 = vmatpush1.msra.mxu0 0.0
  %2533 = vmatprep.subr.mxu0 0.0
  %2534 = vmatpush1.msra.mxu0 0.0
  %2535 = vmatprep.subr.mxu0 0.0
  %2536 = vmatpush1.msra.mxu0 0.0
  %2537 = vmatprep.subr.mxu0 0.0
  %2538 = vmatpush1.msra.mxu0 0.0
  %2539 = vmatprep.subr.mxu0 0.0
  %2540 = vmatpush1.msra.mxu0 0.0
  %2541 = vmatprep.subr.mxu0 0.0
  %2542 = vmatpush1.msra.mxu0 0.0
  %2543 = vmatprep.subr.mxu0 0.0
  %2544 = vmatpush1.msra.mxu0 0.0
  %2545 = vmatprep.subr.mxu0 0.0
  %2546 = vmatpush1.msra.mxu0 0.0
  %2547 = vmatprep.subr.mxu0 0.0
  %2548 = vmatpush1.msra.mxu0 0.0
  %2549 = vmatprep.subr.mxu0 0.0
  %2550 = vmatpush1.msra.mxu0 %v2113
  %2551 = vmatprep.subr.mxu0 0.0
  %2552 = vmatpush1.msra.mxu0 %v2112
  %2553 = vmatprep.subr.mxu0 0.0
  %2554 = vmatpush1.msra.mxu0 %v2111
  %2555 = vmatprep.subr.mxu0 0.0
  %2556 = vmatpush1.msra.mxu0 %v2110
  %2557 = vmatprep.subr.mxu0 0.0
  %2558 = vmatpush2.msra.mxu0 0.0
  %2559 = vmatprep.subr.mxu0 0.0
  %2560 = vmatpush2.msra.mxu0 0.0
  %2561 = vmatprep.subr.mxu0 0.0
  %2562 = vmatpush2.msra.mxu0 0.0
  %2563 = vmatprep.subr.mxu0 0.0
  %2564 = vmatpush2.msra.mxu0 0.0
  %2565 = vmatprep.subr.mxu0 0.0
  %2566 = vmatpush2.msra.mxu0 0.0
  %2567 = vmatprep.subr.mxu0 0.0
  %2568 = vmatpush2.msra.mxu0 0.0
  %2569 = vmatprep.subr.mxu0 0.0
  %2570 = vmatpush2.msra.mxu0 0.0
  %2571 = vmatprep.subr.mxu0 0.0
  %2572 = vmatpush2.msra.mxu0 0.0
  %2573 = vmatprep.subr.mxu0 0.0
  %2574 = vmatpush2.msra.mxu0 0.0
  %2575 = vmatprep.subr.mxu0 0.0
  %2576 = vmatpush2.msra.mxu0 0.0
  %2577 = vmatprep.subr.mxu0 0.0
  %2578 = vmatpush2.msra.mxu0 0.0
  %2579 = vmatprep.subr.mxu0 0.0
  %2580 = vmatpush2.msra.mxu0 0.0
  %2581 = vmatprep.subr.mxu0 0.0
  %2582 = vmatpush2.msra.mxu0 0.0
  %2583 = vmatprep.subr.mxu0 0.0
  %2584 = vmatpush2.msra.mxu0 0.0
  %2585 = vmatprep.subr.mxu0 0.0
  %2586 = vmatpush2.msra.mxu0 0.0
  %2587 = vmatprep.subr.mxu0 0.0
  %2588 = vmatpush2.msra.mxu0 0.0
  %2589 = vmatprep.mubr.f32.mxu0 0.0
  %2590 = vmatmul.mubr.f32.gmra.mxu0 %v2145
  %v2591 = vpop.f32.mrf.mxu0
  %v2592 = vadd.f32 0.0, %v2591
  %v2593 = vpop.f32.mrf.mxu0
  %2594 = vmatprep.mubr.f32.mxu0 0.0
  %2595 = vmatmul.mubr.f32.gmra.mxu0 %v2148
  %v2596 = vpop.f32.mrf.mxu0
  %v2597 = vadd.f32 0.0, %v2596
  %v2598 = vpop.f32.mrf.mxu0
  %2599 = vdwg.mxu0
  %2600 = vmatprep.subr.mxu0 0.0
  %2601 = vmatpush1.msra.mxu0 0.0
  %2602 = vmatprep.subr.mxu0 0.0
  %2603 = vmatpush1.msra.mxu0 0.0
  %2604 = vmatprep.subr.mxu0 0.0
  %2605 = vmatpush1.msra.mxu0 0.0
  %2606 = vmatprep.subr.mxu0 0.0
  %2607 = vmatpush1.msra.mxu0 0.0
  %2608 = vmatprep.subr.mxu0 0.0
  %2609 = vmatpush1.msra.mxu0 0.0
  %2610 = vmatprep.subr.mxu0 0.0
  %2611 = vmatpush1.msra.mxu0 0.0
  %2612 = vmatprep.subr.mxu0 0.0
  %2613 = vmatpush1.msra.mxu0 0.0
  %2614 = vmatprep.subr.mxu0 0.0
  %2615 = vmatpush1.msra.mxu0 0.0
  %2616 = vmatprep.subr.mxu0 0.0
  %2617 = vmatpush1.msra.mxu0 0.0
  %2618 = vmatprep.subr.mxu0 0.0
  %2619 = vmatpush1.msra.mxu0 0.0
  %2620 = vmatprep.subr.mxu0 0.0
  %2621 = vmatpush1.msra.mxu0 0.0
  %2622 = vmatprep.subr.mxu0 0.0
  %2623 = vmatpush1.msra.mxu0 0.0
  %2624 = vmatprep.subr.mxu0 0.0
  %2625 = vmatpush1.msra.mxu0 %v2117
  %2626 = vmatprep.subr.mxu0 0.0
  %2627 = vmatpush1.msra.mxu0 %v2116
  %2628 = vmatprep.subr.mxu0 0.0
  %2629 = vmatpush1.msra.mxu0 %v2115
  %2630 = vmatprep.subr.mxu0 0.0
  %2631 = vmatpush1.msra.mxu0 %v2114
  %2632 = vmatprep.subr.mxu0 0.0
  %2633 = vmatpush2.msra.mxu0 0.0
  %2634 = vmatprep.subr.mxu0 0.0
  %2635 = vmatpush2.msra.mxu0 0.0
  %2636 = vmatprep.subr.mxu0 0.0
  %2637 = vmatpush2.msra.mxu0 0.0
  %2638 = vmatprep.subr.mxu0 0.0
  %2639 = vmatpush2.msra.mxu0 0.0
  %2640 = vmatprep.subr.mxu0 0.0
  %2641 = vmatpush2.msra.mxu0 0.0
  %2642 = vmatprep.subr.mxu0 0.0
  %2643 = vmatpush2.msra.mxu0 0.0
  %2644 = vmatprep.subr.mxu0 0.0
  %2645 = vmatpush2.msra.mxu0 0.0
  %2646 = vmatprep.subr.mxu0 0.0
  %2647 = vmatpush2.msra.mxu0 0.0
  %2648 = vmatprep.subr.mxu0 0.0
  %2649 = vmatpush2.msra.mxu0 0.0
  %2650 = vmatprep.subr.mxu0 0.0
  %2651 = vmatpush2.msra.mxu0 0.0
  %2652 = vmatprep.subr.mxu0 0.0
  %2653 = vmatpush2.msra.mxu0 0.0
  %2654 = vmatprep.subr.mxu0 0.0
  %2655 = vmatpush2.msra.mxu0 0.0
  %2656 = vmatprep.subr.mxu0 0.0
  %2657 = vmatpush2.msra.mxu0 0.0
  %2658 = vmatprep.subr.mxu0 0.0
  %2659 = vmatpush2.msra.mxu0 0.0
  %2660 = vmatprep.subr.mxu0 0.0
  %2661 = vmatpush2.msra.mxu0 0.0
  %2662 = vmatprep.subr.mxu0 0.0
  %2663 = vmatpush2.msra.mxu0 0.0
  %2664 = vmatprep.mubr.f32.mxu0 0.0
  %2665 = vmatmul.mubr.f32.gmra.mxu0 %v2145
  %v2666 = vpop.f32.mrf.mxu0
  %v2667 = vadd.f32 0.0, %v2666
  %v2668 = vpop.f32.mrf.mxu0
  %2669 = vmatprep.mubr.f32.mxu0 0.0
  %2670 = vmatmul.mubr.f32.gmra.mxu0 %v2148
  %v2671 = vpop.f32.mrf.mxu0
  %v2672 = vadd.f32 0.0, %v2671
  %v2673 = vpop.f32.mrf.mxu0
  %2674 = vdwg.mxu0
  %2675 = vmatprep.subr.mxu0 0.0
  %2676 = vmatpush1.msra.mxu0 0.0
  %2677 = vmatprep.subr.mxu0 0.0
  %2678 = vmatpush1.msra.mxu0 0.0
  %2679 = vmatprep.subr.mxu0 0.0
  %2680 = vmatpush1.msra.mxu0 0.0
  %2681 = vmatprep.subr.mxu0 0.0
  %2682 = vmatpush1.msra.mxu0 0.0
  %2683 = vmatprep.subr.mxu0 0.0
  %2684 = vmatpush1.msra.mxu0 0.0
  %2685 = vmatprep.subr.mxu0 0.0
  %2686 = vmatpush1.msra.mxu0 0.0
  %2687 = vmatprep.subr.mxu0 0.0
  %2688 = vmatpush1.msra.mxu0 0.0
  %2689 = vmatprep.subr.mxu0 0.0
  %2690 = vmatpush1.msra.mxu0 0.0
  %2691 = vmatprep.subr.mxu0 0.0
  %2692 = vmatpush1.msra.mxu0 0.0
  %2693 = vmatprep.subr.mxu0 0.0
  %2694 = vmatpush1.msra.mxu0 0.0
  %2695 = vmatprep.subr.mxu0 0.0
  %2696 = vmatpush1.msra.mxu0 0.0
  %2697 = vmatprep.subr.mxu0 0.0
  %2698 = vmatpush1.msra.mxu0 0.0
  %2699 = vmatprep.subr.mxu0 0.0
  %2700 = vmatpush1.msra.mxu0 %v2121
  %2701 = vmatprep.subr.mxu0 0.0
  %2702 = vmatpush1.msra.mxu0 %v2120
  %2703 = vmatprep.subr.mxu0 0.0
  %2704 = vmatpush1.msra.mxu0 %v2119
  %2705 = vmatprep.subr.mxu0 0.0
  %2706 = vmatpush1.msra.mxu0 %v2118
  %2707 = vmatprep.subr.mxu0 0.0
  %2708 = vmatpush2.msra.mxu0 0.0
  %2709 = vmatprep.subr.mxu0 0.0
  %2710 = vmatpush2.msra.mxu0 0.0
  %2711 = vmatprep.subr.mxu0 0.0
  %2712 = vmatpush2.msra.mxu0 0.0
  %2713 = vmatprep.subr.mxu0 0.0
  %2714 = vmatpush2.msra.mxu0 0.0
  %2715 = vmatprep.subr.mxu0 0.0
  %2716 = vmatpush2.msra.mxu0 0.0
  %2717 = vmatprep.subr.mxu0 0.0
  %2718 = vmatpush2.msra.mxu0 0.0
  %2719 = vmatprep.subr.mxu0 0.0
  %2720 = vmatpush2.msra.mxu0 0.0
  %2721 = vmatprep.subr.mxu0 0.0
  %2722 = vmatpush2.msra.mxu0 0.0
  %2723 = vmatprep.subr.mxu0 0.0
  %2724 = vmatpush2.msra.mxu0 0.0
  %2725 = vmatprep.subr.mxu0 0.0
  %2726 = vmatpush2.msra.mxu0 0.0
  %2727 = vmatprep.subr.mxu0 0.0
  %2728 = vmatpush2.msra.mxu0 0.0
  %2729 = vmatprep.subr.mxu0 0.0
  %2730 = vmatpush2.msra.mxu0 0.0
  %2731 = vmatprep.subr.mxu0 0.0
  %2732 = vmatpush2.msra.mxu0 0.0
  %2733 = vmatprep.subr.mxu0 0.0
  %2734 = vmatpush2.msra.mxu0 0.0
  %2735 = vmatprep.subr.mxu0 0.0
  %2736 = vmatpush2.msra.mxu0 0.0
  %2737 = vmatprep.subr.mxu0 0.0
  %2738 = vmatpush2.msra.mxu0 0.0
  %2739 = vmatprep.mubr.f32.mxu0 0.0
  %2740 = vmatmul.mubr.f32.gmra.mxu0 %v2145
  %v2741 = vpop.f32.mrf.mxu0
  %v2742 = vadd.f32 0.0, %v2741
  %v2743 = vpop.f32.mrf.mxu0
  %2744 = vmatprep.mubr.f32.mxu0 0.0
  %2745 = vmatmul.mubr.f32.gmra.mxu0 %v2148
  %v2746 = vpop.f32.mrf.mxu0
  %v2747 = vadd.f32 0.0, %v2746
  %v2748 = vpop.f32.mrf.mxu0
  %2749 = vdwg.mxu0
  %2750 = vmatprep.subr.mxu0 0.0
  %2751 = vmatpush1.msra.mxu0 0.0
  %2752 = vmatprep.subr.mxu0 0.0
  %2753 = vmatpush1.msra.mxu0 0.0
  %2754 = vmatprep.subr.mxu0 0.0
  %2755 = vmatpush1.msra.mxu0 0.0
  %2756 = vmatprep.subr.mxu0 0.0
  %2757 = vmatpush1.msra.mxu0 0.0
  %2758 = vmatprep.subr.mxu0 0.0
  %2759 = vmatpush1.msra.mxu0 0.0
  %2760 = vmatprep.subr.mxu0 0.0
  %2761 = vmatpush1.msra.mxu0 0.0
  %2762 = vmatprep.subr.mxu0 0.0
  %2763 = vmatpush1.msra.mxu0 0.0
  %2764 = vmatprep.subr.mxu0 0.0
  %2765 = vmatpush1.msra.mxu0 0.0
  %2766 = vmatprep.subr.mxu0 0.0
  %2767 = vmatpush1.msra.mxu0 0.0
  %2768 = vmatprep.subr.mxu0 0.0
  %2769 = vmatpush1.msra.mxu0 0.0
  %2770 = vmatprep.subr.mxu0 0.0
  %2771 = vmatpush1.msra.mxu0 0.0
  %2772 = vmatprep.subr.mxu0 0.0
  %2773 = vmatpush1.msra.mxu0 0.0
  %2774 = vmatprep.subr.mxu0 0.0
  %2775 = vmatpush1.msra.mxu0 %v2126
  %2776 = vmatprep.subr.mxu0 0.0
  %2777 = vmatpush1.msra.mxu0 %v2125
  %2778 = vmatprep.subr.mxu0 0.0
  %2779 = vmatpush1.msra.mxu0 %v2124
  %2780 = vmatprep.subr.mxu0 0.0
  %2781 = vmatpush1.msra.mxu0 %v2123
  %2782 = vmatprep.subr.mxu0 0.0
  %2783 = vmatpush2.msra.mxu0 0.0
  %2784 = vmatprep.subr.mxu0 0.0
  %2785 = vmatpush2.msra.mxu0 0.0
  %2786 = vmatprep.subr.mxu0 0.0
  %2787 = vmatpush2.msra.mxu0 0.0
  %2788 = vmatprep.subr.mxu0 0.0
  %2789 = vmatpush2.msra.mxu0 0.0
  %2790 = vmatprep.subr.mxu0 0.0
  %2791 = vmatpush2.msra.mxu0 0.0
  %2792 = vmatprep.subr.mxu0 0.0
  %2793 = vmatpush2.msra.mxu0 0.0
  %2794 = vmatprep.subr.mxu0 0.0
  %2795 = vmatpush2.msra.mxu0 0.0
  %2796 = vmatprep.subr.mxu0 0.0
  %2797 = vmatpush2.msra.mxu0 0.0
  %2798 = vmatprep.subr.mxu0 0.0
  %2799 = vmatpush2.msra.mxu0 0.0
  %2800 = vmatprep.subr.mxu0 0.0
  %2801 = vmatpush2.msra.mxu0 0.0
  %2802 = vmatprep.subr.mxu0 0.0
  %2803 = vmatpush2.msra.mxu0 0.0
  %2804 = vmatprep.subr.mxu0 0.0
  %2805 = vmatpush2.msra.mxu0 0.0
  %2806 = vmatprep.subr.mxu0 0.0
  %2807 = vmatpush2.msra.mxu0 0.0
  %2808 = vmatprep.subr.mxu0 0.0
  %2809 = vmatpush2.msra.mxu0 0.0
  %2810 = vmatprep.subr.mxu0 0.0
  %2811 = vmatpush2.msra.mxu0 0.0
  %2812 = vmatprep.subr.mxu0 0.0
  %2813 = vmatpush2.msra.mxu0 0.0
  %2814 = vmatprep.mubr.f32.mxu0 0.0
  %2815 = vmatmul.mubr.f32.gmra.mxu0 %v2145
  %v2816 = vpop.f32.mrf.mxu0
  %v2817 = vadd.f32 0.0, %v2816
  %v2818 = vpop.f32.mrf.mxu0
  %2819 = vmatprep.mubr.f32.mxu0 0.0
  %2820 = vmatmul.mubr.f32.gmra.mxu0 %v2148
  %v2821 = vpop.f32.mrf.mxu0
  %v2822 = vadd.f32 0.0, %v2821
  %v2823 = vpop.f32.mrf.mxu0
  %2824 = vdwg.mxu0
  %2825 = vmatprep.subr.mxu0 0.0
  %2826 = vmatpush1.msra.mxu0 0.0
  %2827 = vmatprep.subr.mxu0 0.0
  %2828 = vmatpush1.msra.mxu0 0.0
  %2829 = vmatprep.subr.mxu0 0.0
  %2830 = vmatpush1.msra.mxu0 0.0
  %2831 = vmatprep.subr.mxu0 0.0
  %2832 = vmatpush1.msra.mxu0 0.0
  %2833 = vmatprep.subr.mxu0 0.0
  %2834 = vmatpush1.msra.mxu0 0.0
  %2835 = vmatprep.subr.mxu0 0.0
  %2836 = vmatpush1.msra.mxu0 0.0
  %2837 = vmatprep.subr.mxu0 0.0
  %2838 = vmatpush1.msra.mxu0 0.0
  %2839 = vmatprep.subr.mxu0 0.0
  %2840 = vmatpush1.msra.mxu0 0.0
  %2841 = vmatprep.subr.mxu0 0.0
  %2842 = vmatpush1.msra.mxu0 0.0
  %2843 = vmatprep.subr.mxu0 0.0
  %2844 = vmatpush1.msra.mxu0 0.0
  %2845 = vmatprep.subr.mxu0 0.0
  %2846 = vmatpush1.msra.mxu0 0.0
  %2847 = vmatprep.subr.mxu0 0.0
  %2848 = vmatpush1.msra.mxu0 0.0
  %2849 = vmatprep.subr.mxu0 0.0
  %2850 = vmatpush1.msra.mxu0 %v2130
  %2851 = vmatprep.subr.mxu0 0.0
  %2852 = vmatpush1.msra.mxu0 %v2129
  %2853 = vmatprep.subr.mxu0 0.0
  %2854 = vmatpush1.msra.mxu0 %v2128
  %2855 = vmatprep.subr.mxu0 0.0
  %2856 = vmatpush1.msra.mxu0 %v2127
  %2857 = vmatprep.subr.mxu0 0.0
  %2858 = vmatpush2.msra.mxu0 0.0
  %2859 = vmatprep.subr.mxu0 0.0
  %2860 = vmatpush2.msra.mxu0 0.0
  %2861 = vmatprep.subr.mxu0 0.0
  %2862 = vmatpush2.msra.mxu0 0.0
  %2863 = vmatprep.subr.mxu0 0.0
  %2864 = vmatpush2.msra.mxu0 0.0
  %2865 = vmatprep.subr.mxu0 0.0
  %2866 = vmatpush2.msra.mxu0 0.0
  %2867 = vmatprep.subr.mxu0 0.0
  %2868 = vmatpush2.msra.mxu0 0.0
  %2869 = vmatprep.subr.mxu0 0.0
  %2870 = vmatpush2.msra.mxu0 0.0
  %2871 = vmatprep.subr.mxu0 0.0
  %2872 = vmatpush2.msra.mxu0 0.0
  %2873 = vmatprep.subr.mxu0 0.0
  %2874 = vmatpush2.msra.mxu0 0.0
  %2875 = vmatprep.subr.mxu0 0.0
  %2876 = vmatpush2.msra.mxu0 0.0
  %2877 = vmatprep.subr.mxu0 0.0
  %2878 = vmatpush2.msra.mxu0 0.0
  %2879 = vmatprep.subr.mxu0 0.0
  %2880 = vmatpush2.msra.mxu0 0.0
  %2881 = vmatprep.subr.mxu0 0.0
  %2882 = vmatpush2.msra.mxu0 0.0
  %2883 = vmatprep.subr.mxu0 0.0
  %2884 = vmatpush2.msra.mxu0 0.0
  %2885 = vmatprep.subr.mxu0 0.0
  %2886 = vmatpush2.msra.mxu0 0.0
  %2887 = vmatprep.subr.mxu0 0.0
  %2888 = vmatpush2.msra.mxu0 0.0
  %2889 = vmatprep.mubr.f32.mxu0 0.0
  %2890 = vmatmul.mubr.f32.gmra.mxu0 %v2145
  %v2891 = vpop.f32.mrf.mxu0
  %v2892 = vadd.f32 0.0, %v2891
  %v2893 = vpop.f32.mrf.mxu0
  %2894 = vmatprep.mubr.f32.mxu0 0.0
  %2895 = vmatmul.mubr.f32.gmra.mxu0 %v2148
  %v2896 = vpop.f32.mrf.mxu0
  %v2897 = vadd.f32 0.0, %v2896
  %v2898 = vpop.f32.mrf.mxu0
  %2899 = vdwg.mxu0
  %2900 = vmatprep.subr.mxu0 0.0
  %2901 = vmatpush1.msra.mxu0 0.0
  %2902 = vmatprep.subr.mxu0 0.0
  %2903 = vmatpush1.msra.mxu0 0.0
  %2904 = vmatprep.subr.mxu0 0.0
  %2905 = vmatpush1.msra.mxu0 0.0
  %2906 = vmatprep.subr.mxu0 0.0
  %2907 = vmatpush1.msra.mxu0 0.0
  %2908 = vmatprep.subr.mxu0 0.0
  %2909 = vmatpush1.msra.mxu0 0.0
  %2910 = vmatprep.subr.mxu0 0.0
  %2911 = vmatpush1.msra.mxu0 0.0
  %2912 = vmatprep.subr.mxu0 0.0
  %2913 = vmatpush1.msra.mxu0 0.0
  %2914 = vmatprep.subr.mxu0 0.0
  %2915 = vmatpush1.msra.mxu0 0.0
  %2916 = vmatprep.subr.mxu0 0.0
  %2917 = vmatpush1.msra.mxu0 0.0
  %2918 = vmatprep.subr.mxu0 0.0
  %2919 = vmatpush1.msra.mxu0 0.0
  %2920 = vmatprep.subr.mxu0 0.0
  %2921 = vmatpush1.msra.mxu0 0.0
  %2922 = vmatprep.subr.mxu0 0.0
  %2923 = vmatpush1.msra.mxu0 0.0
  %2924 = vmatprep.subr.mxu0 0.0
  %2925 = vmatpush1.msra.mxu0 %v2134
  %2926 = vmatprep.subr.mxu0 0.0
  %2927 = vmatpush1.msra.mxu0 %v2133
  %2928 = vmatprep.subr.mxu0 0.0
  %2929 = vmatpush1.msra.mxu0 %v2132
  %2930 = vmatprep.subr.mxu0 0.0
  %2931 = vmatpush1.msra.mxu0 %v2131
  %2932 = vmatprep.subr.mxu0 0.0
  %2933 = vmatpush2.msra.mxu0 0.0
  %2934 = vmatprep.subr.mxu0 0.0
  %2935 = vmatpush2.msra.mxu0 0.0
  %2936 = vmatprep.subr.mxu0 0.0
  %2937 = vmatpush2.msra.mxu0 0.0
  %2938 = vmatprep.subr.mxu0 0.0
  %2939 = vmatpush2.msra.mxu0 0.0
  %2940 = vmatprep.subr.mxu0 0.0
  %2941 = vmatpush2.msra.mxu0 0.0
  %2942 = vmatprep.subr.mxu0 0.0
  %2943 = vmatpush2.msra.mxu0 0.0
  %2944 = vmatprep.subr.mxu0 0.0
  %2945 = vmatpush2.msra.mxu0 0.0
  %2946 = vmatprep.subr.mxu0 0.0
  %2947 = vmatpush2.msra.mxu0 0.0
  %2948 = vmatprep.subr.mxu0 0.0
  %2949 = vmatpush2.msra.mxu0 0.0
  %2950 = vmatprep.subr.mxu0 0.0
  %2951 = vmatpush2.msra.mxu0 0.0
  %2952 = vmatprep.subr.mxu0 0.0
  %2953 = vmatpush2.msra.mxu0 0.0
  %2954 = vmatprep.subr.mxu0 0.0
  %2955 = vmatpush2.msra.mxu0 0.0
  %2956 = vmatprep.subr.mxu0 0.0
  %2957 = vmatpush2.msra.mxu0 0.0
  %2958 = vmatprep.subr.mxu0 0.0
  %2959 = vmatpush2.msra.mxu0 0.0
  %2960 = vmatprep.subr.mxu0 0.0
  %2961 = vmatpush2.msra.mxu0 0.0
  %2962 = vmatprep.subr.mxu0 0.0
  %2963 = vmatpush2.msra.mxu0 0.0
  %2964 = vmatprep.mubr.f32.mxu0 0.0
  %2965 = vmatmul.mubr.f32.gmra.mxu0 %v2145
  %v2966 = vpop.f32.mrf.mxu0
  %v2967 = vadd.f32 0.0, %v2966
  %v2968 = vpop.f32.mrf.mxu0
  %2969 = vmatprep.mubr.f32.mxu0 0.0
  %2970 = vmatmul.mubr.f32.gmra.mxu0 %v2148
  %v2971 = vpop.f32.mrf.mxu0
  %v2972 = vadd.f32 0.0, %v2971
  %v2973 = vpop.f32.mrf.mxu0
  %2974 = vdwg.mxu0
  %2975 = vmatprep.subr.mxu0 0.0
  %2976 = vmatpush1.msra.mxu0 0.0
  %2977 = vmatprep.subr.mxu0 0.0
  %2978 = vmatpush1.msra.mxu0 0.0
  %2979 = vmatprep.subr.mxu0 0.0
  %2980 = vmatpush1.msra.mxu0 0.0
  %2981 = vmatprep.subr.mxu0 0.0
  %2982 = vmatpush1.msra.mxu0 0.0
  %2983 = vmatprep.subr.mxu0 0.0
  %2984 = vmatpush1.msra.mxu0 0.0
  %2985 = vmatprep.subr.mxu0 0.0
  %2986 = vmatpush1.msra.mxu0 0.0
  %2987 = vmatprep.subr.mxu0 0.0
  %2988 = vmatpush1.msra.mxu0 0.0
  %2989 = vmatprep.subr.mxu0 0.0
  %2990 = vmatpush1.msra.mxu0 0.0
  %2991 = vmatprep.subr.mxu0 0.0
  %2992 = vmatpush1.msra.mxu0 0.0
  %2993 = vmatprep.subr.mxu0 0.0
  %2994 = vmatpush1.msra.mxu0 0.0
  %2995 = vmatprep.subr.mxu0 0.0
  %2996 = vmatpush1.msra.mxu0 0.0
  %2997 = vmatprep.subr.mxu0 0.0
  %2998 = vmatpush1.msra.mxu0 0.0
  %2999 = vmatprep.subr.mxu0 0.0
  %3000 = vmatpush1.msra.mxu0 %v2138
  %3001 = vmatprep.subr.mxu0 0.0
  %3002 = vmatpush1.msra.mxu0 %v2137
  %3003 = vmatprep.subr.mxu0 0.0
  %3004 = vmatpush1.msra.mxu0 %v2136
  %3005 = vmatprep.subr.mxu0 0.0
  %3006 = vmatpush1.msra.mxu0 %v2135
  %3007 = vmatprep.subr.mxu0 0.0
  %3008 = vmatpush2.msra.mxu0 0.0
  %3009 = vmatprep.subr.mxu0 0.0
  %3010 = vmatpush2.msra.mxu0 0.0
  %3011 = vmatprep.subr.mxu0 0.0
  %3012 = vmatpush2.msra.mxu0 0.0
  %3013 = vmatprep.subr.mxu0 0.0
  %3014 = vmatpush2.msra.mxu0 0.0
  %3015 = vmatprep.subr.mxu0 0.0
  %3016 = vmatpush2.msra.mxu0 0.0
  %3017 = vmatprep.subr.mxu0 0.0
  %3018 = vmatpush2.msra.mxu0 0.0
  %3019 = vmatprep.subr.mxu0 0.0
  %3020 = vmatpush2.msra.mxu0 0.0
  %3021 = vmatprep.subr.mxu0 0.0
  %3022 = vmatpush2.msra.mxu0 0.0
  %3023 = vmatprep.subr.mxu0 0.0
  %3024 = vmatpush2.msra.mxu0 0.0
  %3025 = vmatprep.subr.mxu0 0.0
  %3026 = vmatpush2.msra.mxu0 0.0
  %3027 = vmatprep.subr.mxu0 0.0
  %3028 = vmatpush2.msra.mxu0 0.0
  %3029 = vmatprep.subr.mxu0 0.0
  %3030 = vmatpush2.msra.mxu0 0.0
  %3031 = vmatprep.subr.mxu0 0.0
  %3032 = vmatpush2.msra.mxu0 0.0
  %3033 = vmatprep.subr.mxu0 0.0
  %3034 = vmatpush2.msra.mxu0 0.0
  %3035 = vmatprep.subr.mxu0 0.0
  %3036 = vmatpush2.msra.mxu0 0.0
  %3037 = vmatprep.subr.mxu0 0.0
  %3038 = vmatpush2.msra.mxu0 0.0
  %3039 = vmatprep.mubr.f32.mxu0 0.0
  %3040 = vmatmul.mubr.f32.gmra.mxu0 %v2145
  %v3041 = vpop.f32.mrf.mxu0
  %v3042 = vadd.f32 0.0, %v3041
  %v3043 = vpop.f32.mrf.mxu0
  %3044 = vmatprep.mubr.f32.mxu0 0.0
  %3045 = vmatmul.mubr.f32.gmra.mxu0 %v2148
  %v3046 = vpop.f32.mrf.mxu0
  %v3047 = vadd.f32 0.0, %v3046
  %v3048 = vpop.f32.mrf.mxu0
  %3049 = vdwg.mxu0
  %v3051 = vsel %vm998, %v2217, 0
  %v3054 = vsel %vm998, %v2222, 0
  %v3057 = vsel %vm998, %v2517, 0
  %v3060 = vsel %vm998, %v2522, 0
  %3062 = vmatprep.subr.mxu0 0.0
  %3063 = vmatpush1.xpose.msra.mxu0 0.0
  %3064 = vmatprep.subr.mxu0 0.0
  %3065 = vmatpush1.xpose.msra.mxu0 0.0
  %3066 = vmatprep.subr.mxu0 0.0
  %3067 = vmatpush1.xpose.msra.mxu0 0.0
  %3068 = vmatprep.subr.mxu0 0.0
  %3069 = vmatpush1.xpose.msra.mxu0 0.0
  %3070 = vmatprep.subr.mxu0 0.0
  %3071 = vmatpush1.xpose.msra.mxu0 0.0
  %3072 = vmatprep.subr.mxu0 0.0
  %3073 = vmatpush1.xpose.msra.mxu0 0.0
  %3074 = vmatprep.subr.mxu0 0.0
  %3075 = vmatpush1.xpose.msra.mxu0 0.0
  %3076 = vmatprep.subr.mxu0 0.0
  %3077 = vmatpush1.xpose.msra.mxu0 0.0
  %3078 = vmatprep.subr.mxu0 0.0
  %3079 = vmatpush1.xpose.msra.mxu0 0.0
  %3080 = vmatprep.subr.mxu0 0.0
  %3081 = vmatpush1.xpose.msra.mxu0 0.0
  %3082 = vmatprep.subr.mxu0 0.0
  %3083 = vmatpush1.xpose.msra.mxu0 0.0
  %3084 = vmatprep.subr.mxu0 0.0
  %3085 = vmatpush1.xpose.msra.mxu0 0.0
  %3086 = vmatprep.subr.mxu0 0.0
  %3087 = vmatpush1.xpose.msra.mxu0 0.0
  %3088 = vmatprep.subr.mxu0 0.0
  %3089 = vmatpush1.xpose.msra.mxu0 0.0
  %3090 = vmatprep.subr.mxu0 0.0
  %3091 = vmatpush1.xpose.msra.mxu0 %v3060
  %3092 = vmatprep.subr.mxu0 0.0
  %3093 = vmatpush1.xpose.msra.mxu0 %v3057
  %3094 = vmatprep.subr.mxu0 0.0
  %3095 = vmatpush2.xpose.msra.mxu0 0.0
  %3096 = vmatprep.subr.mxu0 0.0
  %3097 = vmatpush2.xpose.msra.mxu0 0.0
  %3098 = vmatprep.subr.mxu0 0.0
  %3099 = vmatpush2.xpose.msra.mxu0 0.0
  %3100 = vmatprep.subr.mxu0 0.0
  %3101 = vmatpush2.xpose.msra.mxu0 0.0
  %3102 = vmatprep.subr.mxu0 0.0
  %3103 = vmatpush2.xpose.msra.mxu0 0.0
  %3104 = vmatprep.subr.mxu0 0.0
  %3105 = vmatpush2.xpose.msra.mxu0 0.0
  %3106 = vmatprep.subr.mxu0 0.0
  %3107 = vmatpush2.xpose.msra.mxu0 0.0
  %3108 = vmatprep.subr.mxu0 0.0
  %3109 = vmatpush2.xpose.msra.mxu0 0.0
  %3110 = vmatprep.subr.mxu0 0.0
  %3111 = vmatpush2.xpose.msra.mxu0 0.0
  %3112 = vmatprep.subr.mxu0 0.0
  %3113 = vmatpush2.xpose.msra.mxu0 0.0
  %3114 = vmatprep.subr.mxu0 0.0
  %3115 = vmatpush2.xpose.msra.mxu0 0.0
  %3116 = vmatprep.subr.mxu0 0.0
  %3117 = vmatpush2.xpose.msra.mxu0 0.0
  %3118 = vmatprep.subr.mxu0 0.0
  %3119 = vmatpush2.xpose.msra.mxu0 0.0
  %3120 = vmatprep.subr.mxu0 0.0
  %3121 = vmatpush2.xpose.msra.mxu0 0.0
  %3122 = vmatprep.subr.mxu0 0.0
  %3123 = vmatpush2.xpose.msra.mxu0 0.0
  %3124 = vmatprep.subr.mxu0 0.0
  %3125 = vmatpush2.xpose.msra.mxu0 0.0
  %3126 = vmatprep.mubr.f32.mxu0 0.0
  %3127 = vmatmul.mubr.f32.gmra.mxu0 %v3051
  %v3128 = vpop.f32.mrf.mxu0
  %v3129 = vadd.f32 %v37, %v3128
  %v3130 = vpop.f32.mrf.mxu0
  %3131 = vmatprep.mubr.f32.mxu0 0.0
  %3132 = vmatmul.mubr.f32.gmra.mxu0 %v3054
  %v3133 = vpop.f32.mrf.mxu0
  %v3134 = vadd.f32 %v38, %v3133
  %v3135 = vpop.f32.mrf.mxu0
  %3136 = vdwg.mxu0
  %v3138 = vsel %vm998, %v2292, 0
  %v3141 = vsel %vm998, %v2297, 0
  %v3144 = vsel %vm998, %v2592, 0
  %v3147 = vsel %vm998, %v2597, 0
  %3149 = vmatprep.subr.mxu0 0.0
  %3150 = vmatpush1.xpose.msra.mxu0 0.0
  %3151 = vmatprep.subr.mxu0 0.0
  %3152 = vmatpush1.xpose.msra.mxu0 0.0
  %3153 = vmatprep.subr.mxu0 0.0
  %3154 = vmatpush1.xpose.msra.mxu0 0.0
  %3155 = vmatprep.subr.mxu0 0.0
  %3156 = vmatpush1.xpose.msra.mxu0 0.0
  %3157 = vmatprep.subr.mxu0 0.0
  %3158 = vmatpush1.xpose.msra.mxu0 0.0
  %3159 = vmatprep.subr.mxu0 0.0
  %3160 = vmatpush1.xpose.msra.mxu0 0.0
  %3161 = vmatprep.subr.mxu0 0.0
  %3162 = vmatpush1.xpose.msra.mxu0 0.0
  %3163 = vmatprep.subr.mxu0 0.0
  %3164 = vmatpush1.xpose.msra.mxu0 0.0
  %3165 = vmatprep.subr.mxu0 0.0
  %3166 = vmatpush1.xpose.msra.mxu0 0.0
  %3167 = vmatprep.subr.mxu0 0.0
  %3168 = vmatpush1.xpose.msra.mxu0 0.0
  %3169 = vmatprep.subr.mxu0 0.0
  %3170 = vmatpush1.xpose.msra.mxu0 0.0
  %3171 = vmatprep.subr.mxu0 0.0
  %3172 = vmatpush1.xpose.msra.mxu0 0.0
  %3173 = vmatprep.subr.mxu0 0.0
  %3174 = vmatpush1.xpose.msra.mxu0 0.0
  %3175 = vmatprep.subr.mxu0 0.0
  %3176 = vmatpush1.xpose.msra.mxu0 0.0
  %3177 = vmatprep.subr.mxu0 0.0
  %3178 = vmatpush1.xpose.msra.mxu0 %v3147
  %3179 = vmatprep.subr.mxu0 0.0
  %3180 = vmatpush1.xpose.msra.mxu0 %v3144
  %3181 = vmatprep.subr.mxu0 0.0
  %3182 = vmatpush2.xpose.msra.mxu0 0.0
  %3183 = vmatprep.subr.mxu0 0.0
  %3184 = vmatpush2.xpose.msra.mxu0 0.0
  %3185 = vmatprep.subr.mxu0 0.0
  %3186 = vmatpush2.xpose.msra.mxu0 0.0
  %3187 = vmatprep.subr.mxu0 0.0
  %3188 = vmatpush2.xpose.msra.mxu0 0.0
  %3189 = vmatprep.subr.mxu0 0.0
  %3190 = vmatpush2.xpose.msra.mxu0 0.0
  %3191 = vmatprep.subr.mxu0 0.0
  %3192 = vmatpush2.xpose.msra.mxu0 0.0
  %3193 = vmatprep.subr.mxu0 0.0
  %3194 = vmatpush2.xpose.msra.mxu0 0.0
  %3195 = vmatprep.subr.mxu0 0.0
  %3196 = vmatpush2.xpose.msra.mxu0 0.0
  %3197 = vmatprep.subr.mxu0 0.0
  %3198 = vmatpush2.xpose.msra.mxu0 0.0
  %3199 = vmatprep.subr.mxu0 0.0
  %3200 = vmatpush2.xpose.msra.mxu0 0.0
  %3201 = vmatprep.subr.mxu0 0.0
  %3202 = vmatpush2.xpose.msra.mxu0 0.0
  %3203 = vmatprep.subr.mxu0 0.0
  %3204 = vmatpush2.xpose.msra.mxu0 0.0
  %3205 = vmatprep.subr.mxu0 0.0
  %3206 = vmatpush2.xpose.msra.mxu0 0.0
  %3207 = vmatprep.subr.mxu0 0.0
  %3208 = vmatpush2.xpose.msra.mxu0 0.0
  %3209 = vmatprep.subr.mxu0 0.0
  %3210 = vmatpush2.xpose.msra.mxu0 0.0
  %3211 = vmatprep.subr.mxu0 0.0
  %3212 = vmatpush2.xpose.msra.mxu0 0.0
  %3213 = vmatprep.mubr.f32.mxu0 0.0
  %3214 = vmatmul.mubr.f32.gmra.mxu0 %v3138
  %v3215 = vpop.f32.mrf.mxu0
  %v3216 = vadd.f32 %v37, %v3215
  %v3217 = vpop.f32.mrf.mxu0
  %3218 = vmatprep.mubr.f32.mxu0 0.0
  %3219 = vmatmul.mubr.f32.gmra.mxu0 %v3141
  %v3220 = vpop.f32.mrf.mxu0
  %v3221 = vadd.f32 %v38, %v3220
  %v3222 = vpop.f32.mrf.mxu0
  %3223 = vdwg.mxu0
  %v3225 = vsel %vm998, %v2367, 0
  %v3228 = vsel %vm998, %v2372, 0
  %v3231 = vsel %vm998, %v2667, 0
  %v3234 = vsel %vm998, %v2672, 0
  %3236 = vmatprep.subr.mxu0 0.0
  %3237 = vmatpush1.xpose.msra.mxu0 0.0
  %3238 = vmatprep.subr.mxu0 0.0
  %3239 = vmatpush1.xpose.msra.mxu0 0.0
  %3240 = vmatprep.subr.mxu0 0.0
  %3241 = vmatpush1.xpose.msra.mxu0 0.0
  %3242 = vmatprep.subr.mxu0 0.0
  %3243 = vmatpush1.xpose.msra.mxu0 0.0
  %3244 = vmatprep.subr.mxu0 0.0
  %3245 = vmatpush1.xpose.msra.mxu0 0.0
  %3246 = vmatprep.subr.mxu0 0.0
  %3247 = vmatpush1.xpose.msra.mxu0 0.0
  %3248 = vmatprep.subr.mxu0 0.0
  %3249 = vmatpush1.xpose.msra.mxu0 0.0
  %3250 = vmatprep.subr.mxu0 0.0
  %3251 = vmatpush1.xpose.msra.mxu0 0.0
  %3252 = vmatprep.subr.mxu0 0.0
  %3253 = vmatpush1.xpose.msra.mxu0 0.0
  %3254 = vmatprep.subr.mxu0 0.0
  %3255 = vmatpush1.xpose.msra.mxu0 0.0
  %3256 = vmatprep.subr.mxu0 0.0
  %3257 = vmatpush1.xpose.msra.mxu0 0.0
  %3258 = vmatprep.subr.mxu0 0.0
  %3259 = vmatpush1.xpose.msra.mxu0 0.0
  %3260 = vmatprep.subr.mxu0 0.0
  %3261 = vmatpush1.xpose.msra.mxu0 0.0
  %3262 = vmatprep.subr.mxu0 0.0
  %3263 = vmatpush1.xpose.msra.mxu0 0.0
  %3264 = vmatprep.subr.mxu0 0.0
  %3265 = vmatpush1.xpose.msra.mxu0 %v3234
  %3266 = vmatprep.subr.mxu0 0.0
  %3267 = vmatpush1.xpose.msra.mxu0 %v3231
  %3268 = vmatprep.subr.mxu0 0.0
  %3269 = vmatpush2.xpose.msra.mxu0 0.0
  %3270 = vmatprep.subr.mxu0 0.0
  %3271 = vmatpush2.xpose.msra.mxu0 0.0
  %3272 = vmatprep.subr.mxu0 0.0
  %3273 = vmatpush2.xpose.msra.mxu0 0.0
  %3274 = vmatprep.subr.mxu0 0.0
  %3275 = vmatpush2.xpose.msra.mxu0 0.0
  %3276 = vmatprep.subr.mxu0 0.0
  %3277 = vmatpush2.xpose.msra.mxu0 0.0
  %3278 = vmatprep.subr.mxu0 0.0
  %3279 = vmatpush2.xpose.msra.mxu0 0.0
  %3280 = vmatprep.subr.mxu0 0.0
  %3281 = vmatpush2.xpose.msra.mxu0 0.0
  %3282 = vmatprep.subr.mxu0 0.0
  %3283 = vmatpush2.xpose.msra.mxu0 0.0
  %3284 = vmatprep.subr.mxu0 0.0
  %3285 = vmatpush2.xpose.msra.mxu0 0.0
  %3286 = vmatprep.subr.mxu0 0.0
  %3287 = vmatpush2.xpose.msra.mxu0 0.0
  %3288 = vmatprep.subr.mxu0 0.0
  %3289 = vmatpush2.xpose.msra.mxu0 0.0
  %3290 = vmatprep.subr.mxu0 0.0
  %3291 = vmatpush2.xpose.msra.mxu0 0.0
  %3292 = vmatprep.subr.mxu0 0.0
  %3293 = vmatpush2.xpose.msra.mxu0 0.0
  %3294 = vmatprep.subr.mxu0 0.0
  %3295 = vmatpush2.xpose.msra.mxu0 0.0
  %3296 = vmatprep.subr.mxu0 0.0
  %3297 = vmatpush2.xpose.msra.mxu0 0.0
  %3298 = vmatprep.subr.mxu0 0.0
  %3299 = vmatpush2.xpose.msra.mxu0 0.0
  %3300 = vmatprep.mubr.f32.mxu0 0.0
  %3301 = vmatmul.mubr.f32.gmra.mxu0 %v3225
  %v3302 = vpop.f32.mrf.mxu0
  %v3303 = vadd.f32 %v37, %v3302
  %v3304 = vpop.f32.mrf.mxu0
  %3305 = vmatprep.mubr.f32.mxu0 0.0
  %3306 = vmatmul.mubr.f32.gmra.mxu0 %v3228
  %v3307 = vpop.f32.mrf.mxu0
  %v3308 = vadd.f32 %v38, %v3307
  %v3309 = vpop.f32.mrf.mxu0
  %3310 = vdwg.mxu0
  %v3312 = vsel %vm998, %v2442, 0
  %v3315 = vsel %vm998, %v2447, 0
  %v3318 = vsel %vm998, %v2742, 0
  %v3321 = vsel %vm998, %v2747, 0
  %3323 = vmatprep.subr.mxu0 0.0
  %3324 = vmatpush1.xpose.msra.mxu0 0.0
  %3325 = vmatprep.subr.mxu0 0.0
  %3326 = vmatpush1.xpose.msra.mxu0 0.0
  %3327 = vmatprep.subr.mxu0 0.0
  %3328 = vmatpush1.xpose.msra.mxu0 0.0
  %3329 = vmatprep.subr.mxu0 0.0
  %3330 = vmatpush1.xpose.msra.mxu0 0.0
  %3331 = vmatprep.subr.mxu0 0.0
  %3332 = vmatpush1.xpose.msra.mxu0 0.0
  %3333 = vmatprep.subr.mxu0 0.0
  %3334 = vmatpush1.xpose.msra.mxu0 0.0
  %3335 = vmatprep.subr.mxu0 0.0
  %3336 = vmatpush1.xpose.msra.mxu0 0.0
  %3337 = vmatprep.subr.mxu0 0.0
  %3338 = vmatpush1.xpose.msra.mxu0 0.0
  %3339 = vmatprep.subr.mxu0 0.0
  %3340 = vmatpush1.xpose.msra.mxu0 0.0
  %3341 = vmatprep.subr.mxu0 0.0
  %3342 = vmatpush1.xpose.msra.mxu0 0.0
  %3343 = vmatprep.subr.mxu0 0.0
  %3344 = vmatpush1.xpose.msra.mxu0 0.0
  %3345 = vmatprep.subr.mxu0 0.0
  %3346 = vmatpush1.xpose.msra.mxu0 0.0
  %3347 = vmatprep.subr.mxu0 0.0
  %3348 = vmatpush1.xpose.msra.mxu0 0.0
  %3349 = vmatprep.subr.mxu0 0.0
  %3350 = vmatpush1.xpose.msra.mxu0 0.0
  %3351 = vmatprep.subr.mxu0 0.0
  %3352 = vmatpush1.xpose.msra.mxu0 %v3321
  %3353 = vmatprep.subr.mxu0 0.0
  %3354 = vmatpush1.xpose.msra.mxu0 %v3318
  %3355 = vmatprep.subr.mxu0 0.0
  %3356 = vmatpush2.xpose.msra.mxu0 0.0
  %3357 = vmatprep.subr.mxu0 0.0
  %3358 = vmatpush2.xpose.msra.mxu0 0.0
  %3359 = vmatprep.subr.mxu0 0.0
  %3360 = vmatpush2.xpose.msra.mxu0 0.0
  %3361 = vmatprep.subr.mxu0 0.0
  %3362 = vmatpush2.xpose.msra.mxu0 0.0
  %3363 = vmatprep.subr.mxu0 0.0
  %3364 = vmatpush2.xpose.msra.mxu0 0.0
  %3365 = vmatprep.subr.mxu0 0.0
  %3366 = vmatpush2.xpose.msra.mxu0 0.0
  %3367 = vmatprep.subr.mxu0 0.0
  %3368 = vmatpush2.xpose.msra.mxu0 0.0
  %3369 = vmatprep.subr.mxu0 0.0
  %3370 = vmatpush2.xpose.msra.mxu0 0.0
  %3371 = vmatprep.subr.mxu0 0.0
  %3372 = vmatpush2.xpose.msra.mxu0 0.0
  %3373 = vmatprep.subr.mxu0 0.0
  %3374 = vmatpush2.xpose.msra.mxu0 0.0
  %3375 = vmatprep.subr.mxu0 0.0
  %3376 = vmatpush2.xpose.msra.mxu0 0.0
  %3377 = vmatprep.subr.mxu0 0.0
  %3378 = vmatpush2.xpose.msra.mxu0 0.0
  %3379 = vmatprep.subr.mxu0 0.0
  %3380 = vmatpush2.xpose.msra.mxu0 0.0
  %3381 = vmatprep.subr.mxu0 0.0
  %3382 = vmatpush2.xpose.msra.mxu0 0.0
  %3383 = vmatprep.subr.mxu0 0.0
  %3384 = vmatpush2.xpose.msra.mxu0 0.0
  %3385 = vmatprep.subr.mxu0 0.0
  %3386 = vmatpush2.xpose.msra.mxu0 0.0
  %3387 = vmatprep.mubr.f32.mxu0 0.0
  %3388 = vmatmul.mubr.f32.gmra.mxu0 %v3312
  %v3389 = vpop.f32.mrf.mxu0
  %v3390 = vadd.f32 %v37, %v3389
  %v3391 = vpop.f32.mrf.mxu0
  %3392 = vmatprep.mubr.f32.mxu0 0.0
  %3393 = vmatmul.mubr.f32.gmra.mxu0 %v3315
  %v3394 = vpop.f32.mrf.mxu0
  %v3395 = vadd.f32 %v38, %v3394
  %v3396 = vpop.f32.mrf.mxu0
  %3397 = vdwg.mxu0
  %v3398 = vsel %vm1347, %v3129, -inf
  %3399 = vmax.xlane.f32.xlu0 %v3398
  %v3400 = vpop.xlane.xlu0 %3399
  %v3401 = vsel %vm1347, %v3134, -inf
  %3402 = vmax.xlane.f32.xlu0 %v3401
  %v3403 = vpop.xlane.xlu0 %3402
  %v3404 = vsel %vm1347, %v3216, -inf
  %3405 = vmax.xlane.f32.xlu0 %v3404
  %v3406 = vpop.xlane.xlu0 %3405
  %v3407 = vsel %vm1347, %v3221, -inf
  %3408 = vmax.xlane.f32.xlu0 %v3407
  %v3409 = vpop.xlane.xlu0 %3408
  %v3410 = vsel %vm1347, %v3303, -inf
  %3411 = vmax.xlane.f32.xlu0 %v3410
  %v3412 = vpop.xlane.xlu0 %3411
  %v3413 = vsel %vm1347, %v3308, -inf
  %3414 = vmax.xlane.f32.xlu0 %v3413
  %v3415 = vpop.xlane.xlu0 %3414
  %v3416 = vsel %vm1347, %v3390, -inf
  %3417 = vmax.xlane.f32.xlu0 %v3416
  %v3418 = vpop.xlane.xlu0 %3417
  %v3419 = vsel %vm1347, %v3395, -inf
  %3420 = vmax.xlane.f32.xlu0 %v3419
  %v3421 = vpop.xlane.xlu0 %3420
  %v3422 = vsub.f32 %v3129, %v3400
  %v3423 = vsub.f32 %v3134, %v3403
  %v3424 = vsub.f32 %v3216, %v3406
  %v3425 = vsub.f32 %v3221, %v3409
  %v3426 = vsub.f32 %v3303, %v3412
  %v3427 = vsub.f32 %v3308, %v3415
  %v3428 = vsub.f32 %v3390, %v3418
  %v3429 = vsub.f32 %v3395, %v3421
  %v3430 = vmul.f32 %v3422, 1.442695
  %v3431 = vpow.pop %v3430
  %v3432 = vmul.f32 %v3423, 1.442695
  %v3433 = vpow.pop %v3432
  %v3434 = vmul.f32 %v3424, 1.442695
  %v3435 = vpow.pop %v3434
  %v3436 = vmul.f32 %v3425, 1.442695
  %v3437 = vpow.pop %v3436
  %v3438 = vmul.f32 %v3426, 1.442695
  %v3439 = vpow.pop %v3438
  %v3440 = vmul.f32 %v3427, 1.442695
  %v3441 = vpow.pop %v3440
  %v3442 = vmul.f32 %v3428, 1.442695
  %v3443 = vpow.pop %v3442
  %v3444 = vmul.f32 %v3429, 1.442695
  %v3445 = vpow.pop %v3444
  %v3446 = vsel %vm1347, %v3431, 0.0
  %3447 = vadd.xlane.f32.xlu0 %v3446
  %v3448 = vpop.xlane.xlu0 %3447
  %v3449 = vsel %vm1347, %v3433, 0.0
  %3450 = vadd.xlane.f32.xlu0 %v3449
  %v3451 = vpop.xlane.xlu0 %3450
  %v3452 = vsel %vm1347, %v3435, 0.0
  %3453 = vadd.xlane.f32.xlu0 %v3452
  %v3454 = vpop.xlane.xlu0 %3453
  %v3455 = vsel %vm1347, %v3437, 0.0
  %3456 = vadd.xlane.f32.xlu0 %v3455
  %v3457 = vpop.xlane.xlu0 %3456
  %v3458 = vsel %vm1347, %v3439, 0.0
  %3459 = vadd.xlane.f32.xlu0 %v3458
  %v3460 = vpop.xlane.xlu0 %3459
  %v3461 = vsel %vm1347, %v3441, 0.0
  %3462 = vadd.xlane.f32.xlu0 %v3461
  %v3463 = vpop.xlane.xlu0 %3462
  %v3464 = vsel %vm1347, %v3443, 0.0
  %3465 = vadd.xlane.f32.xlu0 %v3464
  %v3466 = vpop.xlane.xlu0 %3465
  %v3467 = vsel %vm1347, %v3445, 0.0
  %3468 = vadd.xlane.f32.xlu0 %v3467
  %v3469 = vpop.xlane.xlu0 %3468
  %v3470 = vrcp.pop %v3448
  %v3471 = vrcp.pop %v3451
  %v3472 = vrcp.pop %v3454
  %v3473 = vrcp.pop %v3457
  %v3474 = vrcp.pop %v3460
  %v3475 = vrcp.pop %v3463
  %v3476 = vrcp.pop %v3466
  %v3477 = vrcp.pop %v3469
  %v3478 = vmul.f32 %v3431, %v3470
  %v3479 = vmul.f32 %v3433, %v3471
  %v3480 = vmul.f32 %v3435, %v3472
  %v3481 = vmul.f32 %v3437, %v3473
  %v3482 = vmul.f32 %v3439, %v3474
  %v3483 = vmul.f32 %v3441, %v3475
  %v3484 = vmul.f32 %v3443, %v3476
  %v3485 = vmul.f32 %v3445, %v3477
  %v3487 = vsel %vm1347, %v3478, 0
  %v3490 = vsel %vm1347, %v3479, 0
  %3492 = vmatprep.subr.mxu0 0.0
  %3493 = vmatpush1.msra.mxu0 0.0
  %3494 = vmatprep.subr.mxu0 0.0
  %3495 = vmatpush1.msra.mxu0 0.0
  %3496 = vmatprep.subr.mxu0 0.0
  %3497 = vmatpush1.msra.mxu0 0.0
  %3498 = vmatprep.subr.mxu0 0.0
  %3499 = vmatpush1.msra.mxu0 0.0
  %3500 = vmatprep.subr.mxu0 0.0
  %3501 = vmatpush1.msra.mxu0 0.0
  %3502 = vmatprep.subr.mxu0 0.0
  %3503 = vmatpush1.msra.mxu0 0.0
  %3504 = vmatprep.subr.mxu0 0.0
  %3505 = vmatpush1.msra.mxu0 0.0
  %3506 = vmatprep.subr.mxu0 0.0
  %3507 = vmatpush1.msra.mxu0 0.0
  %3508 = vmatprep.subr.mxu0 0.0
  %3509 = vmatpush1.msra.mxu0 0.0
  %3510 = vmatprep.subr.mxu0 0.0
  %3511 = vmatpush1.msra.mxu0 0.0
  %3512 = vmatprep.subr.mxu0 0.0
  %3513 = vmatpush1.msra.mxu0 0.0
  %3514 = vmatprep.subr.mxu0 0.0
  %3515 = vmatpush1.msra.mxu0 0.0
  %3516 = vmatprep.subr.mxu0 0.0
  %3517 = vmatpush1.msra.mxu0 0.0
  %3518 = vmatprep.subr.mxu0 0.0
  %3519 = vmatpush1.msra.mxu0 0.0
  %3520 = vmatprep.subr.mxu0 0.0
  %3521 = vmatpush1.msra.mxu0 %v2822
  %3522 = vmatprep.subr.mxu0 0.0
  %3523 = vmatpush1.msra.mxu0 %v2817
  %3524 = vmatprep.subr.mxu0 0.0
  %3525 = vmatpush2.msra.mxu0 0.0
  %3526 = vmatprep.subr.mxu0 0.0
  %3527 = vmatpush2.msra.mxu0 0.0
  %3528 = vmatprep.subr.mxu0 0.0
  %3529 = vmatpush2.msra.mxu0 0.0
  %3530 = vmatprep.subr.mxu0 0.0
  %3531 = vmatpush2.msra.mxu0 0.0
  %3532 = vmatprep.subr.mxu0 0.0
  %3533 = vmatpush2.msra.mxu0 0.0
  %3534 = vmatprep.subr.mxu0 0.0
  %3535 = vmatpush2.msra.mxu0 0.0
  %3536 = vmatprep.subr.mxu0 0.0
  %3537 = vmatpush2.msra.mxu0 0.0
  %3538 = vmatprep.subr.mxu0 0.0
  %3539 = vmatpush2.msra.mxu0 0.0
  %3540 = vmatprep.subr.mxu0 0.0
  %3541 = vmatpush2.msra.mxu0 0.0
  %3542 = vmatprep.subr.mxu0 0.0
  %3543 = vmatpush2.msra.mxu0 0.0
  %3544 = vmatprep.subr.mxu0 0.0
  %3545 = vmatpush2.msra.mxu0 0.0
  %3546 = vmatprep.subr.mxu0 0.0
  %3547 = vmatpush2.msra.mxu0 0.0
  %3548 = vmatprep.subr.mxu0 0.0
  %3549 = vmatpush2.msra.mxu0 0.0
  %3550 = vmatprep.subr.mxu0 0.0
  %3551 = vmatpush2.msra.mxu0 0.0
  %3552 = vmatprep.subr.mxu0 0.0
  %3553 = vmatpush2.msra.mxu0 0.0
  %3554 = vmatprep.subr.mxu0 0.0
  %3555 = vmatpush2.msra.mxu0 0.0
  %3556 = vmatprep.mubr.f32.mxu0 0.0
  %3557 = vmatmul.mubr.f32.gmra.mxu0 %v3487
  %v3558 = vpop.f32.mrf.mxu0
  %v3559 = vadd.f32 0.0, %v3558
  %v3560 = vpop.f32.mrf.mxu0
  %3561 = vmatprep.mubr.f32.mxu0 0.0
  %3562 = vmatmul.mubr.f32.gmra.mxu0 %v3490
  %v3563 = vpop.f32.mrf.mxu0
  %v3564 = vadd.f32 0.0, %v3563
  %v3565 = vpop.f32.mrf.mxu0
  %3566 = vdwg.mxu0
  %v3568 = vsel %vm1347, %v3480, 0
  %v3571 = vsel %vm1347, %v3481, 0
  %3573 = vmatprep.subr.mxu0 0.0
  %3574 = vmatpush1.msra.mxu0 0.0
  %3575 = vmatprep.subr.mxu0 0.0
  %3576 = vmatpush1.msra.mxu0 0.0
  %3577 = vmatprep.subr.mxu0 0.0
  %3578 = vmatpush1.msra.mxu0 0.0
  %3579 = vmatprep.subr.mxu0 0.0
  %3580 = vmatpush1.msra.mxu0 0.0
  %3581 = vmatprep.subr.mxu0 0.0
  %3582 = vmatpush1.msra.mxu0 0.0
  %3583 = vmatprep.subr.mxu0 0.0
  %3584 = vmatpush1.msra.mxu0 0.0
  %3585 = vmatprep.subr.mxu0 0.0
  %3586 = vmatpush1.msra.mxu0 0.0
  %3587 = vmatprep.subr.mxu0 0.0
  %3588 = vmatpush1.msra.mxu0 0.0
  %3589 = vmatprep.subr.mxu0 0.0
  %3590 = vmatpush1.msra.mxu0 0.0
  %3591 = vmatprep.subr.mxu0 0.0
  %3592 = vmatpush1.msra.mxu0 0.0
  %3593 = vmatprep.subr.mxu0 0.0
  %3594 = vmatpush1.msra.mxu0 0.0
  %3595 = vmatprep.subr.mxu0 0.0
  %3596 = vmatpush1.msra.mxu0 0.0
  %3597 = vmatprep.subr.mxu0 0.0
  %3598 = vmatpush1.msra.mxu0 0.0
  %3599 = vmatprep.subr.mxu0 0.0
  %3600 = vmatpush1.msra.mxu0 0.0
  %3601 = vmatprep.subr.mxu0 0.0
  %3602 = vmatpush1.msra.mxu0 %v2897
  %3603 = vmatprep.subr.mxu0 0.0
  %3604 = vmatpush1.msra.mxu0 %v2892
  %3605 = vmatprep.subr.mxu0 0.0
  %3606 = vmatpush2.msra.mxu0 0.0
  %3607 = vmatprep.subr.mxu0 0.0
  %3608 = vmatpush2.msra.mxu0 0.0
  %3609 = vmatprep.subr.mxu0 0.0
  %3610 = vmatpush2.msra.mxu0 0.0
  %3611 = vmatprep.subr.mxu0 0.0
  %3612 = vmatpush2.msra.mxu0 0.0
  %3613 = vmatprep.subr.mxu0 0.0
  %3614 = vmatpush2.msra.mxu0 0.0
  %3615 = vmatprep.subr.mxu0 0.0
  %3616 = vmatpush2.msra.mxu0 0.0
  %3617 = vmatprep.subr.mxu0 0.0
  %3618 = vmatpush2.msra.mxu0 0.0
  %3619 = vmatprep.subr.mxu0 0.0
  %3620 = vmatpush2.msra.mxu0 0.0
  %3621 = vmatprep.subr.mxu0 0.0
  %3622 = vmatpush2.msra.mxu0 0.0
  %3623 = vmatprep.subr.mxu0 0.0
  %3624 = vmatpush2.msra.mxu0 0.0
  %3625 = vmatprep.subr.mxu0 0.0
  %3626 = vmatpush2.msra.mxu0 0.0
  %3627 = vmatprep.subr.mxu0 0.0
  %3628 = vmatpush2.msra.mxu0 0.0
  %3629 = vmatprep.subr.mxu0 0.0
  %3630 = vmatpush2.msra.mxu0 0.0
  %3631 = vmatprep.subr.mxu0 0.0
  %3632 = vmatpush2.msra.mxu0 0.0
  %3633 = vmatprep.subr.mxu0 0.0
  %3634 = vmatpush2.msra.mxu0 0.0
  %3635 = vmatprep.subr.mxu0 0.0
  %3636 = vmatpush2.msra.mxu0 0.0
  %3637 = vmatprep.mubr.f32.mxu0 0.0
  %3638 = vmatmul.mubr.f32.gmra.mxu0 %v3568
  %v3639 = vpop.f32.mrf.mxu0
  %v3640 = vadd.f32 0.0, %v3639
  %v3641 = vpop.f32.mrf.mxu0
  %3642 = vmatprep.mubr.f32.mxu0 0.0
  %3643 = vmatmul.mubr.f32.gmra.mxu0 %v3571
  %v3644 = vpop.f32.mrf.mxu0
  %v3645 = vadd.f32 0.0, %v3644
  %v3646 = vpop.f32.mrf.mxu0
  %3647 = vdwg.mxu0
  %v3649 = vsel %vm1347, %v3482, 0
  %v3652 = vsel %vm1347, %v3483, 0
  %3654 = vmatprep.subr.mxu0 0.0
  %3655 = vmatpush1.msra.mxu0 0.0
  %3656 = vmatprep.subr.mxu0 0.0
  %3657 = vmatpush1.msra.mxu0 0.0
  %3658 = vmatprep.subr.mxu0 0.0
  %3659 = vmatpush1.msra.mxu0 0.0
  %3660 = vmatprep.subr.mxu0 0.0
  %3661 = vmatpush1.msra.mxu0 0.0
  %3662 = vmatprep.subr.mxu0 0.0
  %3663 = vmatpush1.msra.mxu0 0.0
  %3664 = vmatprep.subr.mxu0 0.0
  %3665 = vmatpush1.msra.mxu0 0.0
  %3666 = vmatprep.subr.mxu0 0.0
  %3667 = vmatpush1.msra.mxu0 0.0
  %3668 = vmatprep.subr.mxu0 0.0
  %3669 = vmatpush1.msra.mxu0 0.0
  %3670 = vmatprep.subr.mxu0 0.0
  %3671 = vmatpush1.msra.mxu0 0.0
  %3672 = vmatprep.subr.mxu0 0.0
  %3673 = vmatpush1.msra.mxu0 0.0
  %3674 = vmatprep.subr.mxu0 0.0
  %3675 = vmatpush1.msra.mxu0 0.0
  %3676 = vmatprep.subr.mxu0 0.0
  %3677 = vmatpush1.msra.mxu0 0.0
  %3678 = vmatprep.subr.mxu0 0.0
  %3679 = vmatpush1.msra.mxu0 0.0
  %3680 = vmatprep.subr.mxu0 0.0
  %3681 = vmatpush1.msra.mxu0 0.0
  %3682 = vmatprep.subr.mxu0 0.0
  %3683 = vmatpush1.msra.mxu0 %v2972
  %3684 = vmatprep.subr.mxu0 0.0
  %3685 = vmatpush1.msra.mxu0 %v2967
  %3686 = vmatprep.subr.mxu0 0.0
  %3687 = vmatpush2.msra.mxu0 0.0
  %3688 = vmatprep.subr.mxu0 0.0
  %3689 = vmatpush2.msra.mxu0 0.0
  %3690 = vmatprep.subr.mxu0 0.0
  %3691 = vmatpush2.msra.mxu0 0.0
  %3692 = vmatprep.subr.mxu0 0.0
  %3693 = vmatpush2.msra.mxu0 0.0
  %3694 = vmatprep.subr.mxu0 0.0
  %3695 = vmatpush2.msra.mxu0 0.0
  %3696 = vmatprep.subr.mxu0 0.0
  %3697 = vmatpush2.msra.mxu0 0.0
  %3698 = vmatprep.subr.mxu0 0.0
  %3699 = vmatpush2.msra.mxu0 0.0
  %3700 = vmatprep.subr.mxu0 0.0
  %3701 = vmatpush2.msra.mxu0 0.0
  %3702 = vmatprep.subr.mxu0 0.0
  %3703 = vmatpush2.msra.mxu0 0.0
  %3704 = vmatprep.subr.mxu0 0.0
  %3705 = vmatpush2.msra.mxu0 0.0
  %3706 = vmatprep.subr.mxu0 0.0
  %3707 = vmatpush2.msra.mxu0 0.0
  %3708 = vmatprep.subr.mxu0 0.0
  %3709 = vmatpush2.msra.mxu0 0.0
  %3710 = vmatprep.subr.mxu0 0.0
  %3711 = vmatpush2.msra.mxu0 0.0
  %3712 = vmatprep.subr.mxu0 0.0
  %3713 = vmatpush2.msra.mxu0 0.0
  %3714 = vmatprep.subr.mxu0 0.0
  %3715 = vmatpush2.msra.mxu0 0.0
  %3716 = vmatprep.subr.mxu0 0.0
  %3717 = vmatpush2.msra.mxu0 0.0
  %3718 = vmatprep.mubr.f32.mxu0 0.0
  %3719 = vmatmul.mubr.f32.gmra.mxu0 %v3649
  %v3720 = vpop.f32.mrf.mxu0
  %v3721 = vadd.f32 0.0, %v3720
  %v3722 = vpop.f32.mrf.mxu0
  %3723 = vmatprep.mubr.f32.mxu0 0.0
  %3724 = vmatmul.mubr.f32.gmra.mxu0 %v3652
  %v3725 = vpop.f32.mrf.mxu0
  %v3726 = vadd.f32 0.0, %v3725
  %v3727 = vpop.f32.mrf.mxu0
  %3728 = vdwg.mxu0
  %v3730 = vsel %vm1347, %v3484, 0
  %v3733 = vsel %vm1347, %v3485, 0
  %3735 = vmatprep.subr.mxu0 0.0
  %3736 = vmatpush1.msra.mxu0 0.0
  %3737 = vmatprep.subr.mxu0 0.0
  %3738 = vmatpush1.msra.mxu0 0.0
  %3739 = vmatprep.subr.mxu0 0.0
  %3740 = vmatpush1.msra.mxu0 0.0
  %3741 = vmatprep.subr.mxu0 0.0
  %3742 = vmatpush1.msra.mxu0 0.0
  %3743 = vmatprep.subr.mxu0 0.0
  %3744 = vmatpush1.msra.mxu0 0.0
  %3745 = vmatprep.subr.mxu0 0.0
  %3746 = vmatpush1.msra.mxu0 0.0
  %3747 = vmatprep.subr.mxu0 0.0
  %3748 = vmatpush1.msra.mxu0 0.0
  %3749 = vmatprep.subr.mxu0 0.0
  %3750 = vmatpush1.msra.mxu0 0.0
  %3751 = vmatprep.subr.mxu0 0.0
  %3752 = vmatpush1.msra.mxu0 0.0
  %3753 = vmatprep.subr.mxu0 0.0
  %3754 = vmatpush1.msra.mxu0 0.0
  %3755 = vmatprep.subr.mxu0 0.0
  %3756 = vmatpush1.msra.mxu0 0.0
  %3757 = vmatprep.subr.mxu0 0.0
  %3758 = vmatpush1.msra.mxu0 0.0
  %3759 = vmatprep.subr.mxu0 0.0
  %3760 = vmatpush1.msra.mxu0 0.0
  %3761 = vmatprep.subr.mxu0 0.0
  %3762 = vmatpush1.msra.mxu0 0.0
  %3763 = vmatprep.subr.mxu0 0.0
  %3764 = vmatpush1.msra.mxu0 %v3047
  %3765 = vmatprep.subr.mxu0 0.0
  %3766 = vmatpush1.msra.mxu0 %v3042
  %3767 = vmatprep.subr.mxu0 0.0
  %3768 = vmatpush2.msra.mxu0 0.0
  %3769 = vmatprep.subr.mxu0 0.0
  %3770 = vmatpush2.msra.mxu0 0.0
  %3771 = vmatprep.subr.mxu0 0.0
  %3772 = vmatpush2.msra.mxu0 0.0
  %3773 = vmatprep.subr.mxu0 0.0
  %3774 = vmatpush2.msra.mxu0 0.0
  %3775 = vmatprep.subr.mxu0 0.0
  %3776 = vmatpush2.msra.mxu0 0.0
  %3777 = vmatprep.subr.mxu0 0.0
  %3778 = vmatpush2.msra.mxu0 0.0
  %3779 = vmatprep.subr.mxu0 0.0
  %3780 = vmatpush2.msra.mxu0 0.0
  %3781 = vmatprep.subr.mxu0 0.0
  %3782 = vmatpush2.msra.mxu0 0.0
  %3783 = vmatprep.subr.mxu0 0.0
  %3784 = vmatpush2.msra.mxu0 0.0
  %3785 = vmatprep.subr.mxu0 0.0
  %3786 = vmatpush2.msra.mxu0 0.0
  %3787 = vmatprep.subr.mxu0 0.0
  %3788 = vmatpush2.msra.mxu0 0.0
  %3789 = vmatprep.subr.mxu0 0.0
  %3790 = vmatpush2.msra.mxu0 0.0
  %3791 = vmatprep.subr.mxu0 0.0
  %3792 = vmatpush2.msra.mxu0 0.0
  %3793 = vmatprep.subr.mxu0 0.0
  %3794 = vmatpush2.msra.mxu0 0.0
  %3795 = vmatprep.subr.mxu0 0.0
  %3796 = vmatpush2.msra.mxu0 0.0
  %3797 = vmatprep.subr.mxu0 0.0
  %3798 = vmatpush2.msra.mxu0 0.0
  %3799 = vmatprep.mubr.f32.mxu0 0.0
  %3800 = vmatmul.mubr.f32.gmra.mxu0 %v3730
  %v3801 = vpop.f32.mrf.mxu0
  %v3802 = vadd.f32 0.0, %v3801
  %v3803 = vpop.f32.mrf.mxu0
  %3804 = vmatprep.mubr.f32.mxu0 0.0
  %3805 = vmatmul.mubr.f32.gmra.mxu0 %v3733
  %v3806 = vpop.f32.mrf.mxu0
  %v3807 = vadd.f32 0.0, %v3806
  %v3808 = vpop.f32.mrf.mxu0
  %3809 = vdwg.mxu0
  %v3811 = vsel %vm998, %v3640, 0
  %v3814 = vsel %vm998, %v3645, 0
  %3816 = vmatprep.subr.mxu0 0.0
  %3817 = vmatpush1.msra.mxu0 0.0
  %3818 = vmatprep.subr.mxu0 0.0
  %3819 = vmatpush1.msra.mxu0 0.0
  %3820 = vmatprep.subr.mxu0 0.0
  %3821 = vmatpush1.msra.mxu0 0.0
  %3822 = vmatprep.subr.mxu0 0.0
  %3823 = vmatpush1.msra.mxu0 0.0
  %3824 = vmatprep.subr.mxu0 0.0
  %3825 = vmatpush1.msra.mxu0 0.0
  %3826 = vmatprep.subr.mxu0 0.0
  %3827 = vmatpush1.msra.mxu0 0.0
  %3828 = vmatprep.subr.mxu0 0.0
  %3829 = vmatpush1.msra.mxu0 0.0
  %3830 = vmatprep.subr.mxu0 0.0
  %3831 = vmatpush1.msra.mxu0 0.0
  %3832 = vmatprep.subr.mxu0 0.0
  %3833 = vmatpush1.msra.mxu0 0.0
  %3834 = vmatprep.subr.mxu0 0.0
  %3835 = vmatpush1.msra.mxu0 0.0
  %3836 = vmatprep.subr.mxu0 0.0
  %3837 = vmatpush1.msra.mxu0 0.0
  %3838 = vmatprep.subr.mxu0 0.0
  %3839 = vmatpush1.msra.mxu0 0.0
  %3840 = vmatprep.subr.mxu0 0.0
  %3841 = vmatpush1.msra.mxu0 0.0
  %3842 = vmatprep.subr.mxu0 0.0
  %3843 = vmatpush1.msra.mxu0 0.0
  %3844 = vmatprep.subr.mxu0 0.0
  %3845 = vmatpush1.msra.mxu0 0.0
  %3846 = vmatprep.subr.mxu0 0.0
  %3847 = vmatpush1.msra.mxu0 %v2141
  %3848 = vmatprep.subr.mxu0 0.0
  %3849 = vmatpush2.msra.mxu0 0.0
  %3850 = vmatprep.subr.mxu0 0.0
  %3851 = vmatpush2.msra.mxu0 0.0
  %3852 = vmatprep.subr.mxu0 0.0
  %3853 = vmatpush2.msra.mxu0 0.0
  %3854 = vmatprep.subr.mxu0 0.0
  %3855 = vmatpush2.msra.mxu0 0.0
  %3856 = vmatprep.subr.mxu0 0.0
  %3857 = vmatpush2.msra.mxu0 0.0
  %3858 = vmatprep.subr.mxu0 0.0
  %3859 = vmatpush2.msra.mxu0 0.0
  %3860 = vmatprep.subr.mxu0 0.0
  %3861 = vmatpush2.msra.mxu0 0.0
  %3862 = vmatprep.subr.mxu0 0.0
  %3863 = vmatpush2.msra.mxu0 0.0
  %3864 = vmatprep.subr.mxu0 0.0
  %3865 = vmatpush2.msra.mxu0 0.0
  %3866 = vmatprep.subr.mxu0 0.0
  %3867 = vmatpush2.msra.mxu0 0.0
  %3868 = vmatprep.subr.mxu0 0.0
  %3869 = vmatpush2.msra.mxu0 0.0
  %3870 = vmatprep.subr.mxu0 0.0
  %3871 = vmatpush2.msra.mxu0 0.0
  %3872 = vmatprep.subr.mxu0 0.0
  %3873 = vmatpush2.msra.mxu0 0.0
  %3874 = vmatprep.subr.mxu0 0.0
  %3875 = vmatpush2.msra.mxu0 0.0
  %3876 = vmatprep.subr.mxu0 0.0
  %3877 = vmatpush2.msra.mxu0 0.0
  %3878 = vmatprep.subr.mxu0 0.0
  %3879 = vmatpush2.msra.mxu0 0.0
  %3880 = vmatprep.mubr.f32.mxu0 0.0
  %3881 = vmatmul.mubr.f32.gmra.mxu0 %v3811
  %v3882 = vpop.f32.mrf.mxu0
  %v3883 = vadd.f32 0.0, %v3882
  %v3884 = vpop.f32.mrf.mxu0
  %3885 = vmatprep.mubr.f32.mxu0 0.0
  %3886 = vmatmul.mubr.f32.gmra.mxu0 %v3814
  %v3887 = vpop.f32.mrf.mxu0
  %v3888 = vadd.f32 0.0, %v3887
  %v3889 = vpop.f32.mrf.mxu0
  %3890 = vdwg.mxu0
  %v3892 = vsel %vm998, %v3559, 0
  %v3895 = vsel %vm998, %v3564, 0
  %3897 = vmatprep.subr.mxu0 0.0
  %3898 = vmatpush1.msra.mxu0 0.0
  %3899 = vmatprep.subr.mxu0 0.0
  %3900 = vmatpush1.msra.mxu0 0.0
  %3901 = vmatprep.subr.mxu0 0.0
  %3902 = vmatpush1.msra.mxu0 0.0
  %3903 = vmatprep.subr.mxu0 0.0
  %3904 = vmatpush1.msra.mxu0 0.0
  %3905 = vmatprep.subr.mxu0 0.0
  %3906 = vmatpush1.msra.mxu0 0.0
  %3907 = vmatprep.subr.mxu0 0.0
  %3908 = vmatpush1.msra.mxu0 0.0
  %3909 = vmatprep.subr.mxu0 0.0
  %3910 = vmatpush1.msra.mxu0 0.0
  %3911 = vmatprep.subr.mxu0 0.0
  %3912 = vmatpush1.msra.mxu0 0.0
  %3913 = vmatprep.subr.mxu0 0.0
  %3914 = vmatpush1.msra.mxu0 0.0
  %3915 = vmatprep.subr.mxu0 0.0
  %3916 = vmatpush1.msra.mxu0 0.0
  %3917 = vmatprep.subr.mxu0 0.0
  %3918 = vmatpush1.msra.mxu0 0.0
  %3919 = vmatprep.subr.mxu0 0.0
  %3920 = vmatpush1.msra.mxu0 0.0
  %3921 = vmatprep.subr.mxu0 0.0
  %3922 = vmatpush1.msra.mxu0 0.0
  %3923 = vmatprep.subr.mxu0 0.0
  %3924 = vmatpush1.msra.mxu0 0.0
  %3925 = vmatprep.subr.mxu0 0.0
  %3926 = vmatpush1.msra.mxu0 0.0
  %3927 = vmatprep.subr.mxu0 0.0
  %3928 = vmatpush1.msra.mxu0 %v2140
  %3929 = vmatprep.subr.mxu0 0.0
  %3930 = vmatpush2.msra.mxu0 0.0
  %3931 = vmatprep.subr.mxu0 0.0
  %3932 = vmatpush2.msra.mxu0 0.0
  %3933 = vmatprep.subr.mxu0 0.0
  %3934 = vmatpush2.msra.mxu0 0.0
  %3935 = vmatprep.subr.mxu0 0.0
  %3936 = vmatpush2.msra.mxu0 0.0
  %3937 = vmatprep.subr.mxu0 0.0
  %3938 = vmatpush2.msra.mxu0 0.0
  %3939 = vmatprep.subr.mxu0 0.0
  %3940 = vmatpush2.msra.mxu0 0.0
  %3941 = vmatprep.subr.mxu0 0.0
  %3942 = vmatpush2.msra.mxu0 0.0
  %3943 = vmatprep.subr.mxu0 0.0
  %3944 = vmatpush2.msra.mxu0 0.0
  %3945 = vmatprep.subr.mxu0 0.0
  %3946 = vmatpush2.msra.mxu0 0.0
  %3947 = vmatprep.subr.mxu0 0.0
  %3948 = vmatpush2.msra.mxu0 0.0
  %3949 = vmatprep.subr.mxu0 0.0
  %3950 = vmatpush2.msra.mxu0 0.0
  %3951 = vmatprep.subr.mxu0 0.0
  %3952 = vmatpush2.msra.mxu0 0.0
  %3953 = vmatprep.subr.mxu0 0.0
  %3954 = vmatpush2.msra.mxu0 0.0
  %3955 = vmatprep.subr.mxu0 0.0
  %3956 = vmatpush2.msra.mxu0 0.0
  %3957 = vmatprep.subr.mxu0 0.0
  %3958 = vmatpush2.msra.mxu0 0.0
  %3959 = vmatprep.subr.mxu0 0.0
  %3960 = vmatpush2.msra.mxu0 0.0
  %3961 = vmatprep.mubr.f32.mxu0 0.0
  %3962 = vmatmul.mubr.f32.gmra.mxu0 %v3892
  %v3963 = vpop.f32.mrf.mxu0
  %v3964 = vadd.f32 %v3883, %v3963
  %v3965 = vpop.f32.mrf.mxu0
  %3966 = vmatprep.mubr.f32.mxu0 0.0
  %3967 = vmatmul.mubr.f32.gmra.mxu0 %v3895
  %v3968 = vpop.f32.mrf.mxu0
  %v3969 = vadd.f32 %v3888, %v3968
  %v3970 = vpop.f32.mrf.mxu0
  %3971 = vdwg.mxu0
  %v3973 = vsel %vm998, %v3721, 0
  %v3976 = vsel %vm998, %v3726, 0
  %3978 = vmatprep.subr.mxu0 0.0
  %3979 = vmatpush1.msra.mxu0 0.0
  %3980 = vmatprep.subr.mxu0 0.0
  %3981 = vmatpush1.msra.mxu0 0.0
  %3982 = vmatprep.subr.mxu0 0.0
  %3983 = vmatpush1.msra.mxu0 0.0
  %3984 = vmatprep.subr.mxu0 0.0
  %3985 = vmatpush1.msra.mxu0 0.0
  %3986 = vmatprep.subr.mxu0 0.0
  %3987 = vmatpush1.msra.mxu0 0.0
  %3988 = vmatprep.subr.mxu0 0.0
  %3989 = vmatpush1.msra.mxu0 0.0
  %3990 = vmatprep.subr.mxu0 0.0
  %3991 = vmatpush1.msra.mxu0 0.0
  %3992 = vmatprep.subr.mxu0 0.0
  %3993 = vmatpush1.msra.mxu0 0.0
  %3994 = vmatprep.subr.mxu0 0.0
  %3995 = vmatpush1.msra.mxu0 0.0
  %3996 = vmatprep.subr.mxu0 0.0
  %3997 = vmatpush1.msra.mxu0 0.0
  %3998 = vmatprep.subr.mxu0 0.0
  %3999 = vmatpush1.msra.mxu0 0.0
  %4000 = vmatprep.subr.mxu0 0.0
  %4001 = vmatpush1.msra.mxu0 0.0
  %4002 = vmatprep.subr.mxu0 0.0
  %4003 = vmatpush1.msra.mxu0 0.0
  %4004 = vmatprep.subr.mxu0 0.0
  %4005 = vmatpush1.msra.mxu0 0.0
  %4006 = vmatprep.subr.mxu0 0.0
  %4007 = vmatpush1.msra.mxu0 0.0
  %4008 = vmatprep.subr.mxu0 0.0
  %4009 = vmatpush1.msra.mxu0 %v2142
  %4010 = vmatprep.subr.mxu0 0.0
  %4011 = vmatpush2.msra.mxu0 0.0
  %4012 = vmatprep.subr.mxu0 0.0
  %4013 = vmatpush2.msra.mxu0 0.0
  %4014 = vmatprep.subr.mxu0 0.0
  %4015 = vmatpush2.msra.mxu0 0.0
  %4016 = vmatprep.subr.mxu0 0.0
  %4017 = vmatpush2.msra.mxu0 0.0
  %4018 = vmatprep.subr.mxu0 0.0
  %4019 = vmatpush2.msra.mxu0 0.0
  %4020 = vmatprep.subr.mxu0 0.0
  %4021 = vmatpush2.msra.mxu0 0.0
  %4022 = vmatprep.subr.mxu0 0.0
  %4023 = vmatpush2.msra.mxu0 0.0
  %4024 = vmatprep.subr.mxu0 0.0
  %4025 = vmatpush2.msra.mxu0 0.0
  %4026 = vmatprep.subr.mxu0 0.0
  %4027 = vmatpush2.msra.mxu0 0.0
  %4028 = vmatprep.subr.mxu0 0.0
  %4029 = vmatpush2.msra.mxu0 0.0
  %4030 = vmatprep.subr.mxu0 0.0
  %4031 = vmatpush2.msra.mxu0 0.0
  %4032 = vmatprep.subr.mxu0 0.0
  %4033 = vmatpush2.msra.mxu0 0.0
  %4034 = vmatprep.subr.mxu0 0.0
  %4035 = vmatpush2.msra.mxu0 0.0
  %4036 = vmatprep.subr.mxu0 0.0
  %4037 = vmatpush2.msra.mxu0 0.0
  %4038 = vmatprep.subr.mxu0 0.0
  %4039 = vmatpush2.msra.mxu0 0.0
  %4040 = vmatprep.subr.mxu0 0.0
  %4041 = vmatpush2.msra.mxu0 0.0
  %4042 = vmatprep.mubr.f32.mxu0 0.0
  %4043 = vmatmul.mubr.f32.gmra.mxu0 %v3973
  %v4044 = vpop.f32.mrf.mxu0
  %v4045 = vadd.f32 0.0, %v4044
  %v4046 = vpop.f32.mrf.mxu0
  %4047 = vmatprep.mubr.f32.mxu0 0.0
  %4048 = vmatmul.mubr.f32.gmra.mxu0 %v3976
  %v4049 = vpop.f32.mrf.mxu0
  %v4050 = vadd.f32 0.0, %v4049
  %v4051 = vpop.f32.mrf.mxu0
  %4052 = vdwg.mxu0
  %v4053 = vadd.f32 %v3964, %v4045
  %v4054 = vadd.f32 %v3969, %v4050
  %v4056 = vsel %vm998, %v3802, 0
  %v4059 = vsel %vm998, %v3807, 0
  %4061 = vmatprep.subr.mxu0 0.0
  %4062 = vmatpush1.msra.mxu0 0.0
  %4063 = vmatprep.subr.mxu0 0.0
  %4064 = vmatpush1.msra.mxu0 0.0
  %4065 = vmatprep.subr.mxu0 0.0
  %4066 = vmatpush1.msra.mxu0 0.0
  %4067 = vmatprep.subr.mxu0 0.0
  %4068 = vmatpush1.msra.mxu0 0.0
  %4069 = vmatprep.subr.mxu0 0.0
  %4070 = vmatpush1.msra.mxu0 0.0
  %4071 = vmatprep.subr.mxu0 0.0
  %4072 = vmatpush1.msra.mxu0 0.0
  %4073 = vmatprep.subr.mxu0 0.0
  %4074 = vmatpush1.msra.mxu0 0.0
  %4075 = vmatprep.subr.mxu0 0.0
  %4076 = vmatpush1.msra.mxu0 0.0
  %4077 = vmatprep.subr.mxu0 0.0
  %4078 = vmatpush1.msra.mxu0 0.0
  %4079 = vmatprep.subr.mxu0 0.0
  %4080 = vmatpush1.msra.mxu0 0.0
  %4081 = vmatprep.subr.mxu0 0.0
  %4082 = vmatpush1.msra.mxu0 0.0
  %4083 = vmatprep.subr.mxu0 0.0
  %4084 = vmatpush1.msra.mxu0 0.0
  %4085 = vmatprep.subr.mxu0 0.0
  %4086 = vmatpush1.msra.mxu0 0.0
  %4087 = vmatprep.subr.mxu0 0.0
  %4088 = vmatpush1.msra.mxu0 0.0
  %4089 = vmatprep.subr.mxu0 0.0
  %4090 = vmatpush1.msra.mxu0 0.0
  %4091 = vmatprep.subr.mxu0 0.0
  %4092 = vmatpush1.msra.mxu0 %v2143
  %4093 = vmatprep.subr.mxu0 0.0
  %4094 = vmatpush2.msra.mxu0 0.0
  %4095 = vmatprep.subr.mxu0 0.0
  %4096 = vmatpush2.msra.mxu0 0.0
  %4097 = vmatprep.subr.mxu0 0.0
  %4098 = vmatpush2.msra.mxu0 0.0
  %4099 = vmatprep.subr.mxu0 0.0
  %4100 = vmatpush2.msra.mxu0 0.0
  %4101 = vmatprep.subr.mxu0 0.0
  %4102 = vmatpush2.msra.mxu0 0.0
  %4103 = vmatprep.subr.mxu0 0.0
  %4104 = vmatpush2.msra.mxu0 0.0
  %4105 = vmatprep.subr.mxu0 0.0
  %4106 = vmatpush2.msra.mxu0 0.0
  %4107 = vmatprep.subr.mxu0 0.0
  %4108 = vmatpush2.msra.mxu0 0.0
  %4109 = vmatprep.subr.mxu0 0.0
  %4110 = vmatpush2.msra.mxu0 0.0
  %4111 = vmatprep.subr.mxu0 0.0
  %4112 = vmatpush2.msra.mxu0 0.0
  %4113 = vmatprep.subr.mxu0 0.0
  %4114 = vmatpush2.msra.mxu0 0.0
  %4115 = vmatprep.subr.mxu0 0.0
  %4116 = vmatpush2.msra.mxu0 0.0
  %4117 = vmatprep.subr.mxu0 0.0
  %4118 = vmatpush2.msra.mxu0 0.0
  %4119 = vmatprep.subr.mxu0 0.0
  %4120 = vmatpush2.msra.mxu0 0.0
  %4121 = vmatprep.subr.mxu0 0.0
  %4122 = vmatpush2.msra.mxu0 0.0
  %4123 = vmatprep.subr.mxu0 0.0
  %4124 = vmatpush2.msra.mxu0 0.0
  %4125 = vmatprep.mubr.f32.mxu0 0.0
  %4126 = vmatmul.mubr.f32.gmra.mxu0 %v4056
  %v4127 = vpop.f32.mrf.mxu0
  %v4128 = vadd.f32 0.0, %v4127
  %v4129 = vpop.f32.mrf.mxu0
  %4130 = vmatprep.mubr.f32.mxu0 0.0
  %4131 = vmatmul.mubr.f32.gmra.mxu0 %v4059
  %v4132 = vpop.f32.mrf.mxu0
  %v4133 = vadd.f32 0.0, %v4132
  %v4134 = vpop.f32.mrf.mxu0
  %4135 = vdwg.mxu0
  %v4136 = vadd.f32 %v4053, %v4128
  %v4137 = vadd.f32 %v4054, %v4133
  %v4138 = vld [vmem:[%s7] sm:$0xff]
  %v4139 = vld [vmem:[%s7 + $0x8] sm:$0xff]
  %v4140 = vld [vmem:[%s7 + $0x10] sm:$0xff]
  %v4141 = vld [vmem:[%s7 + $0x18] sm:$0xff]
  %v4143 = vsel %vm91, %v4136, 0
  %v4146 = vsel %vm91, %v4137, 0
  %4148 = vmatprep.subr.mxu0 0.0
  %4149 = vmatpush1.msra.mxu0 0.0
  %4150 = vmatprep.subr.mxu0 0.0
  %4151 = vmatpush1.msra.mxu0 0.0
  %4152 = vmatprep.subr.mxu0 0.0
  %4153 = vmatpush1.msra.mxu0 0.0
  %4154 = vmatprep.subr.mxu0 0.0
  %4155 = vmatpush1.msra.mxu0 0.0
  %4156 = vmatprep.subr.mxu0 0.0
  %4157 = vmatpush1.msra.mxu0 0.0
  %4158 = vmatprep.subr.mxu0 0.0
  %4159 = vmatpush1.msra.mxu0 0.0
  %4160 = vmatprep.subr.mxu0 0.0
  %4161 = vmatpush1.msra.mxu0 0.0
  %4162 = vmatprep.subr.mxu0 0.0
  %4163 = vmatpush1.msra.mxu0 0.0
  %4164 = vmatprep.subr.mxu0 0.0
  %4165 = vmatpush1.msra.mxu0 0.0
  %4166 = vmatprep.subr.mxu0 0.0
  %4167 = vmatpush1.msra.mxu0 0.0
  %4168 = vmatprep.subr.mxu0 0.0
  %4169 = vmatpush1.msra.mxu0 0.0
  %4170 = vmatprep.subr.mxu0 0.0
  %4171 = vmatpush1.msra.mxu0 0.0
  %4172 = vmatprep.subr.mxu0 0.0
  %4173 = vmatpush1.msra.mxu0 %v4141
  %4174 = vmatprep.subr.mxu0 0.0
  %4175 = vmatpush1.msra.mxu0 %v4140
  %4176 = vmatprep.subr.mxu0 0.0
  %4177 = vmatpush1.msra.mxu0 %v4139
  %4178 = vmatprep.subr.mxu0 0.0
  %4179 = vmatpush1.msra.mxu0 %v4138
  %4180 = vmatprep.subr.mxu0 0.0
  %4181 = vmatpush2.msra.mxu0 0.0
  %4182 = vmatprep.subr.mxu0 0.0
  %4183 = vmatpush2.msra.mxu0 0.0
  %4184 = vmatprep.subr.mxu0 0.0
  %4185 = vmatpush2.msra.mxu0 0.0
  %4186 = vmatprep.subr.mxu0 0.0
  %4187 = vmatpush2.msra.mxu0 0.0
  %4188 = vmatprep.subr.mxu0 0.0
  %4189 = vmatpush2.msra.mxu0 0.0
  %4190 = vmatprep.subr.mxu0 0.0
  %4191 = vmatpush2.msra.mxu0 0.0
  %4192 = vmatprep.subr.mxu0 0.0
  %4193 = vmatpush2.msra.mxu0 0.0
  %4194 = vmatprep.subr.mxu0 0.0
  %4195 = vmatpush2.msra.mxu0 0.0
  %4196 = vmatprep.subr.mxu0 0.0
  %4197 = vmatpush2.msra.mxu0 0.0
  %4198 = vmatprep.subr.mxu0 0.0
  %4199 = vmatpush2.msra.mxu0 0.0
  %4200 = vmatprep.subr.mxu0 0.0
  %4201 = vmatpush2.msra.mxu0 0.0
  %4202 = vmatprep.subr.mxu0 0.0
  %4203 = vmatpush2.msra.mxu0 0.0
  %4204 = vmatprep.subr.mxu0 0.0
  %4205 = vmatpush2.msra.mxu0 0.0
  %4206 = vmatprep.subr.mxu0 0.0
  %4207 = vmatpush2.msra.mxu0 0.0
  %4208 = vmatprep.subr.mxu0 0.0
  %4209 = vmatpush2.msra.mxu0 0.0
  %4210 = vmatprep.subr.mxu0 0.0
  %4211 = vmatpush2.msra.mxu0 0.0
  %4212 = vmatprep.mubr.f32.mxu0 0.0
  %4213 = vmatmul.mubr.f32.gmra.mxu0 %v4143
  %v4214 = vpop.f32.mrf.mxu0
  %v4215 = vadd.f32 0.0, %v4214
  %v4216 = vpop.f32.mrf.mxu0
  %4217 = vmatprep.mubr.f32.mxu0 0.0
  %4218 = vmatmul.mubr.f32.gmra.mxu0 %v4146
  %v4219 = vpop.f32.mrf.mxu0
  %v4220 = vadd.f32 0.0, %v4219
  %v4221 = vpop.f32.mrf.mxu0
  %4222 = vdwg.mxu0
  %v4223 = vxor.u32 %v4215, 2147483648
  %v4224 = vxor.u32 %v4220, 2147483648
  %v4225 = vmul.f32 %v4223, 1.442695
  %v4226 = vpow.pop %v4225
  %v4227 = vmul.f32 %v4224, 1.442695
  %v4228 = vpow.pop %v4227
  %v4229 = vadd.f32 %v4226, 1.0
  %v4230 = vadd.f32 %v4228, 1.0
  %v4231 = vrcp.pop %v4229
  %v4232 = vmul.f32 1.0, %v4231
  %v4233 = vrcp.pop %v4230
  %v4234 = vmul.f32 1.0, %v4233
  %4235 = vst [vmem:[%s8] sm:$0xff] %v4232
  %4236 = vst [vmem:[%s8 + $0x8] sm:$0xff] %v4234
  // Predicated region
  $region34: #{simple_transformer_forward.1} parent=0 // pred_check
    _
  $region35: #{simple_transformer_forward.1} parent=0 // pred_check_branch
    %4238 = sbr.rel (0) target = $region37
  $region36: #{simple_transformer_forward.1} parent=0 // pred_region
    _
  $region37: #{simple_transformer_forward.1} parent=0 // pred_fallthru
    _
  // Predicated region
  $region38: #{simple_transformer_forward.1} parent=0 // pred_check
    _
  $region39: #{simple_transformer_forward.1} parent=0 // pred_check_branch
    %4240 = sbr.rel (0) target = $region41
  $region40: #{simple_transformer_forward.1} parent=0 // pred_region
    _
  $region41: #{simple_transformer_forward.1} parent=0 // pred_fallthru
    _

</llo_original>
